<compile_context>
chip_gen: v7x
topology: tpu7x:2x2x1
jax: 0.10.0
libtpu: 0.0.40
codegen_flags: <defaults>
</compile_context>

<pallas_src>
import math
import functools

import jax
import jax.numpy as jnp
from jax import lax
from jax.experimental import pallas as pl


# ----------------------------- in-kernel helpers -----------------------------

def _layer_norm(x, gamma, beta, eps=1e-5):
    mean = jnp.mean(x, axis=-1, keepdims=True)
    var = jnp.mean(jnp.square(x - mean), axis=-1, keepdims=True)
    return (x - mean) * lax.rsqrt(var + eps) * gamma + beta


def _attention(q, k, v, wo_h, mask):
    """Attention batched over heads (leading axis).

    q:    (NH, Lq, d)   queries, all heads, batch folded into Lq
    k, v: (NH, Lk, d)   keys / values, all heads, batch folded into Lk
    wo_h: (NH, d, H)    output projection, rows grouped per head
    mask: (1, Lq, Lk)   float (1 keep / 0 mask); already encodes the per-batch
                        block-diagonal structure plus causal / valid-length.
    Returns (Lq, H).
    """
    d = q.shape[-1]
    scale = 1.0 / math.sqrt(d)
    scores = jnp.einsum("hqd,hkd->hqk", q, k,
                        preferred_element_type=jnp.float32) * scale
    scores = jnp.where(mask > 0.5, scores, -1000000.0)   # masked_softmax semantics
    scores = scores - jnp.max(scores, axis=-1, keepdims=True)
    e = jnp.exp(scores)
    # EUP reciprocal for the softmax denominator (frees the VALU divide).
    attn = e * pl.reciprocal(jnp.sum(e, axis=-1, keepdims=True), approx=True)
    o = jnp.einsum("hqk,hkd->hqd", attn, v,
                   preferred_element_type=jnp.float32)    # (NH, Lq, d)
    # concat_h(o_h) @ W_o  ==  sum_h o_h @ W_o[h*d:(h+1)*d, :]
    proj = jnp.einsum("hnd,hdf->hnf", o, wo_h,
                      preferred_element_type=jnp.float32)  # (NH, Lq, H)
    return jnp.sum(proj, axis=0)


# --------------------------------- kernel ------------------------------------

def decoder_block_kernel(x_ref, enc_ref, self_mask_ref, cross_mask_ref,
                         wqkv1_ref, wo1_ref, g1_ref, b1_ref,
                         wq2_ref, wkv2_ref, wo2_ref, g2_ref, b2_ref,
                         wf1_ref, bf1_ref, wf2_ref, bf2_ref, g3_ref, b3_ref,
                         out_ref, *, num_heads):
    x = x_ref[...]                      # (B*T, H)
    enc = enc_ref[...]                  # (B*S, H)
    BT, H = x.shape
    BS = enc.shape[0]
    NH = num_heads
    d = H // NH

    self_mask = self_mask_ref[...]      # (1, B*T, B*T)
    cross_mask = cross_mask_ref[...]    # (1, B*T, B*S)

    # ---- self attention: fused per-head QKV projection, one batched matmul ----
    x_h = jnp.broadcast_to(x, (NH, BT, H))
    qkv1 = jnp.einsum("hnf,hfe->hne", x_h, wqkv1_ref[...],
                      preferred_element_type=jnp.float32)      # (NH, B*T, 3d)
    y1 = _attention(qkv1[:, :, 0:d], qkv1[:, :, d:2 * d], qkv1[:, :, 2 * d:3 * d],
                    wo1_ref[...], self_mask)                   # (B*T, H)
    x2 = _layer_norm(y1 + x, g1_ref[...], b1_ref[...])

    # ---- cross attention: Q from decoder, fused per-head K|V from encoder ----
    x2_h = jnp.broadcast_to(x2, (NH, BT, H))
    q2 = jnp.einsum("hnf,hfd->hnd", x2_h, wq2_ref[...],
                    preferred_element_type=jnp.float32)        # (NH, B*T, d)
    enc_h = jnp.broadcast_to(enc, (NH, BS, H))
    kv2 = jnp.einsum("hmf,hfe->hme", enc_h, wkv2_ref[...],
                     preferred_element_type=jnp.float32)       # (NH, B*S, 2d)
    y2 = _attention(q2, kv2[:, :, 0:d], kv2[:, :, d:2 * d],
                    wo2_ref[...], cross_mask)
    x3 = _layer_norm(y2 + x2, g2_ref[...], b2_ref[...])

    # ---- pointwise FFN: Linear -> LeakyReLU(0.01) -> Linear ----
    h1 = jnp.dot(x3, wf1_ref[...], preferred_element_type=jnp.float32) + bf1_ref[...]
    h1 = jnp.where(h1 >= 0, h1, 0.01 * h1)
    y3 = jnp.dot(h1, wf2_ref[...], preferred_element_type=jnp.float32) + bf2_ref[...]

    y = _layer_norm(y3 + x3, g3_ref[...], b3_ref[...])
    out_ref[...] = y.astype(out_ref.dtype)


# --------------------------------- wrapper -----------------------------------

def decoder_block_forward(x, enc_outputs, enc_valid_lens, params, num_heads):
    B, T, H = x.shape
    S = enc_outputs.shape[1]
    NH = num_heads
    d = H // NH

    def per_head(w):                 # (H, H) column-blocked per head -> (NH, H, d)
        return jnp.transpose(w.reshape(H, NH, d), (1, 0, 2))

    # Fused per-head weights (plain XLA, done once wrapper-side).
    wqkv1 = jnp.concatenate([per_head(params["wq1"]), per_head(params["wk1"]),
                             per_head(params["wv1"])], axis=-1)        # (NH, H, 3d)
    wo1 = params["wo1"].reshape(NH, d, H)                              # (NH, d, H)
    wq2 = per_head(params["wq2"])                                      # (NH, H, d)
    wkv2 = jnp.concatenate([per_head(params["wk2"]), per_head(params["wv2"])],
                           axis=-1)                                    # (NH, H, 2d)
    wo2 = params["wo2"].reshape(NH, d, H)

    # Masks built once wrapper-side.  Batch is folded into the sequence axes and
    # the block-diagonal structure is encoded in the mask, so the kernel needs
    # neither a per-batch grid nor any in-kernel transpose/reshape.
    row_b = jnp.repeat(jnp.arange(B), T)          # batch id per decoder row
    row_t = jnp.tile(jnp.arange(T), B)            # position per decoder row
    same_b = row_b[:, None] == row_b[None, :]
    causal = row_t[None, :] <= row_t[:, None]
    self_mask = (same_b & causal).astype(jnp.float32)[None]            # (1, BT, BT)

    col_b = jnp.repeat(jnp.arange(B), S)
    col_s = jnp.tile(jnp.arange(S), B)
    valid_rows = enc_valid_lens.astype(jnp.int32)[row_b]               # (BT,)
    cross_mask = ((row_b[:, None] == col_b[None, :]) &
                  (col_s[None, :] < valid_rows[:, None])
                  ).astype(jnp.float32)[None]                          # (1, BT, BS)

    x2d = x.reshape(B * T, H)
    enc2d = enc_outputs.reshape(B * S, H)

    kernel = functools.partial(decoder_block_kernel, num_heads=NH)
    out2d = pl.pallas_call(
        kernel,
        out_shape=jax.ShapeDtypeStruct((B * T, H), jnp.float32),
        # No grid: single invocation, whole arrays resident in VMEM.
    )(x2d, enc2d, self_mask, cross_mask,
      wqkv1, wo1, params["g1"], params["b1"],
      wq2, wkv2, wo2, params["g2"], params["b2"],
      params["wf1"], params["bf1"], params["wf2"], params["bf2"],
      params["g3"], params["b3"])
    return out2d.reshape(B, T, H)


# ---------------------------- pure-JAX reference ------------------------------

def _ref_forward(x, enc, enc_vl, p, num_heads):
    B, T, H = x.shape
    S = enc.shape[1]
    d = H // num_heads

    def ln(z, g, b):
        m = jnp.mean(z, -1, keepdims=True)
        v = jnp.mean((z - m) ** 2, -1, keepdims=True)
        return (z - m) / jnp.sqrt(v + 1e-5) * g + b

    def mha(qi, kvi, mask, wq, wk, wv, wo):
        q, k, v = qi @ wq, kvi @ wk, kvi @ wv
        sp = lambda z: z.reshape(B, -1, num_heads, d).transpose(0, 2, 1, 3)
        qh, kh, vh = sp(q), sp(k), sp(v)
        sc = jnp.einsum("bhtd,bhsd->bhts", qh, kh) / math.sqrt(d)
        sc = jnp.where(mask[:, None, :, :], sc, -1000000.0)
        at = jax.nn.softmax(sc, axis=-1)
        o = jnp.einsum("bhts,bhsd->bhtd", at, vh).transpose(0, 2, 1, 3).reshape(B, -1, H)
        return o @ wo

    causal = (jnp.arange(T)[None, :] < (jnp.arange(T)[:, None] + 1))
    causal = jnp.broadcast_to(causal, (B, T, T))
    y1 = mha(x, x, causal, p["wq1"], p["wk1"], p["wv1"], p["wo1"])
    x2 = ln(y1 + x, p["g1"], p["b1"])
    cross = (jnp.arange(S)[None, :] < enc_vl[:, None])[:, None, :]
    cross = jnp.broadcast_to(cross, (B, T, S))
    y2 = mha(x2, enc, cross, p["wq2"], p["wk2"], p["wv2"], p["wo2"])
    x3 = ln(y2 + x2, p["g2"], p["b2"])
    h1 = x3 @ p["wf1"] + p["bf1"]
    h1 = jnp.where(h1 >= 0, h1, 0.01 * h1)
    y3 = h1 @ p["wf2"] + p["bf2"]
    return ln(y3 + x3, p["g3"], p["b3"])


# ----------------------------------- main -------------------------------------

if __name__ == "__main__":
    B, T, S = 2, 8, 10          # batch, dec steps, enc steps
    H, NH, F = 32, 4, 64        # num_hiddens, num_heads, ffn_num_hiddens

    key = jax.random.PRNGKey(0)
    ks = jax.random.split(key, 16)

    def rnd(k, shape, scale=0.1):
        return jax.random.normal(k, shape, jnp.float32) * scale

    params = {
        # self attention
        "wq1": rnd(ks[0], (H, H)), "wk1": rnd(ks[1], (H, H)),
        "wv1": rnd(ks[2], (H, H)), "wo1": rnd(ks[3], (H, H)),
        "g1": jnp.ones((1, H), jnp.float32), "b1": jnp.zeros((1, H), jnp.float32),
        # cross attention
        "wq2": rnd(ks[4], (H, H)), "wk2": rnd(ks[5], (H, H)),
        "wv2": rnd(ks[6], (H, H)), "wo2": rnd(ks[7], (H, H)),
        "g2": jnp.ones((1, H), jnp.float32), "b2": jnp.zeros((1, H), jnp.float32),
        # pointwise FFN
        "wf1": rnd(ks[8], (H, F)), "bf1": rnd(ks[9], (1, F)),
        "wf2": rnd(ks[10], (F, H)), "bf2": rnd(ks[11], (1, H)),
        "g3": jnp.ones((1, H), jnp.float32), "b3": jnp.zeros((1, H), jnp.float32),
    }

    x = rnd(ks[12], (B, T, H), scale=1.0)
    enc_outputs = rnd(ks[13], (B, S, H), scale=1.0)
    enc_valid_lens = jnp.array([7, 10], dtype=jnp.int32)

    # state[2][i] is None on the first call -> key_value == X; the torch module's
    # state writeback (key-value cache concat) is host-side glue, not kernel work.
    y = decoder_block_forward(x, enc_outputs, enc_valid_lens, params, NH)
    y = jax.block_until_ready(y)

    y_ref = _ref_forward(x, enc_outputs, enc_valid_lens, params, NH)
    assert y.shape == (B, T, H)
    # Tolerance is slightly looser than f32 epsilon because the kernel uses the
    # approximate EUP reciprocal for the softmax denominator.
    max_diff = float(jnp.max(jnp.abs(y - y_ref)))
    assert jnp.allclose(y, y_ref, atol=5e-3, rtol=5e-3), max_diff

    print("KERNEL_OK")
</pallas_src>

<mosaic_0001>
module attributes {stable_mosaic.version = 11 : i64} {
  func.func @decoder_block_kernel(%arg0: memref<16x32xf32, #tpu.memory_space<vmem>>, %arg1: memref<20x32xf32, #tpu.memory_space<vmem>>, %arg2: memref<1x16x16xf32, #tpu.memory_space<vmem>>, %arg3: memref<1x16x20xf32, #tpu.memory_space<vmem>>, %arg4: memref<4x32x24xf32, #tpu.memory_space<vmem>>, %arg5: memref<4x8x32xf32, #tpu.memory_space<vmem>>, %arg6: memref<1x32xf32, #tpu.memory_space<vmem>>, %arg7: memref<1x32xf32, #tpu.memory_space<vmem>>, %arg8: memref<4x32x8xf32, #tpu.memory_space<vmem>>, %arg9: memref<4x32x16xf32, #tpu.memory_space<vmem>>, %arg10: memref<4x8x32xf32, #tpu.memory_space<vmem>>, %arg11: memref<1x32xf32, #tpu.memory_space<vmem>>, %arg12: memref<1x32xf32, #tpu.memory_space<vmem>>, %arg13: memref<32x64xf32, #tpu.memory_space<vmem>>, %arg14: memref<1x64xf32, #tpu.memory_space<vmem>>, %arg15: memref<64x32xf32, #tpu.memory_space<vmem>>, %arg16: memref<1x32xf32, #tpu.memory_space<vmem>>, %arg17: memref<1x32xf32, #tpu.memory_space<vmem>>, %arg18: memref<1x32xf32, #tpu.memory_space<vmem>>, %arg19: memref<16x32xf32, #tpu.memory_space<vmem>>) attributes {dimension_semantics = [], scalar_prefetch = 0 : i64, scratch_operands = 0 : i64, tpu.core_type = #tpu.core_type<tc>} {
    %c0 = arith.constant 0 : index
    %c0_0 = arith.constant 0 : index
    %0 = vector.load %arg0[%c0, %c0_0] : memref<16x32xf32, #tpu.memory_space<vmem>>, vector<16x32xf32>
    %c0_1 = arith.constant 0 : index
    %c0_2 = arith.constant 0 : index
    %1 = vector.load %arg1[%c0_1, %c0_2] : memref<20x32xf32, #tpu.memory_space<vmem>>, vector<20x32xf32>
    %c0_3 = arith.constant 0 : index
    %c0_4 = arith.constant 0 : index
    %c0_5 = arith.constant 0 : index
    %2 = vector.load %arg2[%c0_3, %c0_4, %c0_5] : memref<1x16x16xf32, #tpu.memory_space<vmem>>, vector<1x16x16xf32>
    %c0_6 = arith.constant 0 : index
    %c0_7 = arith.constant 0 : index
    %c0_8 = arith.constant 0 : index
    %3 = vector.load %arg3[%c0_6, %c0_7, %c0_8] : memref<1x16x20xf32, #tpu.memory_space<vmem>>, vector<1x16x20xf32>
    %4 = vector.shape_cast %0 : vector<16x32xf32> to vector<1x16x32xf32>
    %5 = vector.broadcast %4 : vector<1x16x32xf32> to vector<4x16x32xf32>
    %c0_9 = arith.constant 0 : index
    %c0_10 = arith.constant 0 : index
    %c0_11 = arith.constant 0 : index
    %6 = vector.load %arg4[%c0_9, %c0_10, %c0_11] : memref<4x32x24xf32, #tpu.memory_space<vmem>>, vector<4x32x24xf32>
    "tpu.trace_start"() <{level = 10 : i32, message = "hnf,hfe->hne"}> : () -> ()
    %cst = arith.constant dense<0.000000e+00> : vector<4x16x24xf32>
    %7 = tpu.matmul %5, %6, %cst {dimension_numbers = #tpu.dot_dimension_numbers<[2], [1], [1], [2], [0, 0, 0, 1, 1, 2], [0], [0]>} : vector<4x16x32xf32>, vector<4x32x24xf32>, vector<4x16x24xf32> -> vector<4x16x24xf32>
    "tpu.trace_stop"() : () -> ()
    %8 = vector.extract_strided_slice %7 {offsets = [0, 0, 0], sizes = [4, 16, 8], strides = [1, 1, 1]} : vector<4x16x24xf32> to vector<4x16x8xf32>
    %9 = vector.extract_strided_slice %7 {offsets = [0, 0, 8], sizes = [4, 16, 8], strides = [1, 1, 1]} : vector<4x16x24xf32> to vector<4x16x8xf32>
    %10 = vector.extract_strided_slice %7 {offsets = [0, 0, 16], sizes = [4, 16, 8], strides = [1, 1, 1]} : vector<4x16x24xf32> to vector<4x16x8xf32>
    %c0_12 = arith.constant 0 : index
    %c0_13 = arith.constant 0 : index
    %c0_14 = arith.constant 0 : index
    %11 = vector.load %arg5[%c0_12, %c0_13, %c0_14] : memref<4x8x32xf32, #tpu.memory_space<vmem>>, vector<4x8x32xf32>
    "tpu.trace_start"() <{level = 10 : i32, message = "hqd,hkd->hqk"}> : () -> ()
    %cst_15 = arith.constant dense<0.000000e+00> : vector<4x16x16xf32>
    %12 = tpu.matmul %8, %9, %cst_15 {dimension_numbers = #tpu.dot_dimension_numbers<[2], [2], [1], [1], [0, 0, 0, 1, 1, 1], [0], [0]>} : vector<4x16x8xf32>, vector<4x16x8xf32>, vector<4x16x16xf32> -> vector<4x16x16xf32>
    "tpu.trace_stop"() : () -> ()
    %cst_16 = arith.constant 0.353553385 : f32
    %13 = vector.broadcast %cst_16 : f32 to vector<4x16x16xf32>
    %14 = arith.mulf %12, %13 : vector<4x16x16xf32>
    %cst_17 = arith.constant 5.000000e-01 : f32
    %15 = vector.broadcast %cst_17 : f32 to vector<1x16x16xf32>
    %16 = arith.cmpf ogt, %2, %15 : vector<1x16x16xf32>
    %cst_18 = arith.constant -1.000000e+06 : f32
    %17 = vector.shape_cast %16 : vector<1x16x16xi1> to vector<1x16x16xi1>
    %18 = vector.broadcast %17 : vector<1x16x16xi1> to vector<4x16x16xi1>
    %19 = vector.broadcast %cst_18 : f32 to vector<4x16x16xf32>
    %20 = arith.select %18, %14, %19 : vector<4x16x16xi1>, vector<4x16x16xf32>
    %cst_19 = arith.constant dense<0xFF800000> : vector<4x16xf32>
    %21 = vector.multi_reduction <maximumf>, %20, %cst_19 [2] : vector<4x16x16xf32> to vector<4x16xf32>
    %22 = vector.shape_cast %21 : vector<4x16xf32> to vector<4x16x1xf32>
    %23 = vector.broadcast %22 : vector<4x16x1xf32> to vector<4x16x16xf32>
    %24 = arith.subf %20, %23 : vector<4x16x16xf32>
    %25 = math.exp %24 : vector<4x16x16xf32>
    %cst_20 = arith.constant dense<0.000000e+00> : vector<4x16xf32>
    %26 = vector.multi_reduction <add>, %25, %cst_20 [2] : vector<4x16x16xf32> to vector<4x16xf32>
    %27 = vector.shape_cast %26 : vector<4x16xf32> to vector<4x16x1xf32>
    %28 = tpu.reciprocal %27 {approx = true} : vector<4x16x1xf32> -> vector<4x16x1xf32>
    %29 = vector.broadcast %28 : vector<4x16x1xf32> to vector<4x16x16xf32>
    %30 = arith.mulf %25, %29 : vector<4x16x16xf32>
    "tpu.trace_start"() <{level = 10 : i32, message = "hqk,hkd->hqd"}> : () -> ()
    %cst_21 = arith.constant dense<0.000000e+00> : vector<4x16x8xf32>
    %31 = tpu.matmul %30, %10, %cst_21 {dimension_numbers = #tpu.dot_dimension_numbers<[2], [1], [1], [2], [0, 0, 0, 1, 1, 2], [0], [0]>} : vector<4x16x16xf32>, vector<4x16x8xf32>, vector<4x16x8xf32> -> vector<4x16x8xf32>
    "tpu.trace_stop"() : () -> ()
    "tpu.trace_start"() <{level = 10 : i32, message = "hnd,hdf->hnf"}> : () -> ()
    %cst_22 = arith.constant dense<0.000000e+00> : vector<4x16x32xf32>
    %32 = tpu.matmul %31, %11, %cst_22 {dimension_numbers = #tpu.dot_dimension_numbers<[2], [1], [1], [2], [0, 0, 0, 1, 1, 2], [0], [0]>} : vector<4x16x8xf32>, vector<4x8x32xf32>, vector<4x16x32xf32> -> vector<4x16x32xf32>
    "tpu.trace_stop"() : () -> ()
    %cst_23 = arith.constant dense<0.000000e+00> : vector<16x32xf32>
    %33 = vector.multi_reduction <add>, %32, %cst_23 [0] : vector<4x16x32xf32> to vector<16x32xf32>
    %34 = arith.addf %33, %0 : vector<16x32xf32>
    %c0_24 = arith.constant 0 : index
    %c0_25 = arith.constant 0 : index
    %35 = vector.load %arg6[%c0_24, %c0_25] : memref<1x32xf32, #tpu.memory_space<vmem>>, vector<1x32xf32>
    %c0_26 = arith.constant 0 : index
    %c0_27 = arith.constant 0 : index
    %36 = vector.load %arg7[%c0_26, %c0_27] : memref<1x32xf32, #tpu.memory_space<vmem>>, vector<1x32xf32>
    %cst_28 = arith.constant dense<0.000000e+00> : vector<16xf32>
    %37 = vector.multi_reduction <add>, %34, %cst_28 [1] : vector<16x32xf32> to vector<16xf32>
    %38 = vector.shape_cast %37 : vector<16xf32> to vector<16x1xf32>
    %cst_29 = arith.constant 3.200000e+01 : f32
    %39 = vector.broadcast %cst_29 : f32 to vector<16x1xf32>
    %40 = arith.divf %38, %39 : vector<16x1xf32>
    %41 = vector.broadcast %40 : vector<16x1xf32> to vector<16x32xf32>
    %42 = arith.subf %34, %41 : vector<16x32xf32>
    %43 = arith.mulf %42, %42 : vector<16x32xf32>
    %cst_30 = arith.constant dense<0.000000e+00> : vector<16xf32>
    %44 = vector.multi_reduction <add>, %43, %cst_30 [1] : vector<16x32xf32> to vector<16xf32>
    %45 = vector.shape_cast %44 : vector<16xf32> to vector<16x1xf32>
    %cst_31 = arith.constant 3.200000e+01 : f32
    %46 = vector.broadcast %cst_31 : f32 to vector<16x1xf32>
    %47 = arith.divf %45, %46 : vector<16x1xf32>
    %48 = vector.broadcast %40 : vector<16x1xf32> to vector<16x32xf32>
    %49 = arith.subf %34, %48 : vector<16x32xf32>
    %cst_32 = arith.constant 9.99999974E-6 : f32
    %50 = vector.broadcast %cst_32 : f32 to vector<16x1xf32>
    %51 = arith.addf %47, %50 : vector<16x1xf32>
    %52 = math.rsqrt %51 : vector<16x1xf32>
    %53 = vector.broadcast %52 : vector<16x1xf32> to vector<16x32xf32>
    %54 = arith.mulf %49, %53 : vector<16x32xf32>
    %55 = vector.broadcast %35 : vector<1x32xf32> to vector<16x32xf32>
    %56 = arith.mulf %54, %55 : vector<16x32xf32>
    %57 = vector.broadcast %36 : vector<1x32xf32> to vector<16x32xf32>
    %58 = arith.addf %56, %57 : vector<16x32xf32>
    %59 = vector.shape_cast %58 : vector<16x32xf32> to vector<1x16x32xf32>
    %60 = vector.broadcast %59 : vector<1x16x32xf32> to vector<4x16x32xf32>
    %c0_33 = arith.constant 0 : index
    %c0_34 = arith.constant 0 : index
    %c0_35 = arith.constant 0 : index
    %61 = vector.load %arg8[%c0_33, %c0_34, %c0_35] : memref<4x32x8xf32, #tpu.memory_space<vmem>>, vector<4x32x8xf32>
    "tpu.trace_start"() <{level = 10 : i32, message = "hnf,hfd->hnd"}> : () -> ()
    %cst_36 = arith.constant dense<0.000000e+00> : vector<4x16x8xf32>
    %62 = tpu.matmul %60, %61, %cst_36 {dimension_numbers = #tpu.dot_dimension_numbers<[2], [1], [1], [2], [0, 0, 0, 1, 1, 2], [0], [0]>} : vector<4x16x32xf32>, vector<4x32x8xf32>, vector<4x16x8xf32> -> vector<4x16x8xf32>
    "tpu.trace_stop"() : () -> ()
    %63 = vector.shape_cast %1 : vector<20x32xf32> to vector<1x20x32xf32>
    %64 = vector.broadcast %63 : vector<1x20x32xf32> to vector<4x20x32xf32>
    %c0_37 = arith.constant 0 : index
    %c0_38 = arith.constant 0 : index
    %c0_39 = arith.constant 0 : index
    %65 = vector.load %arg9[%c0_37, %c0_38, %c0_39] : memref<4x32x16xf32, #tpu.memory_space<vmem>>, vector<4x32x16xf32>
    "tpu.trace_start"() <{level = 10 : i32, message = "hmf,hfe->hme"}> : () -> ()
    %cst_40 = arith.constant dense<0.000000e+00> : vector<4x20x16xf32>
    %66 = tpu.matmul %64, %65, %cst_40 {dimension_numbers = #tpu.dot_dimension_numbers<[2], [1], [1], [2], [0, 0, 0, 1, 1, 2], [0], [0]>} : vector<4x20x32xf32>, vector<4x32x16xf32>, vector<4x20x16xf32> -> vector<4x20x16xf32>
    "tpu.trace_stop"() : () -> ()
    %67 = vector.extract_strided_slice %66 {offsets = [0, 0, 0], sizes = [4, 20, 8], strides = [1, 1, 1]} : vector<4x20x16xf32> to vector<4x20x8xf32>
    %68 = vector.extract_strided_slice %66 {offsets = [0, 0, 8], sizes = [4, 20, 8], strides = [1, 1, 1]} : vector<4x20x16xf32> to vector<4x20x8xf32>
    %c0_41 = arith.constant 0 : index
    %c0_42 = arith.constant 0 : index
    %c0_43 = arith.constant 0 : index
    %69 = vector.load %arg10[%c0_41, %c0_42, %c0_43] : memref<4x8x32xf32, #tpu.memory_space<vmem>>, vector<4x8x32xf32>
    "tpu.trace_start"() <{level = 10 : i32, message = "hqd,hkd->hqk"}> : () -> ()
    %cst_44 = arith.constant dense<0.000000e+00> : vector<4x16x20xf32>
    %70 = tpu.matmul %62, %67, %cst_44 {dimension_numbers = #tpu.dot_dimension_numbers<[2], [2], [1], [1], [0, 0, 0, 1, 1, 1], [0], [0]>} : vector<4x16x8xf32>, vector<4x20x8xf32>, vector<4x16x20xf32> -> vector<4x16x20xf32>
    "tpu.trace_stop"() : () -> ()
    %cst_45 = arith.constant 0.353553385 : f32
    %71 = vector.broadcast %cst_45 : f32 to vector<4x16x20xf32>
    %72 = arith.mulf %70, %71 : vector<4x16x20xf32>
    %cst_46 = arith.constant 5.000000e-01 : f32
    %73 = vector.broadcast %cst_46 : f32 to vector<1x16x20xf32>
    %74 = arith.cmpf ogt, %3, %73 : vector<1x16x20xf32>
    %cst_47 = arith.constant -1.000000e+06 : f32
    %75 = vector.shape_cast %74 : vector<1x16x20xi1> to vector<1x16x20xi1>
    %76 = vector.broadcast %75 : vector<1x16x20xi1> to vector<4x16x20xi1>
    %77 = vector.broadcast %cst_47 : f32 to vector<4x16x20xf32>
    %78 = arith.select %76, %72, %77 : vector<4x16x20xi1>, vector<4x16x20xf32>
    %cst_48 = arith.constant dense<0xFF800000> : vector<4x16xf32>
    %79 = vector.multi_reduction <maximumf>, %78, %cst_48 [2] : vector<4x16x20xf32> to vector<4x16xf32>
    %80 = vector.shape_cast %79 : vector<4x16xf32> to vector<4x16x1xf32>
    %81 = vector.broadcast %80 : vector<4x16x1xf32> to vector<4x16x20xf32>
    %82 = arith.subf %78, %81 : vector<4x16x20xf32>
    %83 = math.exp %82 : vector<4x16x20xf32>
    %cst_49 = arith.constant dense<0.000000e+00> : vector<4x16xf32>
    %84 = vector.multi_reduction <add>, %83, %cst_49 [2] : vector<4x16x20xf32> to vector<4x16xf32>
    %85 = vector.shape_cast %84 : vector<4x16xf32> to vector<4x16x1xf32>
    %86 = tpu.reciprocal %85 {approx = true} : vector<4x16x1xf32> -> vector<4x16x1xf32>
    %87 = vector.broadcast %86 : vector<4x16x1xf32> to vector<4x16x20xf32>
    %88 = arith.mulf %83, %87 : vector<4x16x20xf32>
    "tpu.trace_start"() <{level = 10 : i32, message = "hqk,hkd->hqd"}> : () -> ()
    %cst_50 = arith.constant dense<0.000000e+00> : vector<4x16x8xf32>
    %89 = tpu.matmul %88, %68, %cst_50 {dimension_numbers = #tpu.dot_dimension_numbers<[2], [1], [1], [2], [0, 0, 0, 1, 1, 2], [0], [0]>} : vector<4x16x20xf32>, vector<4x20x8xf32>, vector<4x16x8xf32> -> vector<4x16x8xf32>
    "tpu.trace_stop"() : () -> ()
    "tpu.trace_start"() <{level = 10 : i32, message = "hnd,hdf->hnf"}> : () -> ()
    %cst_51 = arith.constant dense<0.000000e+00> : vector<4x16x32xf32>
    %90 = tpu.matmul %89, %69, %cst_51 {dimension_numbers = #tpu.dot_dimension_numbers<[2], [1], [1], [2], [0, 0, 0, 1, 1, 2], [0], [0]>} : vector<4x16x8xf32>, vector<4x8x32xf32>, vector<4x16x32xf32> -> vector<4x16x32xf32>
    "tpu.trace_stop"() : () -> ()
    %cst_52 = arith.constant dense<0.000000e+00> : vector<16x32xf32>
    %91 = vector.multi_reduction <add>, %90, %cst_52 [0] : vector<4x16x32xf32> to vector<16x32xf32>
    %92 = arith.addf %91, %58 : vector<16x32xf32>
    %c0_53 = arith.constant 0 : index
    %c0_54 = arith.constant 0 : index
    %93 = vector.load %arg11[%c0_53, %c0_54] : memref<1x32xf32, #tpu.memory_space<vmem>>, vector<1x32xf32>
    %c0_55 = arith.constant 0 : index
    %c0_56 = arith.constant 0 : index
    %94 = vector.load %arg12[%c0_55, %c0_56] : memref<1x32xf32, #tpu.memory_space<vmem>>, vector<1x32xf32>
    %cst_57 = arith.constant dense<0.000000e+00> : vector<16xf32>
    %95 = vector.multi_reduction <add>, %92, %cst_57 [1] : vector<16x32xf32> to vector<16xf32>
    %96 = vector.shape_cast %95 : vector<16xf32> to vector<16x1xf32>
    %cst_58 = arith.constant 3.200000e+01 : f32
    %97 = vector.broadcast %cst_58 : f32 to vector<16x1xf32>
    %98 = arith.divf %96, %97 : vector<16x1xf32>
    %99 = vector.broadcast %98 : vector<16x1xf32> to vector<16x32xf32>
    %100 = arith.subf %92, %99 : vector<16x32xf32>
    %101 = arith.mulf %100, %100 : vector<16x32xf32>
    %cst_59 = arith.constant dense<0.000000e+00> : vector<16xf32>
    %102 = vector.multi_reduction <add>, %101, %cst_59 [1] : vector<16x32xf32> to vector<16xf32>
    %103 = vector.shape_cast %102 : vector<16xf32> to vector<16x1xf32>
    %cst_60 = arith.constant 3.200000e+01 : f32
    %104 = vector.broadcast %cst_60 : f32 to vector<16x1xf32>
    %105 = arith.divf %103, %104 : vector<16x1xf32>
    %106 = vector.broadcast %98 : vector<16x1xf32> to vector<16x32xf32>
    %107 = arith.subf %92, %106 : vector<16x32xf32>
    %cst_61 = arith.constant 9.99999974E-6 : f32
    %108 = vector.broadcast %cst_61 : f32 to vector<16x1xf32>
    %109 = arith.addf %105, %108 : vector<16x1xf32>
    %110 = math.rsqrt %109 : vector<16x1xf32>
    %111 = vector.broadcast %110 : vector<16x1xf32> to vector<16x32xf32>
    %112 = arith.mulf %107, %111 : vector<16x32xf32>
    %113 = vector.broadcast %93 : vector<1x32xf32> to vector<16x32xf32>
    %114 = arith.mulf %112, %113 : vector<16x32xf32>
    %115 = vector.broadcast %94 : vector<1x32xf32> to vector<16x32xf32>
    %116 = arith.addf %114, %115 : vector<16x32xf32>
    %c0_62 = arith.constant 0 : index
    %c0_63 = arith.constant 0 : index
    %117 = vector.load %arg13[%c0_62, %c0_63] : memref<32x64xf32, #tpu.memory_space<vmem>>, vector<32x64xf32>
    %cst_64 = arith.constant dense<0.000000e+00> : vector<16x64xf32>
    %118 = tpu.matmul %116, %117, %cst_64 {dimension_numbers = #tpu.dot_dimension_numbers<[1], [0], [0], [1], [0, 0, 1, 1], [], []>} : vector<16x32xf32>, vector<32x64xf32>, vector<16x64xf32> -> vector<16x64xf32>
    %c0_65 = arith.constant 0 : index
    %c0_66 = arith.constant 0 : index
    %119 = vector.load %arg14[%c0_65, %c0_66] : memref<1x64xf32, #tpu.memory_space<vmem>>, vector<1x64xf32>
    %120 = vector.broadcast %119 : vector<1x64xf32> to vector<16x64xf32>
    %121 = arith.addf %118, %120 : vector<16x64xf32>
    %cst_67 = arith.constant 0.000000e+00 : f32
    %122 = vector.broadcast %cst_67 : f32 to vector<16x64xf32>
    %123 = arith.cmpf oge, %121, %122 : vector<16x64xf32>
    %cst_68 = arith.constant 0.00999999977 : f32
    %124 = vector.broadcast %cst_68 : f32 to vector<16x64xf32>
    %125 = arith.mulf %124, %121 : vector<16x64xf32>
    %126 = arith.select %123, %121, %125 : vector<16x64xi1>, vector<16x64xf32>
    %c0_69 = arith.constant 0 : index
    %c0_70 = arith.constant 0 : index
    %127 = vector.load %arg15[%c0_69, %c0_70] : memref<64x32xf32, #tpu.memory_space<vmem>>, vector<64x32xf32>
    %cst_71 = arith.constant dense<0.000000e+00> : vector<16x32xf32>
    %128 = tpu.matmul %126, %127, %cst_71 {dimension_numbers = #tpu.dot_dimension_numbers<[1], [0], [0], [1], [0, 0, 1, 1], [], []>} : vector<16x64xf32>, vector<64x32xf32>, vector<16x32xf32> -> vector<16x32xf32>
    %c0_72 = arith.constant 0 : index
    %c0_73 = arith.constant 0 : index
    %129 = vector.load %arg16[%c0_72, %c0_73] : memref<1x32xf32, #tpu.memory_space<vmem>>, vector<1x32xf32>
    %130 = vector.broadcast %129 : vector<1x32xf32> to vector<16x32xf32>
    %131 = arith.addf %128, %130 : vector<16x32xf32>
    %132 = arith.addf %131, %116 : vector<16x32xf32>
    %c0_74 = arith.constant 0 : index
    %c0_75 = arith.constant 0 : index
    %133 = vector.load %arg17[%c0_74, %c0_75] : memref<1x32xf32, #tpu.memory_space<vmem>>, vector<1x32xf32>
    %c0_76 = arith.constant 0 : index
    %c0_77 = arith.constant 0 : index
    %134 = vector.load %arg18[%c0_76, %c0_77] : memref<1x32xf32, #tpu.memory_space<vmem>>, vector<1x32xf32>
    %cst_78 = arith.constant dense<0.000000e+00> : vector<16xf32>
    %135 = vector.multi_reduction <add>, %132, %cst_78 [1] : vector<16x32xf32> to vector<16xf32>
    %136 = vector.shape_cast %135 : vector<16xf32> to vector<16x1xf32>
    %cst_79 = arith.constant 3.200000e+01 : f32
    %137 = vector.broadcast %cst_79 : f32 to vector<16x1xf32>
    %138 = arith.divf %136, %137 : vector<16x1xf32>
    %139 = vector.broadcast %138 : vector<16x1xf32> to vector<16x32xf32>
    %140 = arith.subf %132, %139 : vector<16x32xf32>
    %141 = arith.mulf %140, %140 : vector<16x32xf32>
    %cst_80 = arith.constant dense<0.000000e+00> : vector<16xf32>
    %142 = vector.multi_reduction <add>, %141, %cst_80 [1] : vector<16x32xf32> to vector<16xf32>
    %143 = vector.shape_cast %142 : vector<16xf32> to vector<16x1xf32>
    %cst_81 = arith.constant 3.200000e+01 : f32
    %144 = vector.broadcast %cst_81 : f32 to vector<16x1xf32>
    %145 = arith.divf %143, %144 : vector<16x1xf32>
    %146 = vector.broadcast %138 : vector<16x1xf32> to vector<16x32xf32>
    %147 = arith.subf %132, %146 : vector<16x32xf32>
    %cst_82 = arith.constant 9.99999974E-6 : f32
    %148 = vector.broadcast %cst_82 : f32 to vector<16x1xf32>
    %149 = arith.addf %145, %148 : vector<16x1xf32>
    %150 = math.rsqrt %149 : vector<16x1xf32>
    %151 = vector.broadcast %150 : vector<16x1xf32> to vector<16x32xf32>
    %152 = arith.mulf %147, %151 : vector<16x32xf32>
    %153 = vector.broadcast %133 : vector<1x32xf32> to vector<16x32xf32>
    %154 = arith.mulf %152, %153 : vector<16x32xf32>
    %155 = vector.broadcast %134 : vector<1x32xf32> to vector<16x32xf32>
    %156 = arith.addf %154, %155 : vector<16x32xf32>
    %c0_83 = arith.constant 0 : index
    %c0_84 = arith.constant 0 : index
    %157 = vector.load %arg19[%c0_83, %c0_84] : memref<16x32xf32, #tpu.memory_space<vmem>>, vector<16x32xf32>
    tpu.vector_store %arg19[%c0_83, %c0_84], %156 {strides = array<i32>} : memref<16x32xf32, #tpu.memory_space<vmem>>, vector<16x32xf32>,
    return
  }
}

</mosaic_0001>

<llo_original>
// kernel: tpu_custom_call.1
$region0: #{tpu_custom_call.1}
  #allocation0 [shape = 'u32[]', space=smem, size = 0x4, offset = 0x4, fixed_abs, tag = 'smem constant byte address 0x4 - core index']
  #allocation1 [shape = 'u32[144,128]{1,0:T(1,128)}', space=vmem, size = 0x12000, scoped, tag = 'internal scratch']
  %s0 = inlined_call_operand.vmem [shape: f32[16,32], index: 0, kind: input, shape index: {}]
  %s1 = inlined_call_operand.vmem [shape: f32[20,32], index: 1, kind: input, shape index: {}]
  %s2 = inlined_call_operand.vmem [shape: f32[1,16,16], index: 2, kind: input, shape index: {}]
  %s3 = inlined_call_operand.vmem [shape: f32[1,16,20], index: 3, kind: input, shape index: {}]
  %s4 = inlined_call_operand.vmem [shape: f32[4,32,24], index: 4, kind: input, shape index: {}]
  %s5 = inlined_call_operand.vmem [shape: f32[4,8,32], index: 5, kind: input, shape index: {}]
  %s6 = inlined_call_operand.vmem [shape: f32[1,32], index: 6, kind: input, shape index: {}]
  %s7 = inlined_call_operand.vmem [shape: f32[1,32], index: 7, kind: input, shape index: {}]
  %s8 = inlined_call_operand.vmem [shape: f32[4,32,8], index: 8, kind: input, shape index: {}]
  %s9 = inlined_call_operand.vmem [shape: f32[4,32,16], index: 9, kind: input, shape index: {}]
  %s10 = inlined_call_operand.vmem [shape: f32[4,8,32], index: 10, kind: input, shape index: {}]
  %s11 = inlined_call_operand.vmem [shape: f32[1,32], index: 11, kind: input, shape index: {}]
  %s12 = inlined_call_operand.vmem [shape: f32[1,32], index: 12, kind: input, shape index: {}]
  %s13 = inlined_call_operand.vmem [shape: f32[32,64], index: 13, kind: input, shape index: {}]
  %s14 = inlined_call_operand.vmem [shape: f32[1,64], index: 14, kind: input, shape index: {}]
  %s15 = inlined_call_operand.vmem [shape: f32[64,32], index: 15, kind: input, shape index: {}]
  %s16 = inlined_call_operand.vmem [shape: f32[1,32], index: 16, kind: input, shape index: {}]
  %s17 = inlined_call_operand.vmem [shape: f32[1,32], index: 17, kind: input, shape index: {}]
  %s18 = inlined_call_operand.vmem [shape: f32[1,32], index: 18, kind: input, shape index: {}]
  %s19 = inlined_call_operand.hbm [shape: f32[16,32], index: 19, kind: output, shape index: {}]
  %s20 = sld [smem:[#allocation0]]
  $region86: #{tpu_custom_call.1} parent=0
    _
  %s22 = ssub.s32 1, %s20
  %s23 = scalar_select 0, %s22, %s20
  $region1: #{tpu_custom_call.1} parent=0
    #allocation2 [shape = 'u8[8192]{0}', space=vmem, size = 0x2000, scoped, tag = 'output window, operand 0, single buffered']
    #allocation3 [shape = 's32[1]{0}', space=sflag, size = 0x4, scoped, tag = 'scoped memory for tpu_custom_call.1']
    %24 = vsyncpa [#allocation3], 0
    // Predicated region
    $region2: #{tpu_custom_call.1} parent=1 // pred_check
      _
    $region3: #{tpu_custom_call.1} parent=1 // pred_check_branch
      %26 = sbr.rel (0) target = $region5
    $region4: #{tpu_custom_call.1} parent=1 // pred_region
      _
    $region5: #{tpu_custom_call.1} parent=1 // pred_fallthru
      _
    // Predicated region
    $region6: #{tpu_custom_call.1} parent=1 // pred_check
      _
    $region7: #{tpu_custom_call.1} parent=1 // pred_check_branch
      %28 = sbr.rel (0) target = $region9
    $region8: #{tpu_custom_call.1} parent=1 // pred_region
      _
    $region9: #{tpu_custom_call.1} parent=1 // pred_fallthru
      _
    // Predicated region
    $region10: #{tpu_custom_call.1} parent=1 // pred_check
      _
    $region11: #{tpu_custom_call.1} parent=1 // pred_check_branch
      %30 = sbr.rel (0) target = $region13
    $region12: #{tpu_custom_call.1} parent=1 // pred_region
      _
    $region13: #{tpu_custom_call.1} parent=1 // pred_fallthru
      _
    // Predicated region
    $region14: #{tpu_custom_call.1} parent=1 // pred_check
      _
    $region15: #{tpu_custom_call.1} parent=1 // pred_check_branch
      %32 = sbr.rel (0) target = $region17
    $region16: #{tpu_custom_call.1} parent=1 // pred_region
      _
    $region17: #{tpu_custom_call.1} parent=1 // pred_fallthru
      _
    // Predicated region
    $region18: #{tpu_custom_call.1} parent=1 // pred_check
      _
    $region19: #{tpu_custom_call.1} parent=1 // pred_check_branch
      %34 = sbr.rel (0) target = $region21
    $region20: #{tpu_custom_call.1} parent=1 // pred_region
      _
    $region21: #{tpu_custom_call.1} parent=1 // pred_fallthru
      _
    // Predicated region
    $region22: #{tpu_custom_call.1} parent=1 // pred_check
      _
    $region23: #{tpu_custom_call.1} parent=1 // pred_check_branch
      %36 = sbr.rel (0) target = $region25
    $region24: #{tpu_custom_call.1} parent=1 // pred_region
      _
    $region25: #{tpu_custom_call.1} parent=1 // pred_fallthru
      _
    // Predicated region
    $region26: #{tpu_custom_call.1} parent=1 // pred_check
      _
    $region27: #{tpu_custom_call.1} parent=1 // pred_check_branch
      %38 = sbr.rel (0) target = $region29
    $region28: #{tpu_custom_call.1} parent=1 // pred_region
      _
    $region29: #{tpu_custom_call.1} parent=1 // pred_fallthru
      _
    // Predicated region
    $region30: #{tpu_custom_call.1} parent=1 // pred_check
      _
    $region31: #{tpu_custom_call.1} parent=1 // pred_check_branch
      %40 = sbr.rel (0) target = $region33
    $region32: #{tpu_custom_call.1} parent=1 // pred_region
      _
    $region33: #{tpu_custom_call.1} parent=1 // pred_fallthru
      _
    // Predicated region
    $region34: #{tpu_custom_call.1} parent=1 // pred_check
      _
    $region35: #{tpu_custom_call.1} parent=1 // pred_check_branch
      %42 = sbr.rel (0) target = $region37
    $region36: #{tpu_custom_call.1} parent=1 // pred_region
      _
    $region37: #{tpu_custom_call.1} parent=1 // pred_fallthru
      _
    // Predicated region
    $region38: #{tpu_custom_call.1} parent=1 // pred_check
      _
    $region39: #{tpu_custom_call.1} parent=1 // pred_check_branch
      %44 = sbr.rel (0) target = $region41
    $region40: #{tpu_custom_call.1} parent=1 // pred_region
      _
    $region41: #{tpu_custom_call.1} parent=1 // pred_fallthru
      _
    // Predicated region
    $region42: #{tpu_custom_call.1} parent=1 // pred_check
      _
    $region43: #{tpu_custom_call.1} parent=1 // pred_check_branch
      %46 = sbr.rel (0) target = $region45
    $region44: #{tpu_custom_call.1} parent=1 // pred_region
      _
    $region45: #{tpu_custom_call.1} parent=1 // pred_fallthru
      _
    // Predicated region
    $region46: #{tpu_custom_call.1} parent=1 // pred_check
      _
    $region47: #{tpu_custom_call.1} parent=1 // pred_check_branch
      %48 = sbr.rel (0) target = $region49
    $region48: #{tpu_custom_call.1} parent=1 // pred_region
      _
    $region49: #{tpu_custom_call.1} parent=1 // pred_fallthru
      _
    // Predicated region
    $region50: #{tpu_custom_call.1} parent=1 // pred_check
      _
    $region51: #{tpu_custom_call.1} parent=1 // pred_check_branch
      %50 = sbr.rel (0) target = $region53
    $region52: #{tpu_custom_call.1} parent=1 // pred_region
      _
    $region53: #{tpu_custom_call.1} parent=1 // pred_fallthru
      _
    // Predicated region
    $region54: #{tpu_custom_call.1} parent=1 // pred_check
      _
    $region55: #{tpu_custom_call.1} parent=1 // pred_check_branch
      %52 = sbr.rel (0) target = $region57
    $region56: #{tpu_custom_call.1} parent=1 // pred_region
      _
    $region57: #{tpu_custom_call.1} parent=1 // pred_fallthru
      _
    // Predicated region
    $region58: #{tpu_custom_call.1} parent=1 // pred_check
      _
    $region59: #{tpu_custom_call.1} parent=1 // pred_check_branch
      %54 = sbr.rel (0) target = $region61
    $region60: #{tpu_custom_call.1} parent=1 // pred_region
      _
    $region61: #{tpu_custom_call.1} parent=1 // pred_fallthru
      _
    // Predicated region
    $region62: #{tpu_custom_call.1} parent=1 // pred_check
      _
    $region63: #{tpu_custom_call.1} parent=1 // pred_check_branch
      %56 = sbr.rel (0) target = $region65
    $region64: #{tpu_custom_call.1} parent=1 // pred_region
      _
    $region65: #{tpu_custom_call.1} parent=1 // pred_fallthru
      _
    // Predicated region
    $region66: #{tpu_custom_call.1} parent=1 // pred_check
      _
    $region67: #{tpu_custom_call.1} parent=1 // pred_check_branch
      %58 = sbr.rel (0) target = $region69
    $region68: #{tpu_custom_call.1} parent=1 // pred_region
      _
    $region69: #{tpu_custom_call.1} parent=1 // pred_fallthru
      _
    // Predicated region
    $region70: #{tpu_custom_call.1} parent=1 // pred_check
      _
    $region71: #{tpu_custom_call.1} parent=1 // pred_check_branch
      %60 = sbr.rel (0) target = $region73
    $region72: #{tpu_custom_call.1} parent=1 // pred_region
      _
    $region73: #{tpu_custom_call.1} parent=1 // pred_fallthru
      _
    // Predicated region
    $region74: #{tpu_custom_call.1} parent=1 // pred_check
      _
    $region75: #{tpu_custom_call.1} parent=1 // pred_check_branch
      %62 = sbr.rel (0) target = $region77
    $region76: #{tpu_custom_call.1} parent=1 // pred_region
      _
    $region77: #{tpu_custom_call.1} parent=1 // pred_fallthru
      _
    %v63 = vld [vmem:[%s0] sm:$0xff]
    %v64 = vld [vmem:[%s0 + $0x8] sm:$0xff]
    %v65 = vld [vmem:[%s1] sm:$0xff]
    %v66 = vld [vmem:[%s1 + $0x8] sm:$0xff]
    %v67 = vld [vmem:[%s1 + $0x10] sm:$0xf]
    %v68 = vld [vmem:[%s2] sm:$0xff]
    %v69 = vld [vmem:[%s2 + $0x8] sm:$0xff]
    %v70 = vld [vmem:[%s3] sm:$0xff]
    %v71 = vld [vmem:[%s3 + $0x8] sm:$0xff]
    %v72 = vld [vmem:[%s4] sm:$0xff]
    %v73 = vld [vmem:[%s4 + $0x8] sm:$0xff]
    %v74 = vld [vmem:[%s4 + $0x10] sm:$0xff]
    %v75 = vld [vmem:[%s4 + $0x18] sm:$0xff]
    %v76 = vld [vmem:[%s4 + $0x20] sm:$0xff]
    %v77 = vld [vmem:[%s4 + $0x28] sm:$0xff]
    %v78 = vld [vmem:[%s4 + $0x30] sm:$0xff]
    %v79 = vld [vmem:[%s4 + $0x38] sm:$0xff]
    %v80 = vld [vmem:[%s4 + $0x40] sm:$0xff]
    %v81 = vld [vmem:[%s4 + $0x48] sm:$0xff]
    %v82 = vld [vmem:[%s4 + $0x50] sm:$0xff]
    %v83 = vld [vmem:[%s4 + $0x58] sm:$0xff]
    %v84 = vld [vmem:[%s4 + $0x60] sm:$0xff]
    %v85 = vld [vmem:[%s4 + $0x68] sm:$0xff]
    %v86 = vld [vmem:[%s4 + $0x70] sm:$0xff]
    %v87 = vld [vmem:[%s4 + $0x78] sm:$0xff]
    %vm88 = vcmask 261120
    %v90 = vsel %vm88, %v63, 0
    %v93 = vsel %vm88, %v64, 0
    %95 = vmatprep.subr.mxu0 0.0
    %96 = vmatpush1.msra.mxu0 %v72
    %97 = vmatprep.subr.mxu0 0.0
    %98 = vmatpush1.msra.mxu0 %v73
    %99 = vmatprep.subr.mxu0 0.0
    %100 = vmatpush1.msra.mxu0 %v74
    %101 = vmatprep.subr.mxu0 0.0
    %102 = vmatpush1.msra.mxu0 %v75
    %103 = vmatprep.subr.mxu0 0.0
    %104 = vmatpush1.msra.mxu0 0.0
    %105 = vmatprep.subr.mxu0 0.0
    %106 = vmatpush1.msra.mxu0 0.0
    %107 = vmatprep.subr.mxu0 0.0
    %108 = vmatpush1.msra.mxu0 0.0
    %109 = vmatprep.subr.mxu0 0.0
    %110 = vmatpush1.msra.mxu0 0.0
    %111 = vmatprep.subr.mxu0 0.0
    %112 = vmatpush1.msra.mxu0 0.0
    %113 = vmatprep.subr.mxu0 0.0
    %114 = vmatpush1.msra.mxu0 0.0
    %115 = vmatprep.subr.mxu0 0.0
    %116 = vmatpush1.msra.mxu0 0.0
    %117 = vmatprep.subr.mxu0 0.0
    %118 = vmatpush1.msra.mxu0 0.0
    %119 = vmatprep.subr.mxu0 0.0
    %120 = vmatpush1.msra.mxu0 0.0
    %121 = vmatprep.subr.mxu0 0.0
    %122 = vmatpush1.msra.mxu0 0.0
    %123 = vmatprep.subr.mxu0 0.0
    %124 = vmatpush1.msra.mxu0 0.0
    %125 = vmatprep.subr.mxu0 0.0
    %126 = vmatpush1.msra.mxu0 0.0
    %127 = vmatprep.subr.mxu0 0.0
    %128 = vmatpush1.msra.mxu0 0.0
    %129 = vmatprep.subr.mxu0 0.0
    %130 = vmatpush1.msra.mxu0 0.0
    %131 = vmatprep.subr.mxu0 0.0
    %132 = vmatpush1.msra.mxu0 0.0
    %133 = vmatprep.subr.mxu0 0.0
    %134 = vmatpush1.msra.mxu0 0.0
    %135 = vmatprep.subr.mxu0 0.0
    %136 = vmatpush1.msra.mxu0 0.0
    %137 = vmatprep.subr.mxu0 0.0
    %138 = vmatpush1.msra.mxu0 0.0
    %139 = vmatprep.subr.mxu0 0.0
    %140 = vmatpush1.msra.mxu0 0.0
    %141 = vmatprep.subr.mxu0 0.0
    %142 = vmatpush1.msra.mxu0 0.0
    %143 = vmatprep.subr.mxu0 0.0
    %144 = vmatpush1.msra.mxu0 0.0
    %145 = vmatprep.subr.mxu0 0.0
    %146 = vmatpush1.msra.mxu0 0.0
    %147 = vmatprep.subr.mxu0 0.0
    %148 = vmatpush1.msra.mxu0 0.0
    %149 = vmatprep.subr.mxu0 0.0
    %150 = vmatpush1.msra.mxu0 0.0
    %151 = vmatprep.subr.mxu0 0.0
    %152 = vmatpush1.msra.mxu0 0.0
    %153 = vmatprep.subr.mxu0 0.0
    %154 = vmatpush1.msra.mxu0 0.0
    %155 = vmatprep.subr.mxu0 0.0
    %156 = vmatpush1.msra.mxu0 0.0
    %157 = vmatprep.subr.mxu0 0.0
    %158 = vmatpush1.msra.mxu0 0.0
    %159 = vmatprep.mubr.f32.mxu0 0.0
    %160 = vmatmul.mubr.f32.gmra.mrb[0].mxu0 %v90
    %v161 = vpop.f32.mrb[0].mxu0
    %v162 = vadd.f32 0.0, %v161
    %v163 = vpop.f32.mrb[0].mxu0
    %164 = vmatprep.mubr.f32.mxu0 0.0
    %165 = vmatmul.mubr.f32.gmra.mrb[0].mxu0 %v93
    %v166 = vpop.f32.mrb[0].mxu0
    %v167 = vadd.f32 0.0, %v166
    %v168 = vpop.f32.mrb[0].mxu0
    %169 = vdwg.mxu0
    %170 = vmatprep.subr.mxu0 0.0
    %171 = vmatpush1.msra.mxu0 %v76
    %172 = vmatprep.subr.mxu0 0.0
    %173 = vmatpush1.msra.mxu0 %v77
    %174 = vmatprep.subr.mxu0 0.0
    %175 = vmatpush1.msra.mxu0 %v78
    %176 = vmatprep.subr.mxu0 0.0
    %177 = vmatpush1.msra.mxu0 %v79
    %178 = vmatprep.subr.mxu0 0.0
    %179 = vmatpush1.msra.mxu0 0.0
    %180 = vmatprep.subr.mxu0 0.0
    %181 = vmatpush1.msra.mxu0 0.0
    %182 = vmatprep.subr.mxu0 0.0
    %183 = vmatpush1.msra.mxu0 0.0
    %184 = vmatprep.subr.mxu0 0.0
    %185 = vmatpush1.msra.mxu0 0.0
    %186 = vmatprep.subr.mxu0 0.0
    %187 = vmatpush1.msra.mxu0 0.0
    %188 = vmatprep.subr.mxu0 0.0
    %189 = vmatpush1.msra.mxu0 0.0
    %190 = vmatprep.subr.mxu0 0.0
    %191 = vmatpush1.msra.mxu0 0.0
    %192 = vmatprep.subr.mxu0 0.0
    %193 = vmatpush1.msra.mxu0 0.0
    %194 = vmatprep.subr.mxu0 0.0
    %195 = vmatpush1.msra.mxu0 0.0
    %196 = vmatprep.subr.mxu0 0.0
    %197 = vmatpush1.msra.mxu0 0.0
    %198 = vmatprep.subr.mxu0 0.0
    %199 = vmatpush1.msra.mxu0 0.0
    %200 = vmatprep.subr.mxu0 0.0
    %201 = vmatpush1.msra.mxu0 0.0
    %202 = vmatprep.subr.mxu0 0.0
    %203 = vmatpush1.msra.mxu0 0.0
    %204 = vmatprep.subr.mxu0 0.0
    %205 = vmatpush1.msra.mxu0 0.0
    %206 = vmatprep.subr.mxu0 0.0
    %207 = vmatpush1.msra.mxu0 0.0
    %208 = vmatprep.subr.mxu0 0.0
    %209 = vmatpush1.msra.mxu0 0.0
    %210 = vmatprep.subr.mxu0 0.0
    %211 = vmatpush1.msra.mxu0 0.0
    %212 = vmatprep.subr.mxu0 0.0
    %213 = vmatpush1.msra.mxu0 0.0
    %214 = vmatprep.subr.mxu0 0.0
    %215 = vmatpush1.msra.mxu0 0.0
    %216 = vmatprep.subr.mxu0 0.0
    %217 = vmatpush1.msra.mxu0 0.0
    %218 = vmatprep.subr.mxu0 0.0
    %219 = vmatpush1.msra.mxu0 0.0
    %220 = vmatprep.subr.mxu0 0.0
    %221 = vmatpush1.msra.mxu0 0.0
    %222 = vmatprep.subr.mxu0 0.0
    %223 = vmatpush1.msra.mxu0 0.0
    %224 = vmatprep.subr.mxu0 0.0
    %225 = vmatpush1.msra.mxu0 0.0
    %226 = vmatprep.subr.mxu0 0.0
    %227 = vmatpush1.msra.mxu0 0.0
    %228 = vmatprep.subr.mxu0 0.0
    %229 = vmatpush1.msra.mxu0 0.0
    %230 = vmatprep.subr.mxu0 0.0
    %231 = vmatpush1.msra.mxu0 0.0
    %232 = vmatprep.subr.mxu0 0.0
    %233 = vmatpush1.msra.mxu0 0.0
    %234 = vmatprep.mubr.f32.mxu0 0.0
    %235 = vmatmul.mubr.f32.gmra.mrb[0].mxu0 %v90
    %v236 = vpop.f32.mrb[0].mxu0
    %v237 = vadd.f32 0.0, %v236
    %v238 = vpop.f32.mrb[0].mxu0
    %239 = vmatprep.mubr.f32.mxu0 0.0
    %240 = vmatmul.mubr.f32.gmra.mrb[0].mxu0 %v93
    %v241 = vpop.f32.mrb[0].mxu0
    %v242 = vadd.f32 0.0, %v241
    %v243 = vpop.f32.mrb[0].mxu0
    %244 = vdwg.mxu0
    %245 = vmatprep.subr.mxu0 0.0
    %246 = vmatpush1.msra.mxu0 %v80
    %247 = vmatprep.subr.mxu0 0.0
    %248 = vmatpush1.msra.mxu0 %v81
    %249 = vmatprep.subr.mxu0 0.0
    %250 = vmatpush1.msra.mxu0 %v82
    %251 = vmatprep.subr.mxu0 0.0
    %252 = vmatpush1.msra.mxu0 %v83
    %253 = vmatprep.subr.mxu0 0.0
    %254 = vmatpush1.msra.mxu0 0.0
    %255 = vmatprep.subr.mxu0 0.0
    %256 = vmatpush1.msra.mxu0 0.0
    %257 = vmatprep.subr.mxu0 0.0
    %258 = vmatpush1.msra.mxu0 0.0
    %259 = vmatprep.subr.mxu0 0.0
    %260 = vmatpush1.msra.mxu0 0.0
    %261 = vmatprep.subr.mxu0 0.0
    %262 = vmatpush1.msra.mxu0 0.0
    %263 = vmatprep.subr.mxu0 0.0
    %264 = vmatpush1.msra.mxu0 0.0
    %265 = vmatprep.subr.mxu0 0.0
    %266 = vmatpush1.msra.mxu0 0.0
    %267 = vmatprep.subr.mxu0 0.0
    %268 = vmatpush1.msra.mxu0 0.0
    %269 = vmatprep.subr.mxu0 0.0
    %270 = vmatpush1.msra.mxu0 0.0
    %271 = vmatprep.subr.mxu0 0.0
    %272 = vmatpush1.msra.mxu0 0.0
    %273 = vmatprep.subr.mxu0 0.0
    %274 = vmatpush1.msra.mxu0 0.0
    %275 = vmatprep.subr.mxu0 0.0
    %276 = vmatpush1.msra.mxu0 0.0
    %277 = vmatprep.subr.mxu0 0.0
    %278 = vmatpush1.msra.mxu0 0.0
    %279 = vmatprep.subr.mxu0 0.0
    %280 = vmatpush1.msra.mxu0 0.0
    %281 = vmatprep.subr.mxu0 0.0
    %282 = vmatpush1.msra.mxu0 0.0
    %283 = vmatprep.subr.mxu0 0.0
    %284 = vmatpush1.msra.mxu0 0.0
    %285 = vmatprep.subr.mxu0 0.0
    %286 = vmatpush1.msra.mxu0 0.0
    %287 = vmatprep.subr.mxu0 0.0
    %288 = vmatpush1.msra.mxu0 0.0
    %289 = vmatprep.subr.mxu0 0.0
    %290 = vmatpush1.msra.mxu0 0.0
    %291 = vmatprep.subr.mxu0 0.0
    %292 = vmatpush1.msra.mxu0 0.0
    %293 = vmatprep.subr.mxu0 0.0
    %294 = vmatpush1.msra.mxu0 0.0
    %295 = vmatprep.subr.mxu0 0.0
    %296 = vmatpush1.msra.mxu0 0.0
    %297 = vmatprep.subr.mxu0 0.0
    %298 = vmatpush1.msra.mxu0 0.0
    %299 = vmatprep.subr.mxu0 0.0
    %300 = vmatpush1.msra.mxu0 0.0
    %301 = vmatprep.subr.mxu0 0.0
    %302 = vmatpush1.msra.mxu0 0.0
    %303 = vmatprep.subr.mxu0 0.0
    %304 = vmatpush1.msra.mxu0 0.0
    %305 = vmatprep.subr.mxu0 0.0
    %306 = vmatpush1.msra.mxu0 0.0
    %307 = vmatprep.subr.mxu0 0.0
    %308 = vmatpush1.msra.mxu0 0.0
    %309 = vmatprep.mubr.f32.mxu0 0.0
    %310 = vmatmul.mubr.f32.gmra.mrb[0].mxu0 %v90
    %v311 = vpop.f32.mrb[0].mxu0
    %v312 = vadd.f32 0.0, %v311
    %v313 = vpop.f32.mrb[0].mxu0
    %314 = vmatprep.mubr.f32.mxu0 0.0
    %315 = vmatmul.mubr.f32.gmra.mrb[0].mxu0 %v93
    %v316 = vpop.f32.mrb[0].mxu0
    %v317 = vadd.f32 0.0, %v316
    %v318 = vpop.f32.mrb[0].mxu0
    %319 = vdwg.mxu0
    %320 = vmatprep.subr.mxu0 0.0
    %321 = vmatpush1.msra.mxu0 %v84
    %322 = vmatprep.subr.mxu0 0.0
    %323 = vmatpush1.msra.mxu0 %v85
    %324 = vmatprep.subr.mxu0 0.0
    %325 = vmatpush1.msra.mxu0 %v86
    %326 = vmatprep.subr.mxu0 0.0
    %327 = vmatpush1.msra.mxu0 %v87
    %328 = vmatprep.subr.mxu0 0.0
    %329 = vmatpush1.msra.mxu0 0.0
    %330 = vmatprep.subr.mxu0 0.0
    %331 = vmatpush1.msra.mxu0 0.0
    %332 = vmatprep.subr.mxu0 0.0
    %333 = vmatpush1.msra.mxu0 0.0
    %334 = vmatprep.subr.mxu0 0.0
    %335 = vmatpush1.msra.mxu0 0.0
    %336 = vmatprep.subr.mxu0 0.0
    %337 = vmatpush1.msra.mxu0 0.0
    %338 = vmatprep.subr.mxu0 0.0
    %339 = vmatpush1.msra.mxu0 0.0
    %340 = vmatprep.subr.mxu0 0.0
    %341 = vmatpush1.msra.mxu0 0.0
    %342 = vmatprep.subr.mxu0 0.0
    %343 = vmatpush1.msra.mxu0 0.0
    %344 = vmatprep.subr.mxu0 0.0
    %345 = vmatpush1.msra.mxu0 0.0
    %346 = vmatprep.subr.mxu0 0.0
    %347 = vmatpush1.msra.mxu0 0.0
    %348 = vmatprep.subr.mxu0 0.0
    %349 = vmatpush1.msra.mxu0 0.0
    %350 = vmatprep.subr.mxu0 0.0
    %351 = vmatpush1.msra.mxu0 0.0
    %352 = vmatprep.subr.mxu0 0.0
    %353 = vmatpush1.msra.mxu0 0.0
    %354 = vmatprep.subr.mxu0 0.0
    %355 = vmatpush1.msra.mxu0 0.0
    %356 = vmatprep.subr.mxu0 0.0
    %357 = vmatpush1.msra.mxu0 0.0
    %358 = vmatprep.subr.mxu0 0.0
    %359 = vmatpush1.msra.mxu0 0.0
    %360 = vmatprep.subr.mxu0 0.0
    %361 = vmatpush1.msra.mxu0 0.0
    %362 = vmatprep.subr.mxu0 0.0
    %363 = vmatpush1.msra.mxu0 0.0
    %364 = vmatprep.subr.mxu0 0.0
    %365 = vmatpush1.msra.mxu0 0.0
    %366 = vmatprep.subr.mxu0 0.0
    %367 = vmatpush1.msra.mxu0 0.0
    %368 = vmatprep.subr.mxu0 0.0
    %369 = vmatpush1.msra.mxu0 0.0
    %370 = vmatprep.subr.mxu0 0.0
    %371 = vmatpush1.msra.mxu0 0.0
    %372 = vmatprep.subr.mxu0 0.0
    %373 = vmatpush1.msra.mxu0 0.0
    %374 = vmatprep.subr.mxu0 0.0
    %375 = vmatpush1.msra.mxu0 0.0
    %376 = vmatprep.subr.mxu0 0.0
    %377 = vmatpush1.msra.mxu0 0.0
    %378 = vmatprep.subr.mxu0 0.0
    %379 = vmatpush1.msra.mxu0 0.0
    %380 = vmatprep.subr.mxu0 0.0
    %381 = vmatpush1.msra.mxu0 0.0
    %382 = vmatprep.subr.mxu0 0.0
    %383 = vmatpush1.msra.mxu0 0.0
    %384 = vmatprep.mubr.f32.mxu0 0.0
    %385 = vmatmul.mubr.f32.gmra.mrb[0].mxu0 %v90
    %v386 = vpop.f32.mrb[0].mxu0
    %v387 = vadd.f32 0.0, %v386
    %v388 = vpop.f32.mrb[0].mxu0
    %389 = vmatprep.mubr.f32.mxu0 0.0
    %390 = vmatmul.mubr.f32.gmra.mrb[0].mxu0 %v93
    %v391 = vpop.f32.mrb[0].mxu0
    %v392 = vadd.f32 0.0, %v391
    %v393 = vpop.f32.mrb[0].mxu0
    %394 = vdwg.mxu0
    %v395 = vld [vmem:[%s5] sm:$0xff]
    %v396 = vld [vmem:[%s5 + $0x8] sm:$0xff]
    %v397 = vld [vmem:[%s5 + $0x10] sm:$0xff]
    %v398 = vld [vmem:[%s5 + $0x18] sm:$0xff]
    %401 = vrot.lane.b32.xlu0 %v162, 120
    %v402 = vpop.permute.xlu0 %401
    %403 = vrot.lane.b32.xlu0 %v167, 120
    %v404 = vpop.permute.xlu0 %403
    %vm405 = vcmask 64512
    %v406 = vsel %vm405, %v162, 0
    %v408 = vsel %vm405, %v167, 0
    %v410 = vsel %vm405, %v402, 0
    %v412 = vsel %vm405, %v404, 0
    %414 = vmatprep.subr.mxu0 0.0
    %415 = vmatpush1.xpose.msra.mxu0 %v410
    %416 = vmatprep.subr.mxu0 0.0
    %417 = vmatpush1.xpose.msra.mxu0 %v412
    %418 = vmatprep.subr.mxu0 0.0
    %419 = vmatpush1.xpose.msra.mxu0 0.0
    %420 = vmatprep.subr.mxu0 0.0
    %421 = vmatpush1.xpose.msra.mxu0 0.0
    %422 = vmatprep.subr.mxu0 0.0
    %423 = vmatpush1.xpose.msra.mxu0 0.0
    %424 = vmatprep.subr.mxu0 0.0
    %425 = vmatpush1.xpose.msra.mxu0 0.0
    %426 = vmatprep.subr.mxu0 0.0
    %427 = vmatpush1.xpose.msra.mxu0 0.0
    %428 = vmatprep.subr.mxu0 0.0
    %429 = vmatpush1.xpose.msra.mxu0 0.0
    %430 = vmatprep.subr.mxu0 0.0
    %431 = vmatpush1.xpose.msra.mxu0 0.0
    %432 = vmatprep.subr.mxu0 0.0
    %433 = vmatpush1.xpose.msra.mxu0 0.0
    %434 = vmatprep.subr.mxu0 0.0
    %435 = vmatpush1.xpose.msra.mxu0 0.0
    %436 = vmatprep.subr.mxu0 0.0
    %437 = vmatpush1.xpose.msra.mxu0 0.0
    %438 = vmatprep.subr.mxu0 0.0
    %439 = vmatpush1.xpose.msra.mxu0 0.0
    %440 = vmatprep.subr.mxu0 0.0
    %441 = vmatpush1.xpose.msra.mxu0 0.0
    %442 = vmatprep.subr.mxu0 0.0
    %443 = vmatpush1.xpose.msra.mxu0 0.0
    %444 = vmatprep.subr.mxu0 0.0
    %445 = vmatpush1.xpose.msra.mxu0 0.0
    %446 = vmatprep.subr.mxu0 0.0
    %447 = vmatpush1.xpose.msra.mxu0 0.0
    %448 = vmatprep.subr.mxu0 0.0
    %449 = vmatpush1.xpose.msra.mxu0 0.0
    %450 = vmatprep.subr.mxu0 0.0
    %451 = vmatpush1.xpose.msra.mxu0 0.0
    %452 = vmatprep.subr.mxu0 0.0
    %453 = vmatpush1.xpose.msra.mxu0 0.0
    %454 = vmatprep.subr.mxu0 0.0
    %455 = vmatpush1.xpose.msra.mxu0 0.0
    %456 = vmatprep.subr.mxu0 0.0
    %457 = vmatpush1.xpose.msra.mxu0 0.0
    %458 = vmatprep.subr.mxu0 0.0
    %459 = vmatpush1.xpose.msra.mxu0 0.0
    %460 = vmatprep.subr.mxu0 0.0
    %461 = vmatpush1.xpose.msra.mxu0 0.0
    %462 = vmatprep.subr.mxu0 0.0
    %463 = vmatpush1.xpose.msra.mxu0 0.0
    %464 = vmatprep.subr.mxu0 0.0
    %465 = vmatpush1.xpose.msra.mxu0 0.0
    %466 = vmatprep.subr.mxu0 0.0
    %467 = vmatpush1.xpose.msra.mxu0 0.0
    %468 = vmatprep.subr.mxu0 0.0
    %469 = vmatpush1.xpose.msra.mxu0 0.0
    %470 = vmatprep.subr.mxu0 0.0
    %471 = vmatpush1.xpose.msra.mxu0 0.0
    %472 = vmatprep.subr.mxu0 0.0
    %473 = vmatpush1.xpose.msra.mxu0 0.0
    %474 = vmatprep.subr.mxu0 0.0
    %475 = vmatpush1.xpose.msra.mxu0 0.0
    %476 = vmatprep.subr.mxu0 0.0
    %477 = vmatpush1.xpose.msra.mxu0 0.0
    %478 = vmatprep.mubr.f32.mxu0 0.0
    %479 = vmatmul.mubr.f32.gmra.mrb[0].mxu0 %v406
    %v480 = vpop.f32.mrb[0].mxu0
    %v481 = vadd.f32 0.0, %v480
    %v482 = vpop.f32.mrb[0].mxu0
    %483 = vmatprep.mubr.f32.mxu0 0.0
    %484 = vmatmul.mubr.f32.gmra.mrb[0].mxu0 %v408
    %v485 = vpop.f32.mrb[0].mxu0
    %v486 = vadd.f32 0.0, %v485
    %v487 = vpop.f32.mrb[0].mxu0
    %488 = vdwg.mxu0
    %491 = vrot.lane.b32.xlu0 %v237, 120
    %v492 = vpop.permute.xlu0 %491
    %493 = vrot.lane.b32.xlu0 %v242, 120
    %v494 = vpop.permute.xlu0 %493
    %v495 = vsel %vm405, %v237, 0
    %v497 = vsel %vm405, %v242, 0
    %v499 = vsel %vm405, %v492, 0
    %v501 = vsel %vm405, %v494, 0
    %503 = vmatprep.subr.mxu0 0.0
    %504 = vmatpush1.xpose.msra.mxu0 %v499
    %505 = vmatprep.subr.mxu0 0.0
    %506 = vmatpush1.xpose.msra.mxu0 %v501
    %507 = vmatprep.subr.mxu0 0.0
    %508 = vmatpush1.xpose.msra.mxu0 0.0
    %509 = vmatprep.subr.mxu0 0.0
    %510 = vmatpush1.xpose.msra.mxu0 0.0
    %511 = vmatprep.subr.mxu0 0.0
    %512 = vmatpush1.xpose.msra.mxu0 0.0
    %513 = vmatprep.subr.mxu0 0.0
    %514 = vmatpush1.xpose.msra.mxu0 0.0
    %515 = vmatprep.subr.mxu0 0.0
    %516 = vmatpush1.xpose.msra.mxu0 0.0
    %517 = vmatprep.subr.mxu0 0.0
    %518 = vmatpush1.xpose.msra.mxu0 0.0
    %519 = vmatprep.subr.mxu0 0.0
    %520 = vmatpush1.xpose.msra.mxu0 0.0
    %521 = vmatprep.subr.mxu0 0.0
    %522 = vmatpush1.xpose.msra.mxu0 0.0
    %523 = vmatprep.subr.mxu0 0.0
    %524 = vmatpush1.xpose.msra.mxu0 0.0
    %525 = vmatprep.subr.mxu0 0.0
    %526 = vmatpush1.xpose.msra.mxu0 0.0
    %527 = vmatprep.subr.mxu0 0.0
    %528 = vmatpush1.xpose.msra.mxu0 0.0
    %529 = vmatprep.subr.mxu0 0.0
    %530 = vmatpush1.xpose.msra.mxu0 0.0
    %531 = vmatprep.subr.mxu0 0.0
    %532 = vmatpush1.xpose.msra.mxu0 0.0
    %533 = vmatprep.subr.mxu0 0.0
    %534 = vmatpush1.xpose.msra.mxu0 0.0
    %535 = vmatprep.subr.mxu0 0.0
    %536 = vmatpush1.xpose.msra.mxu0 0.0
    %537 = vmatprep.subr.mxu0 0.0
    %538 = vmatpush1.xpose.msra.mxu0 0.0
    %539 = vmatprep.subr.mxu0 0.0
    %540 = vmatpush1.xpose.msra.mxu0 0.0
    %541 = vmatprep.subr.mxu0 0.0
    %542 = vmatpush1.xpose.msra.mxu0 0.0
    %543 = vmatprep.subr.mxu0 0.0
    %544 = vmatpush1.xpose.msra.mxu0 0.0
    %545 = vmatprep.subr.mxu0 0.0
    %546 = vmatpush1.xpose.msra.mxu0 0.0
    %547 = vmatprep.subr.mxu0 0.0
    %548 = vmatpush1.xpose.msra.mxu0 0.0
    %549 = vmatprep.subr.mxu0 0.0
    %550 = vmatpush1.xpose.msra.mxu0 0.0
    %551 = vmatprep.subr.mxu0 0.0
    %552 = vmatpush1.xpose.msra.mxu0 0.0
    %553 = vmatprep.subr.mxu0 0.0
    %554 = vmatpush1.xpose.msra.mxu0 0.0
    %555 = vmatprep.subr.mxu0 0.0
    %556 = vmatpush1.xpose.msra.mxu0 0.0
    %557 = vmatprep.subr.mxu0 0.0
    %558 = vmatpush1.xpose.msra.mxu0 0.0
    %559 = vmatprep.subr.mxu0 0.0
    %560 = vmatpush1.xpose.msra.mxu0 0.0
    %561 = vmatprep.subr.mxu0 0.0
    %562 = vmatpush1.xpose.msra.mxu0 0.0
    %563 = vmatprep.subr.mxu0 0.0
    %564 = vmatpush1.xpose.msra.mxu0 0.0
    %565 = vmatprep.subr.mxu0 0.0
    %566 = vmatpush1.xpose.msra.mxu0 0.0
    %567 = vmatprep.mubr.f32.mxu0 0.0
    %568 = vmatmul.mubr.f32.gmra.mrb[0].mxu0 %v495
    %v569 = vpop.f32.mrb[0].mxu0
    %v570 = vadd.f32 0.0, %v569
    %v571 = vpop.f32.mrb[0].mxu0
    %572 = vmatprep.mubr.f32.mxu0 0.0
    %573 = vmatmul.mubr.f32.gmra.mrb[0].mxu0 %v497
    %v574 = vpop.f32.mrb[0].mxu0
    %v575 = vadd.f32 0.0, %v574
    %v576 = vpop.f32.mrb[0].mxu0
    %577 = vdwg.mxu0
    %580 = vrot.lane.b32.xlu0 %v312, 120
    %v581 = vpop.permute.xlu0 %580
    %582 = vrot.lane.b32.xlu0 %v317, 120
    %v583 = vpop.permute.xlu0 %582
    %v584 = vsel %vm405, %v312, 0
    %v586 = vsel %vm405, %v317, 0
    %v588 = vsel %vm405, %v581, 0
    %v590 = vsel %vm405, %v583, 0
    %592 = vmatprep.subr.mxu0 0.0
    %593 = vmatpush1.xpose.msra.mxu0 %v588
    %594 = vmatprep.subr.mxu0 0.0
    %595 = vmatpush1.xpose.msra.mxu0 %v590
    %596 = vmatprep.subr.mxu0 0.0
    %597 = vmatpush1.xpose.msra.mxu0 0.0
    %598 = vmatprep.subr.mxu0 0.0
    %599 = vmatpush1.xpose.msra.mxu0 0.0
    %600 = vmatprep.subr.mxu0 0.0
    %601 = vmatpush1.xpose.msra.mxu0 0.0
    %602 = vmatprep.subr.mxu0 0.0
    %603 = vmatpush1.xpose.msra.mxu0 0.0
    %604 = vmatprep.subr.mxu0 0.0
    %605 = vmatpush1.xpose.msra.mxu0 0.0
    %606 = vmatprep.subr.mxu0 0.0
    %607 = vmatpush1.xpose.msra.mxu0 0.0
    %608 = vmatprep.subr.mxu0 0.0
    %609 = vmatpush1.xpose.msra.mxu0 0.0
    %610 = vmatprep.subr.mxu0 0.0
    %611 = vmatpush1.xpose.msra.mxu0 0.0
    %612 = vmatprep.subr.mxu0 0.0
    %613 = vmatpush1.xpose.msra.mxu0 0.0
    %614 = vmatprep.subr.mxu0 0.0
    %615 = vmatpush1.xpose.msra.mxu0 0.0
    %616 = vmatprep.subr.mxu0 0.0
    %617 = vmatpush1.xpose.msra.mxu0 0.0
    %618 = vmatprep.subr.mxu0 0.0
    %619 = vmatpush1.xpose.msra.mxu0 0.0
    %620 = vmatprep.subr.mxu0 0.0
    %621 = vmatpush1.xpose.msra.mxu0 0.0
    %622 = vmatprep.subr.mxu0 0.0
    %623 = vmatpush1.xpose.msra.mxu0 0.0
    %624 = vmatprep.subr.mxu0 0.0
    %625 = vmatpush1.xpose.msra.mxu0 0.0
    %626 = vmatprep.subr.mxu0 0.0
    %627 = vmatpush1.xpose.msra.mxu0 0.0
    %628 = vmatprep.subr.mxu0 0.0
    %629 = vmatpush1.xpose.msra.mxu0 0.0
    %630 = vmatprep.subr.mxu0 0.0
    %631 = vmatpush1.xpose.msra.mxu0 0.0
    %632 = vmatprep.subr.mxu0 0.0
    %633 = vmatpush1.xpose.msra.mxu0 0.0
    %634 = vmatprep.subr.mxu0 0.0
    %635 = vmatpush1.xpose.msra.mxu0 0.0
    %636 = vmatprep.subr.mxu0 0.0
    %637 = vmatpush1.xpose.msra.mxu0 0.0
    %638 = vmatprep.subr.mxu0 0.0
    %639 = vmatpush1.xpose.msra.mxu0 0.0
    %640 = vmatprep.subr.mxu0 0.0
    %641 = vmatpush1.xpose.msra.mxu0 0.0
    %642 = vmatprep.subr.mxu0 0.0
    %643 = vmatpush1.xpose.msra.mxu0 0.0
    %644 = vmatprep.subr.mxu0 0.0
    %645 = vmatpush1.xpose.msra.mxu0 0.0
    %646 = vmatprep.subr.mxu0 0.0
    %647 = vmatpush1.xpose.msra.mxu0 0.0
    %648 = vmatprep.subr.mxu0 0.0
    %649 = vmatpush1.xpose.msra.mxu0 0.0
    %650 = vmatprep.subr.mxu0 0.0
    %651 = vmatpush1.xpose.msra.mxu0 0.0
    %652 = vmatprep.subr.mxu0 0.0
    %653 = vmatpush1.xpose.msra.mxu0 0.0
    %654 = vmatprep.subr.mxu0 0.0
    %655 = vmatpush1.xpose.msra.mxu0 0.0
    %656 = vmatprep.mubr.f32.mxu0 0.0
    %657 = vmatmul.mubr.f32.gmra.mrb[0].mxu0 %v584
    %v658 = vpop.f32.mrb[0].mxu0
    %v659 = vadd.f32 0.0, %v658
    %v660 = vpop.f32.mrb[0].mxu0
    %661 = vmatprep.mubr.f32.mxu0 0.0
    %662 = vmatmul.mubr.f32.gmra.mrb[0].mxu0 %v586
    %v663 = vpop.f32.mrb[0].mxu0
    %v664 = vadd.f32 0.0, %v663
    %v665 = vpop.f32.mrb[0].mxu0
    %666 = vdwg.mxu0
    %669 = vrot.lane.b32.xlu0 %v387, 120
    %v670 = vpop.permute.xlu0 %669
    %671 = vrot.lane.b32.xlu0 %v392, 120
    %v672 = vpop.permute.xlu0 %671
    %v673 = vsel %vm405, %v387, 0
    %v675 = vsel %vm405, %v392, 0
    %v677 = vsel %vm405, %v670, 0
    %v679 = vsel %vm405, %v672, 0
    %681 = vmatprep.subr.mxu0 0.0
    %682 = vmatpush1.xpose.msra.mxu0 %v677
    %683 = vmatprep.subr.mxu0 0.0
    %684 = vmatpush1.xpose.msra.mxu0 %v679
    %685 = vmatprep.subr.mxu0 0.0
    %686 = vmatpush1.xpose.msra.mxu0 0.0
    %687 = vmatprep.subr.mxu0 0.0
    %688 = vmatpush1.xpose.msra.mxu0 0.0
    %689 = vmatprep.subr.mxu0 0.0
    %690 = vmatpush1.xpose.msra.mxu0 0.0
    %691 = vmatprep.subr.mxu0 0.0
    %692 = vmatpush1.xpose.msra.mxu0 0.0
    %693 = vmatprep.subr.mxu0 0.0
    %694 = vmatpush1.xpose.msra.mxu0 0.0
    %695 = vmatprep.subr.mxu0 0.0
    %696 = vmatpush1.xpose.msra.mxu0 0.0
    %697 = vmatprep.subr.mxu0 0.0
    %698 = vmatpush1.xpose.msra.mxu0 0.0
    %699 = vmatprep.subr.mxu0 0.0
    %700 = vmatpush1.xpose.msra.mxu0 0.0
    %701 = vmatprep.subr.mxu0 0.0
    %702 = vmatpush1.xpose.msra.mxu0 0.0
    %703 = vmatprep.subr.mxu0 0.0
    %704 = vmatpush1.xpose.msra.mxu0 0.0
    %705 = vmatprep.subr.mxu0 0.0
    %706 = vmatpush1.xpose.msra.mxu0 0.0
    %707 = vmatprep.subr.mxu0 0.0
    %708 = vmatpush1.xpose.msra.mxu0 0.0
    %709 = vmatprep.subr.mxu0 0.0
    %710 = vmatpush1.xpose.msra.mxu0 0.0
    %711 = vmatprep.subr.mxu0 0.0
    %712 = vmatpush1.xpose.msra.mxu0 0.0
    %713 = vmatprep.subr.mxu0 0.0
    %714 = vmatpush1.xpose.msra.mxu0 0.0
    %715 = vmatprep.subr.mxu0 0.0
    %716 = vmatpush1.xpose.msra.mxu0 0.0
    %717 = vmatprep.subr.mxu0 0.0
    %718 = vmatpush1.xpose.msra.mxu0 0.0
    %719 = vmatprep.subr.mxu0 0.0
    %720 = vmatpush1.xpose.msra.mxu0 0.0
    %721 = vmatprep.subr.mxu0 0.0
    %722 = vmatpush1.xpose.msra.mxu0 0.0
    %723 = vmatprep.subr.mxu0 0.0
    %724 = vmatpush1.xpose.msra.mxu0 0.0
    %725 = vmatprep.subr.mxu0 0.0
    %726 = vmatpush1.xpose.msra.mxu0 0.0
    %727 = vmatprep.subr.mxu0 0.0
    %728 = vmatpush1.xpose.msra.mxu0 0.0
    %729 = vmatprep.subr.mxu0 0.0
    %730 = vmatpush1.xpose.msra.mxu0 0.0
    %731 = vmatprep.subr.mxu0 0.0
    %732 = vmatpush1.xpose.msra.mxu0 0.0
    %733 = vmatprep.subr.mxu0 0.0
    %734 = vmatpush1.xpose.msra.mxu0 0.0
    %735 = vmatprep.subr.mxu0 0.0
    %736 = vmatpush1.xpose.msra.mxu0 0.0
    %737 = vmatprep.subr.mxu0 0.0
    %738 = vmatpush1.xpose.msra.mxu0 0.0
    %739 = vmatprep.subr.mxu0 0.0
    %740 = vmatpush1.xpose.msra.mxu0 0.0
    %741 = vmatprep.subr.mxu0 0.0
    %742 = vmatpush1.xpose.msra.mxu0 0.0
    %743 = vmatprep.subr.mxu0 0.0
    %744 = vmatpush1.xpose.msra.mxu0 0.0
    %745 = vmatprep.mubr.f32.mxu0 0.0
    %746 = vmatmul.mubr.f32.gmra.mrb[0].mxu0 %v673
    %v747 = vpop.f32.mrb[0].mxu0
    %v748 = vadd.f32 0.0, %v747
    %v749 = vpop.f32.mrb[0].mxu0
    %750 = vmatprep.mubr.f32.mxu0 0.0
    %751 = vmatmul.mubr.f32.gmra.mrb[0].mxu0 %v675
    %v752 = vpop.f32.mrb[0].mxu0
    %v753 = vadd.f32 0.0, %v752
    %v754 = vpop.f32.mrb[0].mxu0
    %755 = vdwg.mxu0
    %v756 = vmul.f32 %v481, 0.35355338
    %v757 = vmul.f32 %v486, 0.35355338
    %v758 = vmul.f32 %v570, 0.35355338
    %v759 = vmul.f32 %v575, 0.35355338
    %v760 = vmul.f32 %v659, 0.35355338
    %v761 = vmul.f32 %v664, 0.35355338
    %v762 = vmul.f32 %v748, 0.35355338
    %v763 = vmul.f32 %v753, 0.35355338
    %vm764 = vcmp.gt.f32.partialorder %v68, 0.5
    %vm765 = vcmp.gt.f32.partialorder %v69, 0.5
    %v766 = vsel %vm764, 1, 0
    %v767 = vsel %vm765, 1, 0
    %vm768 = vcmp.eq.s32.totalorder %v766, 1
    %vm769 = vcmp.eq.s32.totalorder %v767, 1
    %v770 = vsel %vm768, %v756, -1000000.0
    %v771 = vsel %vm769, %v757, -1000000.0
    %v772 = vsel %vm768, %v758, -1000000.0
    %v773 = vsel %vm769, %v759, -1000000.0
    %v774 = vsel %vm768, %v760, -1000000.0
    %v775 = vsel %vm769, %v761, -1000000.0
    %v776 = vsel %vm768, %v762, -1000000.0
    %v777 = vsel %vm769, %v763, -1000000.0
    %vm778 = vcmask 130048
    %v779 = vsel %vm778, %v770, -inf
    %780 = vmax.xlane.f32.xlu0 %v779
    %v781 = vpop.xlane.xlu0 %780
    %v782 = vsel %vm778, %v771, -inf
    %783 = vmax.xlane.f32.xlu0 %v782
    %v784 = vpop.xlane.xlu0 %783
    %v785 = vsel %vm778, %v772, -inf
    %786 = vmax.xlane.f32.xlu0 %v785
    %v787 = vpop.xlane.xlu0 %786
    %v788 = vsel %vm778, %v773, -inf
    %789 = vmax.xlane.f32.xlu0 %v788
    %v790 = vpop.xlane.xlu0 %789
    %v791 = vsel %vm778, %v774, -inf
    %792 = vmax.xlane.f32.xlu0 %v791
    %v793 = vpop.xlane.xlu0 %792
    %v794 = vsel %vm778, %v775, -inf
    %795 = vmax.xlane.f32.xlu0 %v794
    %v796 = vpop.xlane.xlu0 %795
    %v797 = vsel %vm778, %v776, -inf
    %798 = vmax.xlane.f32.xlu0 %v797
    %v799 = vpop.xlane.xlu0 %798
    %v800 = vsel %vm778, %v777, -inf
    %801 = vmax.xlane.f32.xlu0 %v800
    %v802 = vpop.xlane.xlu0 %801
    %v803 = vsub.f32 %v770, %v781
    %v804 = vsub.f32 %v771, %v784
    %v805 = vsub.f32 %v772, %v787
    %v806 = vsub.f32 %v773, %v790
    %v807 = vsub.f32 %v774, %v793
    %v808 = vsub.f32 %v775, %v796
    %v809 = vsub.f32 %v776, %v799
    %v810 = vsub.f32 %v777, %v802
    %v811 = vmul.f32 %v803, 1.442695
    %v812 = vpow.pop %v811
    %v813 = vmul.f32 %v804, 1.442695
    %v814 = vpow.pop %v813
    %v815 = vmul.f32 %v805, 1.442695
    %v816 = vpow.pop %v815
    %v817 = vmul.f32 %v806, 1.442695
    %v818 = vpow.pop %v817
    %v819 = vmul.f32 %v807, 1.442695
    %v820 = vpow.pop %v819
    %v821 = vmul.f32 %v808, 1.442695
    %v822 = vpow.pop %v821
    %v823 = vmul.f32 %v809, 1.442695
    %v824 = vpow.pop %v823
    %v825 = vmul.f32 %v810, 1.442695
    %v826 = vpow.pop %v825
    %v827 = vsel %vm778, %v812, 0.0
    %828 = vadd.xlane.f32.xlu0 %v827
    %v829 = vpop.xlane.xlu0 %828
    %v830 = vsel %vm778, %v814, 0.0
    %831 = vadd.xlane.f32.xlu0 %v830
    %v832 = vpop.xlane.xlu0 %831
    %v833 = vsel %vm778, %v816, 0.0
    %834 = vadd.xlane.f32.xlu0 %v833
    %v835 = vpop.xlane.xlu0 %834
    %v836 = vsel %vm778, %v818, 0.0
    %837 = vadd.xlane.f32.xlu0 %v836
    %v838 = vpop.xlane.xlu0 %837
    %v839 = vsel %vm778, %v820, 0.0
    %840 = vadd.xlane.f32.xlu0 %v839
    %v841 = vpop.xlane.xlu0 %840
    %v842 = vsel %vm778, %v822, 0.0
    %843 = vadd.xlane.f32.xlu0 %v842
    %v844 = vpop.xlane.xlu0 %843
    %v845 = vsel %vm778, %v824, 0.0
    %846 = vadd.xlane.f32.xlu0 %v845
    %v847 = vpop.xlane.xlu0 %846
    %v848 = vsel %vm778, %v826, 0.0
    %849 = vadd.xlane.f32.xlu0 %v848
    %v850 = vpop.xlane.xlu0 %849
    %v851 = vrcp.pop %v829
    %v852 = vrcp.pop %v832
    %v853 = vrcp.pop %v835
    %v854 = vrcp.pop %v838
    %v855 = vrcp.pop %v841
    %v856 = vrcp.pop %v844
    %v857 = vrcp.pop %v847
    %v858 = vrcp.pop %v850
    %v859 = vmul.f32 %v812, %v851
    %v860 = vmul.f32 %v814, %v852
    %v861 = vmul.f32 %v816, %v853
    %v862 = vmul.f32 %v818, %v854
    %v863 = vmul.f32 %v820, %v855
    %v864 = vmul.f32 %v822, %v856
    %v865 = vmul.f32 %v824, %v857
    %v866 = vmul.f32 %v826, %v858
    %867 = vrot.lane.b32.xlu0 %v162, 112
    %v868 = vpop.permute.xlu0 %867
    %869 = vrot.lane.b32.xlu0 %v167, 112
    %v870 = vpop.permute.xlu0 %869
    %v874 = vsel %vm778, %v859, 0
    %v877 = vsel %vm778, %v860, 0
    %879 = vmatprep.subr.mxu0 0.0
    %880 = vmatpush1.msra.mxu0 %v868
    %881 = vmatprep.subr.mxu0 0.0
    %882 = vmatpush1.msra.mxu0 %v870
    %883 = vmatprep.subr.mxu0 0.0
    %884 = vmatpush1.msra.mxu0 0.0
    %885 = vmatprep.subr.mxu0 0.0
    %886 = vmatpush1.msra.mxu0 0.0
    %887 = vmatprep.subr.mxu0 0.0
    %888 = vmatpush1.msra.mxu0 0.0
    %889 = vmatprep.subr.mxu0 0.0
    %890 = vmatpush1.msra.mxu0 0.0
    %891 = vmatprep.subr.mxu0 0.0
    %892 = vmatpush1.msra.mxu0 0.0
    %893 = vmatprep.subr.mxu0 0.0
    %894 = vmatpush1.msra.mxu0 0.0
    %895 = vmatprep.subr.mxu0 0.0
    %896 = vmatpush1.msra.mxu0 0.0
    %897 = vmatprep.subr.mxu0 0.0
    %898 = vmatpush1.msra.mxu0 0.0
    %899 = vmatprep.subr.mxu0 0.0
    %900 = vmatpush1.msra.mxu0 0.0
    %901 = vmatprep.subr.mxu0 0.0
    %902 = vmatpush1.msra.mxu0 0.0
    %903 = vmatprep.subr.mxu0 0.0
    %904 = vmatpush1.msra.mxu0 0.0
    %905 = vmatprep.subr.mxu0 0.0
    %906 = vmatpush1.msra.mxu0 0.0
    %907 = vmatprep.subr.mxu0 0.0
    %908 = vmatpush1.msra.mxu0 0.0
    %909 = vmatprep.subr.mxu0 0.0
    %910 = vmatpush1.msra.mxu0 0.0
    %911 = vmatprep.subr.mxu0 0.0
    %912 = vmatpush1.msra.mxu0 0.0
    %913 = vmatprep.subr.mxu0 0.0
    %914 = vmatpush1.msra.mxu0 0.0
    %915 = vmatprep.subr.mxu0 0.0
    %916 = vmatpush1.msra.mxu0 0.0
    %917 = vmatprep.subr.mxu0 0.0
    %918 = vmatpush1.msra.mxu0 0.0
    %919 = vmatprep.subr.mxu0 0.0
    %920 = vmatpush1.msra.mxu0 0.0
    %921 = vmatprep.subr.mxu0 0.0
    %922 = vmatpush1.msra.mxu0 0.0
    %923 = vmatprep.subr.mxu0 0.0
    %924 = vmatpush1.msra.mxu0 0.0
    %925 = vmatprep.subr.mxu0 0.0
    %926 = vmatpush1.msra.mxu0 0.0
    %927 = vmatprep.subr.mxu0 0.0
    %928 = vmatpush1.msra.mxu0 0.0
    %929 = vmatprep.subr.mxu0 0.0
    %930 = vmatpush1.msra.mxu0 0.0
    %931 = vmatprep.subr.mxu0 0.0
    %932 = vmatpush1.msra.mxu0 0.0
    %933 = vmatprep.subr.mxu0 0.0
    %934 = vmatpush1.msra.mxu0 0.0
    %935 = vmatprep.subr.mxu0 0.0
    %936 = vmatpush1.msra.mxu0 0.0
    %937 = vmatprep.subr.mxu0 0.0
    %938 = vmatpush1.msra.mxu0 0.0
    %939 = vmatprep.subr.mxu0 0.0
    %940 = vmatpush1.msra.mxu0 0.0
    %941 = vmatprep.subr.mxu0 0.0
    %942 = vmatpush1.msra.mxu0 0.0
    %943 = vmatprep.mubr.f32.mxu0 0.0
    %944 = vmatmul.mubr.f32.gmra.mrb[0].mxu0 %v874
    %v945 = vpop.f32.mrb[0].mxu0
    %v946 = vadd.f32 0.0, %v945
    %v947 = vpop.f32.mrb[0].mxu0
    %948 = vmatprep.mubr.f32.mxu0 0.0
    %949 = vmatmul.mubr.f32.gmra.mrb[0].mxu0 %v877
    %v950 = vpop.f32.mrb[0].mxu0
    %v951 = vadd.f32 0.0, %v950
    %v952 = vpop.f32.mrb[0].mxu0
    %953 = vdwg.mxu0
    %954 = vrot.lane.b32.xlu0 %v237, 112
    %v955 = vpop.permute.xlu0 %954
    %956 = vrot.lane.b32.xlu0 %v242, 112
    %v957 = vpop.permute.xlu0 %956
    %v961 = vsel %vm778, %v861, 0
    %v964 = vsel %vm778, %v862, 0
    %966 = vmatprep.subr.mxu0 0.0
    %967 = vmatpush1.msra.mxu0 %v955
    %968 = vmatprep.subr.mxu0 0.0
    %969 = vmatpush1.msra.mxu0 %v957
    %970 = vmatprep.subr.mxu0 0.0
    %971 = vmatpush1.msra.mxu0 0.0
    %972 = vmatprep.subr.mxu0 0.0
    %973 = vmatpush1.msra.mxu0 0.0
    %974 = vmatprep.subr.mxu0 0.0
    %975 = vmatpush1.msra.mxu0 0.0
    %976 = vmatprep.subr.mxu0 0.0
    %977 = vmatpush1.msra.mxu0 0.0
    %978 = vmatprep.subr.mxu0 0.0
    %979 = vmatpush1.msra.mxu0 0.0
    %980 = vmatprep.subr.mxu0 0.0
    %981 = vmatpush1.msra.mxu0 0.0
    %982 = vmatprep.subr.mxu0 0.0
    %983 = vmatpush1.msra.mxu0 0.0
    %984 = vmatprep.subr.mxu0 0.0
    %985 = vmatpush1.msra.mxu0 0.0
    %986 = vmatprep.subr.mxu0 0.0
    %987 = vmatpush1.msra.mxu0 0.0
    %988 = vmatprep.subr.mxu0 0.0
    %989 = vmatpush1.msra.mxu0 0.0
    %990 = vmatprep.subr.mxu0 0.0
    %991 = vmatpush1.msra.mxu0 0.0
    %992 = vmatprep.subr.mxu0 0.0
    %993 = vmatpush1.msra.mxu0 0.0
    %994 = vmatprep.subr.mxu0 0.0
    %995 = vmatpush1.msra.mxu0 0.0
    %996 = vmatprep.subr.mxu0 0.0
    %997 = vmatpush1.msra.mxu0 0.0
    %998 = vmatprep.subr.mxu0 0.0
    %999 = vmatpush1.msra.mxu0 0.0
    %1000 = vmatprep.subr.mxu0 0.0
    %1001 = vmatpush1.msra.mxu0 0.0
    %1002 = vmatprep.subr.mxu0 0.0
    %1003 = vmatpush1.msra.mxu0 0.0
    %1004 = vmatprep.subr.mxu0 0.0
    %1005 = vmatpush1.msra.mxu0 0.0
    %1006 = vmatprep.subr.mxu0 0.0
    %1007 = vmatpush1.msra.mxu0 0.0
    %1008 = vmatprep.subr.mxu0 0.0
    %1009 = vmatpush1.msra.mxu0 0.0
    %1010 = vmatprep.subr.mxu0 0.0
    %1011 = vmatpush1.msra.mxu0 0.0
    %1012 = vmatprep.subr.mxu0 0.0
    %1013 = vmatpush1.msra.mxu0 0.0
    %1014 = vmatprep.subr.mxu0 0.0
    %1015 = vmatpush1.msra.mxu0 0.0
    %1016 = vmatprep.subr.mxu0 0.0
    %1017 = vmatpush1.msra.mxu0 0.0
    %1018 = vmatprep.subr.mxu0 0.0
    %1019 = vmatpush1.msra.mxu0 0.0
    %1020 = vmatprep.subr.mxu0 0.0
    %1021 = vmatpush1.msra.mxu0 0.0
    %1022 = vmatprep.subr.mxu0 0.0
    %1023 = vmatpush1.msra.mxu0 0.0
    %1024 = vmatprep.subr.mxu0 0.0
    %1025 = vmatpush1.msra.mxu0 0.0
    %1026 = vmatprep.subr.mxu0 0.0
    %1027 = vmatpush1.msra.mxu0 0.0
    %1028 = vmatprep.subr.mxu0 0.0
    %1029 = vmatpush1.msra.mxu0 0.0
    %1030 = vmatprep.mubr.f32.mxu0 0.0
    %1031 = vmatmul.mubr.f32.gmra.mrb[0].mxu0 %v961
    %v1032 = vpop.f32.mrb[0].mxu0
    %v1033 = vadd.f32 0.0, %v1032
    %v1034 = vpop.f32.mrb[0].mxu0
    %1035 = vmatprep.mubr.f32.mxu0 0.0
    %1036 = vmatmul.mubr.f32.gmra.mrb[0].mxu0 %v964
    %v1037 = vpop.f32.mrb[0].mxu0
    %v1038 = vadd.f32 0.0, %v1037
    %v1039 = vpop.f32.mrb[0].mxu0
    %1040 = vdwg.mxu0
    %1041 = vrot.lane.b32.xlu0 %v312, 112
    %v1042 = vpop.permute.xlu0 %1041
    %1043 = vrot.lane.b32.xlu0 %v317, 112
    %v1044 = vpop.permute.xlu0 %1043
    %v1048 = vsel %vm778, %v863, 0
    %v1051 = vsel %vm778, %v864, 0
    %1053 = vmatprep.subr.mxu0 0.0
    %1054 = vmatpush1.msra.mxu0 %v1042
    %1055 = vmatprep.subr.mxu0 0.0
    %1056 = vmatpush1.msra.mxu0 %v1044
    %1057 = vmatprep.subr.mxu0 0.0
    %1058 = vmatpush1.msra.mxu0 0.0
    %1059 = vmatprep.subr.mxu0 0.0
    %1060 = vmatpush1.msra.mxu0 0.0
    %1061 = vmatprep.subr.mxu0 0.0
    %1062 = vmatpush1.msra.mxu0 0.0
    %1063 = vmatprep.subr.mxu0 0.0
    %1064 = vmatpush1.msra.mxu0 0.0
    %1065 = vmatprep.subr.mxu0 0.0
    %1066 = vmatpush1.msra.mxu0 0.0
    %1067 = vmatprep.subr.mxu0 0.0
    %1068 = vmatpush1.msra.mxu0 0.0
    %1069 = vmatprep.subr.mxu0 0.0
    %1070 = vmatpush1.msra.mxu0 0.0
    %1071 = vmatprep.subr.mxu0 0.0
    %1072 = vmatpush1.msra.mxu0 0.0
    %1073 = vmatprep.subr.mxu0 0.0
    %1074 = vmatpush1.msra.mxu0 0.0
    %1075 = vmatprep.subr.mxu0 0.0
    %1076 = vmatpush1.msra.mxu0 0.0
    %1077 = vmatprep.subr.mxu0 0.0
    %1078 = vmatpush1.msra.mxu0 0.0
    %1079 = vmatprep.subr.mxu0 0.0
    %1080 = vmatpush1.msra.mxu0 0.0
    %1081 = vmatprep.subr.mxu0 0.0
    %1082 = vmatpush1.msra.mxu0 0.0
    %1083 = vmatprep.subr.mxu0 0.0
    %1084 = vmatpush1.msra.mxu0 0.0
    %1085 = vmatprep.subr.mxu0 0.0
    %1086 = vmatpush1.msra.mxu0 0.0
    %1087 = vmatprep.subr.mxu0 0.0
    %1088 = vmatpush1.msra.mxu0 0.0
    %1089 = vmatprep.subr.mxu0 0.0
    %1090 = vmatpush1.msra.mxu0 0.0
    %1091 = vmatprep.subr.mxu0 0.0
    %1092 = vmatpush1.msra.mxu0 0.0
    %1093 = vmatprep.subr.mxu0 0.0
    %1094 = vmatpush1.msra.mxu0 0.0
    %1095 = vmatprep.subr.mxu0 0.0
    %1096 = vmatpush1.msra.mxu0 0.0
    %1097 = vmatprep.subr.mxu0 0.0
    %1098 = vmatpush1.msra.mxu0 0.0
    %1099 = vmatprep.subr.mxu0 0.0
    %1100 = vmatpush1.msra.mxu0 0.0
    %1101 = vmatprep.subr.mxu0 0.0
    %1102 = vmatpush1.msra.mxu0 0.0
    %1103 = vmatprep.subr.mxu0 0.0
    %1104 = vmatpush1.msra.mxu0 0.0
    %1105 = vmatprep.subr.mxu0 0.0
    %1106 = vmatpush1.msra.mxu0 0.0
    %1107 = vmatprep.subr.mxu0 0.0
    %1108 = vmatpush1.msra.mxu0 0.0
    %1109 = vmatprep.subr.mxu0 0.0
    %1110 = vmatpush1.msra.mxu0 0.0
    %1111 = vmatprep.subr.mxu0 0.0
    %1112 = vmatpush1.msra.mxu0 0.0
    %1113 = vmatprep.subr.mxu0 0.0
    %1114 = vmatpush1.msra.mxu0 0.0
    %1115 = vmatprep.subr.mxu0 0.0
    %1116 = vmatpush1.msra.mxu0 0.0
    %1117 = vmatprep.mubr.f32.mxu0 0.0
    %1118 = vmatmul.mubr.f32.gmra.mrb[0].mxu0 %v1048
    %v1119 = vpop.f32.mrb[0].mxu0
    %v1120 = vadd.f32 0.0, %v1119
    %v1121 = vpop.f32.mrb[0].mxu0
    %1122 = vmatprep.mubr.f32.mxu0 0.0
    %1123 = vmatmul.mubr.f32.gmra.mrb[0].mxu0 %v1051
    %v1124 = vpop.f32.mrb[0].mxu0
    %v1125 = vadd.f32 0.0, %v1124
    %v1126 = vpop.f32.mrb[0].mxu0
    %1127 = vdwg.mxu0
    %1128 = vrot.lane.b32.xlu0 %v387, 112
    %v1129 = vpop.permute.xlu0 %1128
    %1130 = vrot.lane.b32.xlu0 %v392, 112
    %v1131 = vpop.permute.xlu0 %1130
    %v1135 = vsel %vm778, %v865, 0
    %v1138 = vsel %vm778, %v866, 0
    %1140 = vmatprep.subr.mxu0 0.0
    %1141 = vmatpush1.msra.mxu0 %v1129
    %1142 = vmatprep.subr.mxu0 0.0
    %1143 = vmatpush1.msra.mxu0 %v1131
    %1144 = vmatprep.subr.mxu0 0.0
    %1145 = vmatpush1.msra.mxu0 0.0
    %1146 = vmatprep.subr.mxu0 0.0
    %1147 = vmatpush1.msra.mxu0 0.0
    %1148 = vmatprep.subr.mxu0 0.0
    %1149 = vmatpush1.msra.mxu0 0.0
    %1150 = vmatprep.subr.mxu0 0.0
    %1151 = vmatpush1.msra.mxu0 0.0
    %1152 = vmatprep.subr.mxu0 0.0
    %1153 = vmatpush1.msra.mxu0 0.0
    %1154 = vmatprep.subr.mxu0 0.0
    %1155 = vmatpush1.msra.mxu0 0.0
    %1156 = vmatprep.subr.mxu0 0.0
    %1157 = vmatpush1.msra.mxu0 0.0
    %1158 = vmatprep.subr.mxu0 0.0
    %1159 = vmatpush1.msra.mxu0 0.0
    %1160 = vmatprep.subr.mxu0 0.0
    %1161 = vmatpush1.msra.mxu0 0.0
    %1162 = vmatprep.subr.mxu0 0.0
    %1163 = vmatpush1.msra.mxu0 0.0
    %1164 = vmatprep.subr.mxu0 0.0
    %1165 = vmatpush1.msra.mxu0 0.0
    %1166 = vmatprep.subr.mxu0 0.0
    %1167 = vmatpush1.msra.mxu0 0.0
    %1168 = vmatprep.subr.mxu0 0.0
    %1169 = vmatpush1.msra.mxu0 0.0
    %1170 = vmatprep.subr.mxu0 0.0
    %1171 = vmatpush1.msra.mxu0 0.0
    %1172 = vmatprep.subr.mxu0 0.0
    %1173 = vmatpush1.msra.mxu0 0.0
    %1174 = vmatprep.subr.mxu0 0.0
    %1175 = vmatpush1.msra.mxu0 0.0
    %1176 = vmatprep.subr.mxu0 0.0
    %1177 = vmatpush1.msra.mxu0 0.0
    %1178 = vmatprep.subr.mxu0 0.0
    %1179 = vmatpush1.msra.mxu0 0.0
    %1180 = vmatprep.subr.mxu0 0.0
    %1181 = vmatpush1.msra.mxu0 0.0
    %1182 = vmatprep.subr.mxu0 0.0
    %1183 = vmatpush1.msra.mxu0 0.0
    %1184 = vmatprep.subr.mxu0 0.0
    %1185 = vmatpush1.msra.mxu0 0.0
    %1186 = vmatprep.subr.mxu0 0.0
    %1187 = vmatpush1.msra.mxu0 0.0
    %1188 = vmatprep.subr.mxu0 0.0
    %1189 = vmatpush1.msra.mxu0 0.0
    %1190 = vmatprep.subr.mxu0 0.0
    %1191 = vmatpush1.msra.mxu0 0.0
    %1192 = vmatprep.subr.mxu0 0.0
    %1193 = vmatpush1.msra.mxu0 0.0
    %1194 = vmatprep.subr.mxu0 0.0
    %1195 = vmatpush1.msra.mxu0 0.0
    %1196 = vmatprep.subr.mxu0 0.0
    %1197 = vmatpush1.msra.mxu0 0.0
    %1198 = vmatprep.subr.mxu0 0.0
    %1199 = vmatpush1.msra.mxu0 0.0
    %1200 = vmatprep.subr.mxu0 0.0
    %1201 = vmatpush1.msra.mxu0 0.0
    %1202 = vmatprep.subr.mxu0 0.0
    %1203 = vmatpush1.msra.mxu0 0.0
    %1204 = vmatprep.mubr.f32.mxu0 0.0
    %1205 = vmatmul.mubr.f32.gmra.mrb[0].mxu0 %v1135
    %v1206 = vpop.f32.mrb[0].mxu0
    %v1207 = vadd.f32 0.0, %v1206
    %v1208 = vpop.f32.mrb[0].mxu0
    %1209 = vmatprep.mubr.f32.mxu0 0.0
    %1210 = vmatmul.mubr.f32.gmra.mrb[0].mxu0 %v1138
    %v1211 = vpop.f32.mrb[0].mxu0
    %v1212 = vadd.f32 0.0, %v1211
    %v1213 = vpop.f32.mrb[0].mxu0
    %1214 = vdwg.mxu0
    %v1216 = vsel %vm405, %v946, 0
    %v1219 = vsel %vm405, %v951, 0
    %1221 = vmatprep.subr.mxu0 0.0
    %1222 = vmatpush1.msra.mxu0 %v395
    %1223 = vmatprep.subr.mxu0 0.0
    %1224 = vmatpush1.msra.mxu0 0.0
    %1225 = vmatprep.subr.mxu0 0.0
    %1226 = vmatpush1.msra.mxu0 0.0
    %1227 = vmatprep.subr.mxu0 0.0
    %1228 = vmatpush1.msra.mxu0 0.0
    %1229 = vmatprep.subr.mxu0 0.0
    %1230 = vmatpush1.msra.mxu0 0.0
    %1231 = vmatprep.subr.mxu0 0.0
    %1232 = vmatpush1.msra.mxu0 0.0
    %1233 = vmatprep.subr.mxu0 0.0
    %1234 = vmatpush1.msra.mxu0 0.0
    %1235 = vmatprep.subr.mxu0 0.0
    %1236 = vmatpush1.msra.mxu0 0.0
    %1237 = vmatprep.subr.mxu0 0.0
    %1238 = vmatpush1.msra.mxu0 0.0
    %1239 = vmatprep.subr.mxu0 0.0
    %1240 = vmatpush1.msra.mxu0 0.0
    %1241 = vmatprep.subr.mxu0 0.0
    %1242 = vmatpush1.msra.mxu0 0.0
    %1243 = vmatprep.subr.mxu0 0.0
    %1244 = vmatpush1.msra.mxu0 0.0
    %1245 = vmatprep.subr.mxu0 0.0
    %1246 = vmatpush1.msra.mxu0 0.0
    %1247 = vmatprep.subr.mxu0 0.0
    %1248 = vmatpush1.msra.mxu0 0.0
    %1249 = vmatprep.subr.mxu0 0.0
    %1250 = vmatpush1.msra.mxu0 0.0
    %1251 = vmatprep.subr.mxu0 0.0
    %1252 = vmatpush1.msra.mxu0 0.0
    %1253 = vmatprep.subr.mxu0 0.0
    %1254 = vmatpush1.msra.mxu0 0.0
    %1255 = vmatprep.subr.mxu0 0.0
    %1256 = vmatpush1.msra.mxu0 0.0
    %1257 = vmatprep.subr.mxu0 0.0
    %1258 = vmatpush1.msra.mxu0 0.0
    %1259 = vmatprep.subr.mxu0 0.0
    %1260 = vmatpush1.msra.mxu0 0.0
    %1261 = vmatprep.subr.mxu0 0.0
    %1262 = vmatpush1.msra.mxu0 0.0
    %1263 = vmatprep.subr.mxu0 0.0
    %1264 = vmatpush1.msra.mxu0 0.0
    %1265 = vmatprep.subr.mxu0 0.0
    %1266 = vmatpush1.msra.mxu0 0.0
    %1267 = vmatprep.subr.mxu0 0.0
    %1268 = vmatpush1.msra.mxu0 0.0
    %1269 = vmatprep.subr.mxu0 0.0
    %1270 = vmatpush1.msra.mxu0 0.0
    %1271 = vmatprep.subr.mxu0 0.0
    %1272 = vmatpush1.msra.mxu0 0.0
    %1273 = vmatprep.subr.mxu0 0.0
    %1274 = vmatpush1.msra.mxu0 0.0
    %1275 = vmatprep.subr.mxu0 0.0
    %1276 = vmatpush1.msra.mxu0 0.0
    %1277 = vmatprep.subr.mxu0 0.0
    %1278 = vmatpush1.msra.mxu0 0.0
    %1279 = vmatprep.subr.mxu0 0.0
    %1280 = vmatpush1.msra.mxu0 0.0
    %1281 = vmatprep.subr.mxu0 0.0
    %1282 = vmatpush1.msra.mxu0 0.0
    %1283 = vmatprep.subr.mxu0 0.0
    %1284 = vmatpush1.msra.mxu0 0.0
    %1285 = vmatprep.mubr.f32.mxu0 0.0
    %1286 = vmatmul.mubr.f32.gmra.mrb[0].mxu0 %v1216
    %v1287 = vpop.f32.mrb[0].mxu0
    %v1288 = vadd.f32 0.0, %v1287
    %v1289 = vpop.f32.mrb[0].mxu0
    %1290 = vmatprep.mubr.f32.mxu0 0.0
    %1291 = vmatmul.mubr.f32.gmra.mrb[0].mxu0 %v1219
    %v1292 = vpop.f32.mrb[0].mxu0
    %v1293 = vadd.f32 0.0, %v1292
    %v1294 = vpop.f32.mrb[0].mxu0
    %1295 = vdwg.mxu0
    %v1297 = vsel %vm405, %v1033, 0
    %v1300 = vsel %vm405, %v1038, 0
    %1302 = vmatprep.subr.mxu0 0.0
    %1303 = vmatpush1.msra.mxu0 %v396
    %1304 = vmatprep.subr.mxu0 0.0
    %1305 = vmatpush1.msra.mxu0 0.0
    %1306 = vmatprep.subr.mxu0 0.0
    %1307 = vmatpush1.msra.mxu0 0.0
    %1308 = vmatprep.subr.mxu0 0.0
    %1309 = vmatpush1.msra.mxu0 0.0
    %1310 = vmatprep.subr.mxu0 0.0
    %1311 = vmatpush1.msra.mxu0 0.0
    %1312 = vmatprep.subr.mxu0 0.0
    %1313 = vmatpush1.msra.mxu0 0.0
    %1314 = vmatprep.subr.mxu0 0.0
    %1315 = vmatpush1.msra.mxu0 0.0
    %1316 = vmatprep.subr.mxu0 0.0
    %1317 = vmatpush1.msra.mxu0 0.0
    %1318 = vmatprep.subr.mxu0 0.0
    %1319 = vmatpush1.msra.mxu0 0.0
    %1320 = vmatprep.subr.mxu0 0.0
    %1321 = vmatpush1.msra.mxu0 0.0
    %1322 = vmatprep.subr.mxu0 0.0
    %1323 = vmatpush1.msra.mxu0 0.0
    %1324 = vmatprep.subr.mxu0 0.0
    %1325 = vmatpush1.msra.mxu0 0.0
    %1326 = vmatprep.subr.mxu0 0.0
    %1327 = vmatpush1.msra.mxu0 0.0
    %1328 = vmatprep.subr.mxu0 0.0
    %1329 = vmatpush1.msra.mxu0 0.0
    %1330 = vmatprep.subr.mxu0 0.0
    %1331 = vmatpush1.msra.mxu0 0.0
    %1332 = vmatprep.subr.mxu0 0.0
    %1333 = vmatpush1.msra.mxu0 0.0
    %1334 = vmatprep.subr.mxu0 0.0
    %1335 = vmatpush1.msra.mxu0 0.0
    %1336 = vmatprep.subr.mxu0 0.0
    %1337 = vmatpush1.msra.mxu0 0.0
    %1338 = vmatprep.subr.mxu0 0.0
    %1339 = vmatpush1.msra.mxu0 0.0
    %1340 = vmatprep.subr.mxu0 0.0
    %1341 = vmatpush1.msra.mxu0 0.0
    %1342 = vmatprep.subr.mxu0 0.0
    %1343 = vmatpush1.msra.mxu0 0.0
    %1344 = vmatprep.subr.mxu0 0.0
    %1345 = vmatpush1.msra.mxu0 0.0
    %1346 = vmatprep.subr.mxu0 0.0
    %1347 = vmatpush1.msra.mxu0 0.0
    %1348 = vmatprep.subr.mxu0 0.0
    %1349 = vmatpush1.msra.mxu0 0.0
    %1350 = vmatprep.subr.mxu0 0.0
    %1351 = vmatpush1.msra.mxu0 0.0
    %1352 = vmatprep.subr.mxu0 0.0
    %1353 = vmatpush1.msra.mxu0 0.0
    %1354 = vmatprep.subr.mxu0 0.0
    %1355 = vmatpush1.msra.mxu0 0.0
    %1356 = vmatprep.subr.mxu0 0.0
    %1357 = vmatpush1.msra.mxu0 0.0
    %1358 = vmatprep.subr.mxu0 0.0
    %1359 = vmatpush1.msra.mxu0 0.0
    %1360 = vmatprep.subr.mxu0 0.0
    %1361 = vmatpush1.msra.mxu0 0.0
    %1362 = vmatprep.subr.mxu0 0.0
    %1363 = vmatpush1.msra.mxu0 0.0
    %1364 = vmatprep.subr.mxu0 0.0
    %1365 = vmatpush1.msra.mxu0 0.0
    %1366 = vmatprep.mubr.f32.mxu0 0.0
    %1367 = vmatmul.mubr.f32.gmra.mrb[0].mxu0 %v1297
    %v1368 = vpop.f32.mrb[0].mxu0
    %v1369 = vadd.f32 0.0, %v1368
    %v1370 = vpop.f32.mrb[0].mxu0
    %1371 = vmatprep.mubr.f32.mxu0 0.0
    %1372 = vmatmul.mubr.f32.gmra.mrb[0].mxu0 %v1300
    %v1373 = vpop.f32.mrb[0].mxu0
    %v1374 = vadd.f32 0.0, %v1373
    %v1375 = vpop.f32.mrb[0].mxu0
    %1376 = vdwg.mxu0
    %v1378 = vsel %vm405, %v1120, 0
    %v1381 = vsel %vm405, %v1125, 0
    %1383 = vmatprep.subr.mxu0 0.0
    %1384 = vmatpush1.msra.mxu0 %v397
    %1385 = vmatprep.subr.mxu0 0.0
    %1386 = vmatpush1.msra.mxu0 0.0
    %1387 = vmatprep.subr.mxu0 0.0
    %1388 = vmatpush1.msra.mxu0 0.0
    %1389 = vmatprep.subr.mxu0 0.0
    %1390 = vmatpush1.msra.mxu0 0.0
    %1391 = vmatprep.subr.mxu0 0.0
    %1392 = vmatpush1.msra.mxu0 0.0
    %1393 = vmatprep.subr.mxu0 0.0
    %1394 = vmatpush1.msra.mxu0 0.0
    %1395 = vmatprep.subr.mxu0 0.0
    %1396 = vmatpush1.msra.mxu0 0.0
    %1397 = vmatprep.subr.mxu0 0.0
    %1398 = vmatpush1.msra.mxu0 0.0
    %1399 = vmatprep.subr.mxu0 0.0
    %1400 = vmatpush1.msra.mxu0 0.0
    %1401 = vmatprep.subr.mxu0 0.0
    %1402 = vmatpush1.msra.mxu0 0.0
    %1403 = vmatprep.subr.mxu0 0.0
    %1404 = vmatpush1.msra.mxu0 0.0
    %1405 = vmatprep.subr.mxu0 0.0
    %1406 = vmatpush1.msra.mxu0 0.0
    %1407 = vmatprep.subr.mxu0 0.0
    %1408 = vmatpush1.msra.mxu0 0.0
    %1409 = vmatprep.subr.mxu0 0.0
    %1410 = vmatpush1.msra.mxu0 0.0
    %1411 = vmatprep.subr.mxu0 0.0
    %1412 = vmatpush1.msra.mxu0 0.0
    %1413 = vmatprep.subr.mxu0 0.0
    %1414 = vmatpush1.msra.mxu0 0.0
    %1415 = vmatprep.subr.mxu0 0.0
    %1416 = vmatpush1.msra.mxu0 0.0
    %1417 = vmatprep.subr.mxu0 0.0
    %1418 = vmatpush1.msra.mxu0 0.0
    %1419 = vmatprep.subr.mxu0 0.0
    %1420 = vmatpush1.msra.mxu0 0.0
    %1421 = vmatprep.subr.mxu0 0.0
    %1422 = vmatpush1.msra.mxu0 0.0
    %1423 = vmatprep.subr.mxu0 0.0
    %1424 = vmatpush1.msra.mxu0 0.0
    %1425 = vmatprep.subr.mxu0 0.0
    %1426 = vmatpush1.msra.mxu0 0.0
    %1427 = vmatprep.subr.mxu0 0.0
    %1428 = vmatpush1.msra.mxu0 0.0
    %1429 = vmatprep.subr.mxu0 0.0
    %1430 = vmatpush1.msra.mxu0 0.0
    %1431 = vmatprep.subr.mxu0 0.0
    %1432 = vmatpush1.msra.mxu0 0.0
    %1433 = vmatprep.subr.mxu0 0.0
    %1434 = vmatpush1.msra.mxu0 0.0
    %1435 = vmatprep.subr.mxu0 0.0
    %1436 = vmatpush1.msra.mxu0 0.0
    %1437 = vmatprep.subr.mxu0 0.0
    %1438 = vmatpush1.msra.mxu0 0.0
    %1439 = vmatprep.subr.mxu0 0.0
    %1440 = vmatpush1.msra.mxu0 0.0
    %1441 = vmatprep.subr.mxu0 0.0
    %1442 = vmatpush1.msra.mxu0 0.0
    %1443 = vmatprep.subr.mxu0 0.0
    %1444 = vmatpush1.msra.mxu0 0.0
    %1445 = vmatprep.subr.mxu0 0.0
    %1446 = vmatpush1.msra.mxu0 0.0
    %1447 = vmatprep.mubr.f32.mxu0 0.0
    %1448 = vmatmul.mubr.f32.gmra.mrb[0].mxu0 %v1378
    %v1449 = vpop.f32.mrb[0].mxu0
    %v1450 = vadd.f32 0.0, %v1449
    %v1451 = vpop.f32.mrb[0].mxu0
    %1452 = vmatprep.mubr.f32.mxu0 0.0
    %1453 = vmatmul.mubr.f32.gmra.mrb[0].mxu0 %v1381
    %v1454 = vpop.f32.mrb[0].mxu0
    %v1455 = vadd.f32 0.0, %v1454
    %v1456 = vpop.f32.mrb[0].mxu0
    %1457 = vdwg.mxu0
    %v1459 = vsel %vm405, %v1207, 0
    %v1462 = vsel %vm405, %v1212, 0
    %1464 = vmatprep.subr.mxu0 0.0
    %1465 = vmatpush1.msra.mxu0 %v398
    %1466 = vmatprep.subr.mxu0 0.0
    %1467 = vmatpush1.msra.mxu0 0.0
    %1468 = vmatprep.subr.mxu0 0.0
    %1469 = vmatpush1.msra.mxu0 0.0
    %1470 = vmatprep.subr.mxu0 0.0
    %1471 = vmatpush1.msra.mxu0 0.0
    %1472 = vmatprep.subr.mxu0 0.0
    %1473 = vmatpush1.msra.mxu0 0.0
    %1474 = vmatprep.subr.mxu0 0.0
    %1475 = vmatpush1.msra.mxu0 0.0
    %1476 = vmatprep.subr.mxu0 0.0
    %1477 = vmatpush1.msra.mxu0 0.0
    %1478 = vmatprep.subr.mxu0 0.0
    %1479 = vmatpush1.msra.mxu0 0.0
    %1480 = vmatprep.subr.mxu0 0.0
    %1481 = vmatpush1.msra.mxu0 0.0
    %1482 = vmatprep.subr.mxu0 0.0
    %1483 = vmatpush1.msra.mxu0 0.0
    %1484 = vmatprep.subr.mxu0 0.0
    %1485 = vmatpush1.msra.mxu0 0.0
    %1486 = vmatprep.subr.mxu0 0.0
    %1487 = vmatpush1.msra.mxu0 0.0
    %1488 = vmatprep.subr.mxu0 0.0
    %1489 = vmatpush1.msra.mxu0 0.0
    %1490 = vmatprep.subr.mxu0 0.0
    %1491 = vmatpush1.msra.mxu0 0.0
    %1492 = vmatprep.subr.mxu0 0.0
    %1493 = vmatpush1.msra.mxu0 0.0
    %1494 = vmatprep.subr.mxu0 0.0
    %1495 = vmatpush1.msra.mxu0 0.0
    %1496 = vmatprep.subr.mxu0 0.0
    %1497 = vmatpush1.msra.mxu0 0.0
    %1498 = vmatprep.subr.mxu0 0.0
    %1499 = vmatpush1.msra.mxu0 0.0
    %1500 = vmatprep.subr.mxu0 0.0
    %1501 = vmatpush1.msra.mxu0 0.0
    %1502 = vmatprep.subr.mxu0 0.0
    %1503 = vmatpush1.msra.mxu0 0.0
    %1504 = vmatprep.subr.mxu0 0.0
    %1505 = vmatpush1.msra.mxu0 0.0
    %1506 = vmatprep.subr.mxu0 0.0
    %1507 = vmatpush1.msra.mxu0 0.0
    %1508 = vmatprep.subr.mxu0 0.0
    %1509 = vmatpush1.msra.mxu0 0.0
    %1510 = vmatprep.subr.mxu0 0.0
    %1511 = vmatpush1.msra.mxu0 0.0
    %1512 = vmatprep.subr.mxu0 0.0
    %1513 = vmatpush1.msra.mxu0 0.0
    %1514 = vmatprep.subr.mxu0 0.0
    %1515 = vmatpush1.msra.mxu0 0.0
    %1516 = vmatprep.subr.mxu0 0.0
    %1517 = vmatpush1.msra.mxu0 0.0
    %1518 = vmatprep.subr.mxu0 0.0
    %1519 = vmatpush1.msra.mxu0 0.0
    %1520 = vmatprep.subr.mxu0 0.0
    %1521 = vmatpush1.msra.mxu0 0.0
    %1522 = vmatprep.subr.mxu0 0.0
    %1523 = vmatpush1.msra.mxu0 0.0
    %1524 = vmatprep.subr.mxu0 0.0
    %1525 = vmatpush1.msra.mxu0 0.0
    %1526 = vmatprep.subr.mxu0 0.0
    %1527 = vmatpush1.msra.mxu0 0.0
    %1528 = vmatprep.mubr.f32.mxu0 0.0
    %1529 = vmatmul.mubr.f32.gmra.mrb[0].mxu0 %v1459
    %v1530 = vpop.f32.mrb[0].mxu0
    %v1531 = vadd.f32 0.0, %v1530
    %v1532 = vpop.f32.mrb[0].mxu0
    %1533 = vmatprep.mubr.f32.mxu0 0.0
    %1534 = vmatmul.mubr.f32.gmra.mrb[0].mxu0 %v1462
    %v1535 = vpop.f32.mrb[0].mxu0
    %v1536 = vadd.f32 0.0, %v1535
    %v1537 = vpop.f32.mrb[0].mxu0
    %1538 = vdwg.mxu0
    %v1539 = vsel %vm88, %v1288, 0.0
    %v1540 = vsel %vm88, %v1369, 0.0
    %v1541 = vadd.f32 %v1539, %v1540
    %v1542 = vsel %vm88, %v1450, 0.0
    %v1543 = vadd.f32 %v1541, %v1542
    %v1544 = vsel %vm88, %v1531, 0.0
    %v1545 = vadd.f32 %v1543, %v1544
    %v1546 = vsel %vm88, %v1293, 0.0
    %v1547 = vsel %vm88, %v1374, 0.0
    %v1548 = vadd.f32 %v1546, %v1547
    %v1549 = vsel %vm88, %v1455, 0.0
    %v1550 = vadd.f32 %v1548, %v1549
    %v1551 = vsel %vm88, %v1536, 0.0
    %v1552 = vadd.f32 %v1550, %v1551
    %v1553 = vadd.f32 %v1545, %v63
    %v1554 = vadd.f32 %v1552, %v64
    %v1555 = vld [vmem:[%s6] sm:$0x1]
    %v1556 = vld [vmem:[%s7] sm:$0x1]
    %v1557 = vsel %vm88, %v1553, 0.0
    %1558 = vadd.xlane.f32.xlu0 %v1557
    %v1559 = vpop.xlane.xlu0 %1558
    %v1560 = vsel %vm88, %v1554, 0.0
    %1561 = vadd.xlane.f32.xlu0 %v1560
    %v1562 = vpop.xlane.xlu0 %1561
    %v1563 = vrcp.pop 32.0
    %v1564 = vmul.f32 %v1559, %v1563
    %v1565 = vmul.f32 %v1562, %v1563
    %v1566 = vsub.f32 %v1553, %v1564
    %v1567 = vsub.f32 %v1554, %v1565
    %v1568 = vmul.f32 %v1566, %v1566
    %v1569 = vmul.f32 %v1567, %v1567
    %v1570 = vsel %vm88, %v1568, 0.0
    %1571 = vadd.xlane.f32.xlu0 %v1570
    %v1572 = vpop.xlane.xlu0 %1571
    %v1573 = vsel %vm88, %v1569, 0.0
    %1574 = vadd.xlane.f32.xlu0 %v1573
    %v1575 = vpop.xlane.xlu0 %1574
    %v1576 = vmul.f32 %v1572, %v1563
    %v1577 = vmul.f32 %v1575, %v1563
    %v1578 = vadd.f32 %v1576, 1e-05
    %v1579 = vadd.f32 %v1577, 1e-05
    %v1580 = vrsqrt.pop %v1578
    %v1581 = vrsqrt.pop %v1579
    %v1582 = vmul.f32 %v1566, %v1580
    %v1583 = vmul.f32 %v1567, %v1581
    %v1585 = vlaneseq
    %v1586 = vshrl.u32 %v1585, 7
    %v1587 = vsub.s32 0, %v1586
    %v1588 = vrot.slane %v1555, %v1587
    %v1590 = vmul.f32 %v1582, %v1588
    %v1591 = vmul.f32 %v1583, %v1588
    %v1593 = vlaneseq
    %v1594 = vshrl.u32 %v1593, 7
    %v1595 = vsub.s32 0, %v1594
    %v1596 = vrot.slane %v1556, %v1595
    %v1598 = vadd.f32 %v1590, %v1596
    %v1599 = vadd.f32 %v1591, %v1596
    %v1600 = vld [vmem:[%s8] sm:$0xff]
    %v1601 = vld [vmem:[%s8 + $0x8] sm:$0xff]
    %v1602 = vld [vmem:[%s8 + $0x10] sm:$0xff]
    %v1603 = vld [vmem:[%s8 + $0x18] sm:$0xff]
    %v1604 = vld [vmem:[%s8 + $0x20] sm:$0xff]
    %v1605 = vld [vmem:[%s8 + $0x28] sm:$0xff]
    %v1606 = vld [vmem:[%s8 + $0x30] sm:$0xff]
    %v1607 = vld [vmem:[%s8 + $0x38] sm:$0xff]
    %v1608 = vld [vmem:[%s8 + $0x40] sm:$0xff]
    %v1609 = vld [vmem:[%s8 + $0x48] sm:$0xff]
    %v1610 = vld [vmem:[%s8 + $0x50] sm:$0xff]
    %v1611 = vld [vmem:[%s8 + $0x58] sm:$0xff]
    %v1612 = vld [vmem:[%s8 + $0x60] sm:$0xff]
    %v1613 = vld [vmem:[%s8 + $0x68] sm:$0xff]
    %v1614 = vld [vmem:[%s8 + $0x70] sm:$0xff]
    %v1615 = vld [vmem:[%s8 + $0x78] sm:$0xff]
    %v1617 = vsel %vm88, %v1598, 0
    %v1620 = vsel %vm88, %v1599, 0
    %1622 = vmatprep.subr.mxu0 0.0
    %1623 = vmatpush1.msra.mxu0 %v1600
    %1624 = vmatprep.subr.mxu0 0.0
    %1625 = vmatpush1.msra.mxu0 %v1601
    %1626 = vmatprep.subr.mxu0 0.0
    %1627 = vmatpush1.msra.mxu0 %v1602
    %1628 = vmatprep.subr.mxu0 0.0
    %1629 = vmatpush1.msra.mxu0 %v1603
    %1630 = vmatprep.subr.mxu0 0.0
    %1631 = vmatpush1.msra.mxu0 0.0
    %1632 = vmatprep.subr.mxu0 0.0
    %1633 = vmatpush1.msra.mxu0 0.0
    %1634 = vmatprep.subr.mxu0 0.0
    %1635 = vmatpush1.msra.mxu0 0.0
    %1636 = vmatprep.subr.mxu0 0.0
    %1637 = vmatpush1.msra.mxu0 0.0
    %1638 = vmatprep.subr.mxu0 0.0
    %1639 = vmatpush1.msra.mxu0 0.0
    %1640 = vmatprep.subr.mxu0 0.0
    %1641 = vmatpush1.msra.mxu0 0.0
    %1642 = vmatprep.subr.mxu0 0.0
    %1643 = vmatpush1.msra.mxu0 0.0
    %1644 = vmatprep.subr.mxu0 0.0
    %1645 = vmatpush1.msra.mxu0 0.0
    %1646 = vmatprep.subr.mxu0 0.0
    %1647 = vmatpush1.msra.mxu0 0.0
    %1648 = vmatprep.subr.mxu0 0.0
    %1649 = vmatpush1.msra.mxu0 0.0
    %1650 = vmatprep.subr.mxu0 0.0
    %1651 = vmatpush1.msra.mxu0 0.0
    %1652 = vmatprep.subr.mxu0 0.0
    %1653 = vmatpush1.msra.mxu0 0.0
    %1654 = vmatprep.subr.mxu0 0.0
    %1655 = vmatpush1.msra.mxu0 0.0
    %1656 = vmatprep.subr.mxu0 0.0
    %1657 = vmatpush1.msra.mxu0 0.0
    %1658 = vmatprep.subr.mxu0 0.0
    %1659 = vmatpush1.msra.mxu0 0.0
    %1660 = vmatprep.subr.mxu0 0.0
    %1661 = vmatpush1.msra.mxu0 0.0
    %1662 = vmatprep.subr.mxu0 0.0
    %1663 = vmatpush1.msra.mxu0 0.0
    %1664 = vmatprep.subr.mxu0 0.0
    %1665 = vmatpush1.msra.mxu0 0.0
    %1666 = vmatprep.subr.mxu0 0.0
    %1667 = vmatpush1.msra.mxu0 0.0
    %1668 = vmatprep.subr.mxu0 0.0
    %1669 = vmatpush1.msra.mxu0 0.0
    %1670 = vmatprep.subr.mxu0 0.0
    %1671 = vmatpush1.msra.mxu0 0.0
    %1672 = vmatprep.subr.mxu0 0.0
    %1673 = vmatpush1.msra.mxu0 0.0
    %1674 = vmatprep.subr.mxu0 0.0
    %1675 = vmatpush1.msra.mxu0 0.0
    %1676 = vmatprep.subr.mxu0 0.0
    %1677 = vmatpush1.msra.mxu0 0.0
    %1678 = vmatprep.subr.mxu0 0.0
    %1679 = vmatpush1.msra.mxu0 0.0
    %1680 = vmatprep.subr.mxu0 0.0
    %1681 = vmatpush1.msra.mxu0 0.0
    %1682 = vmatprep.subr.mxu0 0.0
    %1683 = vmatpush1.msra.mxu0 0.0
    %1684 = vmatprep.subr.mxu0 0.0
    %1685 = vmatpush1.msra.mxu0 0.0
    %1686 = vmatprep.mubr.f32.mxu0 0.0
    %1687 = vmatmul.mubr.f32.gmra.mrb[0].mxu0 %v1617
    %v1688 = vpop.f32.mrb[0].mxu0
    %v1689 = vadd.f32 0.0, %v1688
    %v1690 = vpop.f32.mrb[0].mxu0
    %1691 = vmatprep.mubr.f32.mxu0 0.0
    %1692 = vmatmul.mubr.f32.gmra.mrb[0].mxu0 %v1620
    %v1693 = vpop.f32.mrb[0].mxu0
    %v1694 = vadd.f32 0.0, %v1693
    %v1695 = vpop.f32.mrb[0].mxu0
    %1696 = vdwg.mxu0
    %1697 = vmatprep.subr.mxu0 0.0
    %1698 = vmatpush1.msra.mxu0 %v1604
    %1699 = vmatprep.subr.mxu0 0.0
    %1700 = vmatpush1.msra.mxu0 %v1605
    %1701 = vmatprep.subr.mxu0 0.0
    %1702 = vmatpush1.msra.mxu0 %v1606
    %1703 = vmatprep.subr.mxu0 0.0
    %1704 = vmatpush1.msra.mxu0 %v1607
    %1705 = vmatprep.subr.mxu0 0.0
    %1706 = vmatpush1.msra.mxu0 0.0
    %1707 = vmatprep.subr.mxu0 0.0
    %1708 = vmatpush1.msra.mxu0 0.0
    %1709 = vmatprep.subr.mxu0 0.0
    %1710 = vmatpush1.msra.mxu0 0.0
    %1711 = vmatprep.subr.mxu0 0.0
    %1712 = vmatpush1.msra.mxu0 0.0
    %1713 = vmatprep.subr.mxu0 0.0
    %1714 = vmatpush1.msra.mxu0 0.0
    %1715 = vmatprep.subr.mxu0 0.0
    %1716 = vmatpush1.msra.mxu0 0.0
    %1717 = vmatprep.subr.mxu0 0.0
    %1718 = vmatpush1.msra.mxu0 0.0
    %1719 = vmatprep.subr.mxu0 0.0
    %1720 = vmatpush1.msra.mxu0 0.0
    %1721 = vmatprep.subr.mxu0 0.0
    %1722 = vmatpush1.msra.mxu0 0.0
    %1723 = vmatprep.subr.mxu0 0.0
    %1724 = vmatpush1.msra.mxu0 0.0
    %1725 = vmatprep.subr.mxu0 0.0
    %1726 = vmatpush1.msra.mxu0 0.0
    %1727 = vmatprep.subr.mxu0 0.0
    %1728 = vmatpush1.msra.mxu0 0.0
    %1729 = vmatprep.subr.mxu0 0.0
    %1730 = vmatpush1.msra.mxu0 0.0
    %1731 = vmatprep.subr.mxu0 0.0
    %1732 = vmatpush1.msra.mxu0 0.0
    %1733 = vmatprep.subr.mxu0 0.0
    %1734 = vmatpush1.msra.mxu0 0.0
    %1735 = vmatprep.subr.mxu0 0.0
    %1736 = vmatpush1.msra.mxu0 0.0
    %1737 = vmatprep.subr.mxu0 0.0
    %1738 = vmatpush1.msra.mxu0 0.0
    %1739 = vmatprep.subr.mxu0 0.0
    %1740 = vmatpush1.msra.mxu0 0.0
    %1741 = vmatprep.subr.mxu0 0.0
    %1742 = vmatpush1.msra.mxu0 0.0
    %1743 = vmatprep.subr.mxu0 0.0
    %1744 = vmatpush1.msra.mxu0 0.0
    %1745 = vmatprep.subr.mxu0 0.0
    %1746 = vmatpush1.msra.mxu0 0.0
    %1747 = vmatprep.subr.mxu0 0.0
    %1748 = vmatpush1.msra.mxu0 0.0
    %1749 = vmatprep.subr.mxu0 0.0
    %1750 = vmatpush1.msra.mxu0 0.0
    %1751 = vmatprep.subr.mxu0 0.0
    %1752 = vmatpush1.msra.mxu0 0.0
    %1753 = vmatprep.subr.mxu0 0.0
    %1754 = vmatpush1.msra.mxu0 0.0
    %1755 = vmatprep.subr.mxu0 0.0
    %1756 = vmatpush1.msra.mxu0 0.0
    %1757 = vmatprep.subr.mxu0 0.0
    %1758 = vmatpush1.msra.mxu0 0.0
    %1759 = vmatprep.subr.mxu0 0.0
    %1760 = vmatpush1.msra.mxu0 0.0
    %1761 = vmatprep.mubr.f32.mxu0 0.0
    %1762 = vmatmul.mubr.f32.gmra.mrb[0].mxu0 %v1617
    %v1763 = vpop.f32.mrb[0].mxu0
    %v1764 = vadd.f32 0.0, %v1763
    %v1765 = vpop.f32.mrb[0].mxu0
    %1766 = vmatprep.mubr.f32.mxu0 0.0
    %1767 = vmatmul.mubr.f32.gmra.mrb[0].mxu0 %v1620
    %v1768 = vpop.f32.mrb[0].mxu0
    %v1769 = vadd.f32 0.0, %v1768
    %v1770 = vpop.f32.mrb[0].mxu0
    %1771 = vdwg.mxu0
    %1772 = vmatprep.subr.mxu0 0.0
    %1773 = vmatpush1.msra.mxu0 %v1608
    %1774 = vmatprep.subr.mxu0 0.0
    %1775 = vmatpush1.msra.mxu0 %v1609
    %1776 = vmatprep.subr.mxu0 0.0
    %1777 = vmatpush1.msra.mxu0 %v1610
    %1778 = vmatprep.subr.mxu0 0.0
    %1779 = vmatpush1.msra.mxu0 %v1611
    %1780 = vmatprep.subr.mxu0 0.0
    %1781 = vmatpush1.msra.mxu0 0.0
    %1782 = vmatprep.subr.mxu0 0.0
    %1783 = vmatpush1.msra.mxu0 0.0
    %1784 = vmatprep.subr.mxu0 0.0
    %1785 = vmatpush1.msra.mxu0 0.0
    %1786 = vmatprep.subr.mxu0 0.0
    %1787 = vmatpush1.msra.mxu0 0.0
    %1788 = vmatprep.subr.mxu0 0.0
    %1789 = vmatpush1.msra.mxu0 0.0
    %1790 = vmatprep.subr.mxu0 0.0
    %1791 = vmatpush1.msra.mxu0 0.0
    %1792 = vmatprep.subr.mxu0 0.0
    %1793 = vmatpush1.msra.mxu0 0.0
    %1794 = vmatprep.subr.mxu0 0.0
    %1795 = vmatpush1.msra.mxu0 0.0
    %1796 = vmatprep.subr.mxu0 0.0
    %1797 = vmatpush1.msra.mxu0 0.0
    %1798 = vmatprep.subr.mxu0 0.0
    %1799 = vmatpush1.msra.mxu0 0.0
    %1800 = vmatprep.subr.mxu0 0.0
    %1801 = vmatpush1.msra.mxu0 0.0
    %1802 = vmatprep.subr.mxu0 0.0
    %1803 = vmatpush1.msra.mxu0 0.0
    %1804 = vmatprep.subr.mxu0 0.0
    %1805 = vmatpush1.msra.mxu0 0.0
    %1806 = vmatprep.subr.mxu0 0.0
    %1807 = vmatpush1.msra.mxu0 0.0
    %1808 = vmatprep.subr.mxu0 0.0
    %1809 = vmatpush1.msra.mxu0 0.0
    %1810 = vmatprep.subr.mxu0 0.0
    %1811 = vmatpush1.msra.mxu0 0.0
    %1812 = vmatprep.subr.mxu0 0.0
    %1813 = vmatpush1.msra.mxu0 0.0
    %1814 = vmatprep.subr.mxu0 0.0
    %1815 = vmatpush1.msra.mxu0 0.0
    %1816 = vmatprep.subr.mxu0 0.0
    %1817 = vmatpush1.msra.mxu0 0.0
    %1818 = vmatprep.subr.mxu0 0.0
    %1819 = vmatpush1.msra.mxu0 0.0
    %1820 = vmatprep.subr.mxu0 0.0
    %1821 = vmatpush1.msra.mxu0 0.0
    %1822 = vmatprep.subr.mxu0 0.0
    %1823 = vmatpush1.msra.mxu0 0.0
    %1824 = vmatprep.subr.mxu0 0.0
    %1825 = vmatpush1.msra.mxu0 0.0
    %1826 = vmatprep.subr.mxu0 0.0
    %1827 = vmatpush1.msra.mxu0 0.0
    %1828 = vmatprep.subr.mxu0 0.0
    %1829 = vmatpush1.msra.mxu0 0.0
    %1830 = vmatprep.subr.mxu0 0.0
    %1831 = vmatpush1.msra.mxu0 0.0
    %1832 = vmatprep.subr.mxu0 0.0
    %1833 = vmatpush1.msra.mxu0 0.0
    %1834 = vmatprep.subr.mxu0 0.0
    %1835 = vmatpush1.msra.mxu0 0.0
    %1836 = vmatprep.mubr.f32.mxu0 0.0
    %1837 = vmatmul.mubr.f32.gmra.mrb[0].mxu0 %v1617
    %v1838 = vpop.f32.mrb[0].mxu0
    %v1839 = vadd.f32 0.0, %v1838
    %v1840 = vpop.f32.mrb[0].mxu0
    %1841 = vmatprep.mubr.f32.mxu0 0.0
    %1842 = vmatmul.mubr.f32.gmra.mrb[0].mxu0 %v1620
    %v1843 = vpop.f32.mrb[0].mxu0
    %v1844 = vadd.f32 0.0, %v1843
    %v1845 = vpop.f32.mrb[0].mxu0
    %1846 = vdwg.mxu0
    %1847 = vmatprep.subr.mxu0 0.0
    %1848 = vmatpush1.msra.mxu0 %v1612
    %1849 = vmatprep.subr.mxu0 0.0
    %1850 = vmatpush1.msra.mxu0 %v1613
    %1851 = vmatprep.subr.mxu0 0.0
    %1852 = vmatpush1.msra.mxu0 %v1614
    %1853 = vmatprep.subr.mxu0 0.0
    %1854 = vmatpush1.msra.mxu0 %v1615
    %1855 = vmatprep.subr.mxu0 0.0
    %1856 = vmatpush1.msra.mxu0 0.0
    %1857 = vmatprep.subr.mxu0 0.0
    %1858 = vmatpush1.msra.mxu0 0.0
    %1859 = vmatprep.subr.mxu0 0.0
    %1860 = vmatpush1.msra.mxu0 0.0
    %1861 = vmatprep.subr.mxu0 0.0
    %1862 = vmatpush1.msra.mxu0 0.0
    %1863 = vmatprep.subr.mxu0 0.0
    %1864 = vmatpush1.msra.mxu0 0.0
    %1865 = vmatprep.subr.mxu0 0.0
    %1866 = vmatpush1.msra.mxu0 0.0
    %1867 = vmatprep.subr.mxu0 0.0
    %1868 = vmatpush1.msra.mxu0 0.0
    %1869 = vmatprep.subr.mxu0 0.0
    %1870 = vmatpush1.msra.mxu0 0.0
    %1871 = vmatprep.subr.mxu0 0.0
    %1872 = vmatpush1.msra.mxu0 0.0
    %1873 = vmatprep.subr.mxu0 0.0
    %1874 = vmatpush1.msra.mxu0 0.0
    %1875 = vmatprep.subr.mxu0 0.0
    %1876 = vmatpush1.msra.mxu0 0.0
    %1877 = vmatprep.subr.mxu0 0.0
    %1878 = vmatpush1.msra.mxu0 0.0
    %1879 = vmatprep.subr.mxu0 0.0
    %1880 = vmatpush1.msra.mxu0 0.0
    %1881 = vmatprep.subr.mxu0 0.0
    %1882 = vmatpush1.msra.mxu0 0.0
    %1883 = vmatprep.subr.mxu0 0.0
    %1884 = vmatpush1.msra.mxu0 0.0
    %1885 = vmatprep.subr.mxu0 0.0
    %1886 = vmatpush1.msra.mxu0 0.0
    %1887 = vmatprep.subr.mxu0 0.0
    %1888 = vmatpush1.msra.mxu0 0.0
    %1889 = vmatprep.subr.mxu0 0.0
    %1890 = vmatpush1.msra.mxu0 0.0
    %1891 = vmatprep.subr.mxu0 0.0
    %1892 = vmatpush1.msra.mxu0 0.0
    %1893 = vmatprep.subr.mxu0 0.0
    %1894 = vmatpush1.msra.mxu0 0.0
    %1895 = vmatprep.subr.mxu0 0.0
    %1896 = vmatpush1.msra.mxu0 0.0
    %1897 = vmatprep.subr.mxu0 0.0
    %1898 = vmatpush1.msra.mxu0 0.0
    %1899 = vmatprep.subr.mxu0 0.0
    %1900 = vmatpush1.msra.mxu0 0.0
    %1901 = vmatprep.subr.mxu0 0.0
    %1902 = vmatpush1.msra.mxu0 0.0
    %1903 = vmatprep.subr.mxu0 0.0
    %1904 = vmatpush1.msra.mxu0 0.0
    %1905 = vmatprep.subr.mxu0 0.0
    %1906 = vmatpush1.msra.mxu0 0.0
    %1907 = vmatprep.subr.mxu0 0.0
    %1908 = vmatpush1.msra.mxu0 0.0
    %1909 = vmatprep.subr.mxu0 0.0
    %1910 = vmatpush1.msra.mxu0 0.0
    %1911 = vmatprep.mubr.f32.mxu0 0.0
    %1912 = vmatmul.mubr.f32.gmra.mrb[0].mxu0 %v1617
    %v1913 = vpop.f32.mrb[0].mxu0
    %v1914 = vadd.f32 0.0, %v1913
    %v1915 = vpop.f32.mrb[0].mxu0
    %1916 = vmatprep.mubr.f32.mxu0 0.0
    %1917 = vmatmul.mubr.f32.gmra.mrb[0].mxu0 %v1620
    %v1918 = vpop.f32.mrb[0].mxu0
    %v1919 = vadd.f32 0.0, %v1918
    %v1920 = vpop.f32.mrb[0].mxu0
    %1921 = vdwg.mxu0
    %v1922 = vld [vmem:[%s9] sm:$0xff]
    %v1923 = vld [vmem:[%s9 + $0x8] sm:$0xff]
    %v1924 = vld [vmem:[%s9 + $0x10] sm:$0xff]
    %v1925 = vld [vmem:[%s9 + $0x18] sm:$0xff]
    %v1926 = vld [vmem:[%s9 + $0x20] sm:$0xff]
    %v1927 = vld [vmem:[%s9 + $0x28] sm:$0xff]
    %v1928 = vld [vmem:[%s9 + $0x30] sm:$0xff]
    %v1929 = vld [vmem:[%s9 + $0x38] sm:$0xff]
    %v1930 = vld [vmem:[%s9 + $0x40] sm:$0xff]
    %v1931 = vld [vmem:[%s9 + $0x48] sm:$0xff]
    %v1932 = vld [vmem:[%s9 + $0x50] sm:$0xff]
    %v1933 = vld [vmem:[%s9 + $0x58] sm:$0xff]
    %v1934 = vld [vmem:[%s9 + $0x60] sm:$0xff]
    %v1935 = vld [vmem:[%s9 + $0x68] sm:$0xff]
    %v1936 = vld [vmem:[%s9 + $0x70] sm:$0xff]
    %v1937 = vld [vmem:[%s9 + $0x78] sm:$0xff]
    %v1939 = vsel %vm88, %v65, 0
    %v1942 = vsel %vm88, %v66, 0
    %v1945 = vsel %vm88, %v67, 0
    %1947 = vmatprep.subr.mxu0 0.0
    %1948 = vmatpush1.msra.mxu0 %v1922
    %1949 = vmatprep.subr.mxu0 0.0
    %1950 = vmatpush1.msra.mxu0 %v1923
    %1951 = vmatprep.subr.mxu0 0.0
    %1952 = vmatpush1.msra.mxu0 %v1924
    %1953 = vmatprep.subr.mxu0 0.0
    %1954 = vmatpush1.msra.mxu0 %v1925
    %1955 = vmatprep.subr.mxu0 0.0
    %1956 = vmatpush1.msra.mxu0 0.0
    %1957 = vmatprep.subr.mxu0 0.0
    %1958 = vmatpush1.msra.mxu0 0.0
    %1959 = vmatprep.subr.mxu0 0.0
    %1960 = vmatpush1.msra.mxu0 0.0
    %1961 = vmatprep.subr.mxu0 0.0
    %1962 = vmatpush1.msra.mxu0 0.0
    %1963 = vmatprep.subr.mxu0 0.0
    %1964 = vmatpush1.msra.mxu0 0.0
    %1965 = vmatprep.subr.mxu0 0.0
    %1966 = vmatpush1.msra.mxu0 0.0
    %1967 = vmatprep.subr.mxu0 0.0
    %1968 = vmatpush1.msra.mxu0 0.0
    %1969 = vmatprep.subr.mxu0 0.0
    %1970 = vmatpush1.msra.mxu0 0.0
    %1971 = vmatprep.subr.mxu0 0.0
    %1972 = vmatpush1.msra.mxu0 0.0
    %1973 = vmatprep.subr.mxu0 0.0
    %1974 = vmatpush1.msra.mxu0 0.0
    %1975 = vmatprep.subr.mxu0 0.0
    %1976 = vmatpush1.msra.mxu0 0.0
    %1977 = vmatprep.subr.mxu0 0.0
    %1978 = vmatpush1.msra.mxu0 0.0
    %1979 = vmatprep.subr.mxu0 0.0
    %1980 = vmatpush1.msra.mxu0 0.0
    %1981 = vmatprep.subr.mxu0 0.0
    %1982 = vmatpush1.msra.mxu0 0.0
    %1983 = vmatprep.subr.mxu0 0.0
    %1984 = vmatpush1.msra.mxu0 0.0
    %1985 = vmatprep.subr.mxu0 0.0
    %1986 = vmatpush1.msra.mxu0 0.0
    %1987 = vmatprep.subr.mxu0 0.0
    %1988 = vmatpush1.msra.mxu0 0.0
    %1989 = vmatprep.subr.mxu0 0.0
    %1990 = vmatpush1.msra.mxu0 0.0
    %1991 = vmatprep.subr.mxu0 0.0
    %1992 = vmatpush1.msra.mxu0 0.0
    %1993 = vmatprep.subr.mxu0 0.0
    %1994 = vmatpush1.msra.mxu0 0.0
    %1995 = vmatprep.subr.mxu0 0.0
    %1996 = vmatpush1.msra.mxu0 0.0
    %1997 = vmatprep.subr.mxu0 0.0
    %1998 = vmatpush1.msra.mxu0 0.0
    %1999 = vmatprep.subr.mxu0 0.0
    %2000 = vmatpush1.msra.mxu0 0.0
    %2001 = vmatprep.subr.mxu0 0.0
    %2002 = vmatpush1.msra.mxu0 0.0
    %2003 = vmatprep.subr.mxu0 0.0
    %2004 = vmatpush1.msra.mxu0 0.0
    %2005 = vmatprep.subr.mxu0 0.0
    %2006 = vmatpush1.msra.mxu0 0.0
    %2007 = vmatprep.subr.mxu0 0.0
    %2008 = vmatpush1.msra.mxu0 0.0
    %2009 = vmatprep.subr.mxu0 0.0
    %2010 = vmatpush1.msra.mxu0 0.0
    %2011 = vmatprep.mubr.f32.mxu0 0.0
    %2012 = vmatmul.mubr.f32.gmra.mrb[0].mxu0 %v1939
    %v2013 = vpop.f32.mrb[0].mxu0
    %v2014 = vadd.f32 0.0, %v2013
    %v2015 = vpop.f32.mrb[0].mxu0
    %2016 = vmatprep.mubr.f32.mxu0 0.0
    %2017 = vmatmul.mubr.f32.gmra.mrb[0].mxu0 %v1942
    %v2018 = vpop.f32.mrb[0].mxu0
    %v2019 = vadd.f32 0.0, %v2018
    %v2020 = vpop.f32.mrb[0].mxu0
    %2021 = vmatprep.mubr.f32.mxu0 0.0
    %2022 = vmatmul.mubr.f32.gmra.mrb[0].mxu0 %v1945
    %v2023 = vpop.f32.mrb[0].mxu0
    %v2024 = vadd.f32 0.0, %v2023
    %v2025 = vpop.f32.mrb[0].mxu0
    %2026 = vdwg.mxu0
    %2027 = vmatprep.subr.mxu0 0.0
    %2028 = vmatpush1.msra.mxu0 %v1926
    %2029 = vmatprep.subr.mxu0 0.0
    %2030 = vmatpush1.msra.mxu0 %v1927
    %2031 = vmatprep.subr.mxu0 0.0
    %2032 = vmatpush1.msra.mxu0 %v1928
    %2033 = vmatprep.subr.mxu0 0.0
    %2034 = vmatpush1.msra.mxu0 %v1929
    %2035 = vmatprep.subr.mxu0 0.0
    %2036 = vmatpush1.msra.mxu0 0.0
    %2037 = vmatprep.subr.mxu0 0.0
    %2038 = vmatpush1.msra.mxu0 0.0
    %2039 = vmatprep.subr.mxu0 0.0
    %2040 = vmatpush1.msra.mxu0 0.0
    %2041 = vmatprep.subr.mxu0 0.0
    %2042 = vmatpush1.msra.mxu0 0.0
    %2043 = vmatprep.subr.mxu0 0.0
    %2044 = vmatpush1.msra.mxu0 0.0
    %2045 = vmatprep.subr.mxu0 0.0
    %2046 = vmatpush1.msra.mxu0 0.0
    %2047 = vmatprep.subr.mxu0 0.0
    %2048 = vmatpush1.msra.mxu0 0.0
    %2049 = vmatprep.subr.mxu0 0.0
    %2050 = vmatpush1.msra.mxu0 0.0
    %2051 = vmatprep.subr.mxu0 0.0
    %2052 = vmatpush1.msra.mxu0 0.0
    %2053 = vmatprep.subr.mxu0 0.0
    %2054 = vmatpush1.msra.mxu0 0.0
    %2055 = vmatprep.subr.mxu0 0.0
    %2056 = vmatpush1.msra.mxu0 0.0
    %2057 = vmatprep.subr.mxu0 0.0
    %2058 = vmatpush1.msra.mxu0 0.0
    %2059 = vmatprep.subr.mxu0 0.0
    %2060 = vmatpush1.msra.mxu0 0.0
    %2061 = vmatprep.subr.mxu0 0.0
    %2062 = vmatpush1.msra.mxu0 0.0
    %2063 = vmatprep.subr.mxu0 0.0
    %2064 = vmatpush1.msra.mxu0 0.0
    %2065 = vmatprep.subr.mxu0 0.0
    %2066 = vmatpush1.msra.mxu0 0.0
    %2067 = vmatprep.subr.mxu0 0.0
    %2068 = vmatpush1.msra.mxu0 0.0
    %2069 = vmatprep.subr.mxu0 0.0
    %2070 = vmatpush1.msra.mxu0 0.0
    %2071 = vmatprep.subr.mxu0 0.0
    %2072 = vmatpush1.msra.mxu0 0.0
    %2073 = vmatprep.subr.mxu0 0.0
    %2074 = vmatpush1.msra.mxu0 0.0
    %2075 = vmatprep.subr.mxu0 0.0
    %2076 = vmatpush1.msra.mxu0 0.0
    %2077 = vmatprep.subr.mxu0 0.0
    %2078 = vmatpush1.msra.mxu0 0.0
    %2079 = vmatprep.subr.mxu0 0.0
    %2080 = vmatpush1.msra.mxu0 0.0
    %2081 = vmatprep.subr.mxu0 0.0
    %2082 = vmatpush1.msra.mxu0 0.0
    %2083 = vmatprep.subr.mxu0 0.0
    %2084 = vmatpush1.msra.mxu0 0.0
    %2085 = vmatprep.subr.mxu0 0.0
    %2086 = vmatpush1.msra.mxu0 0.0
    %2087 = vmatprep.subr.mxu0 0.0
    %2088 = vmatpush1.msra.mxu0 0.0
    %2089 = vmatprep.subr.mxu0 0.0
    %2090 = vmatpush1.msra.mxu0 0.0
    %2091 = vmatprep.mubr.f32.mxu0 0.0
    %2092 = vmatmul.mubr.f32.gmra.mrb[0].mxu0 %v1939
    %v2093 = vpop.f32.mrb[0].mxu0
    %v2094 = vadd.f32 0.0, %v2093
    %v2095 = vpop.f32.mrb[0].mxu0
    %2096 = vmatprep.mubr.f32.mxu0 0.0
    %2097 = vmatmul.mubr.f32.gmra.mrb[0].mxu0 %v1942
    %v2098 = vpop.f32.mrb[0].mxu0
    %v2099 = vadd.f32 0.0, %v2098
    %v2100 = vpop.f32.mrb[0].mxu0
    %2101 = vmatprep.mubr.f32.mxu0 0.0
    %2102 = vmatmul.mubr.f32.gmra.mrb[0].mxu0 %v1945
    %v2103 = vpop.f32.mrb[0].mxu0
    %v2104 = vadd.f32 0.0, %v2103
    %v2105 = vpop.f32.mrb[0].mxu0
    %2106 = vdwg.mxu0
    %2107 = vmatprep.subr.mxu0 0.0
    %2108 = vmatpush1.msra.mxu0 %v1930
    %2109 = vmatprep.subr.mxu0 0.0
    %2110 = vmatpush1.msra.mxu0 %v1931
    %2111 = vmatprep.subr.mxu0 0.0
    %2112 = vmatpush1.msra.mxu0 %v1932
    %2113 = vmatprep.subr.mxu0 0.0
    %2114 = vmatpush1.msra.mxu0 %v1933
    %2115 = vmatprep.subr.mxu0 0.0
    %2116 = vmatpush1.msra.mxu0 0.0
    %2117 = vmatprep.subr.mxu0 0.0
    %2118 = vmatpush1.msra.mxu0 0.0
    %2119 = vmatprep.subr.mxu0 0.0
    %2120 = vmatpush1.msra.mxu0 0.0
    %2121 = vmatprep.subr.mxu0 0.0
    %2122 = vmatpush1.msra.mxu0 0.0
    %2123 = vmatprep.subr.mxu0 0.0
    %2124 = vmatpush1.msra.mxu0 0.0
    %2125 = vmatprep.subr.mxu0 0.0
    %2126 = vmatpush1.msra.mxu0 0.0
    %2127 = vmatprep.subr.mxu0 0.0
    %2128 = vmatpush1.msra.mxu0 0.0
    %2129 = vmatprep.subr.mxu0 0.0
    %2130 = vmatpush1.msra.mxu0 0.0
    %2131 = vmatprep.subr.mxu0 0.0
    %2132 = vmatpush1.msra.mxu0 0.0
    %2133 = vmatprep.subr.mxu0 0.0
    %2134 = vmatpush1.msra.mxu0 0.0
    %2135 = vmatprep.subr.mxu0 0.0
    %2136 = vmatpush1.msra.mxu0 0.0
    %2137 = vmatprep.subr.mxu0 0.0
    %2138 = vmatpush1.msra.mxu0 0.0
    %2139 = vmatprep.subr.mxu0 0.0
    %2140 = vmatpush1.msra.mxu0 0.0
    %2141 = vmatprep.subr.mxu0 0.0
    %2142 = vmatpush1.msra.mxu0 0.0
    %2143 = vmatprep.subr.mxu0 0.0
    %2144 = vmatpush1.msra.mxu0 0.0
    %2145 = vmatprep.subr.mxu0 0.0
    %2146 = vmatpush1.msra.mxu0 0.0
    %2147 = vmatprep.subr.mxu0 0.0
    %2148 = vmatpush1.msra.mxu0 0.0
    %2149 = vmatprep.subr.mxu0 0.0
    %2150 = vmatpush1.msra.mxu0 0.0
    %2151 = vmatprep.subr.mxu0 0.0
    %2152 = vmatpush1.msra.mxu0 0.0
    %2153 = vmatprep.subr.mxu0 0.0
    %2154 = vmatpush1.msra.mxu0 0.0
    %2155 = vmatprep.subr.mxu0 0.0
    %2156 = vmatpush1.msra.mxu0 0.0
    %2157 = vmatprep.subr.mxu0 0.0
    %2158 = vmatpush1.msra.mxu0 0.0
    %2159 = vmatprep.subr.mxu0 0.0
    %2160 = vmatpush1.msra.mxu0 0.0
    %2161 = vmatprep.subr.mxu0 0.0
    %2162 = vmatpush1.msra.mxu0 0.0
    %2163 = vmatprep.subr.mxu0 0.0
    %2164 = vmatpush1.msra.mxu0 0.0
    %2165 = vmatprep.subr.mxu0 0.0
    %2166 = vmatpush1.msra.mxu0 0.0
    %2167 = vmatprep.subr.mxu0 0.0
    %2168 = vmatpush1.msra.mxu0 0.0
    %2169 = vmatprep.subr.mxu0 0.0
    %2170 = vmatpush1.msra.mxu0 0.0
    %2171 = vmatprep.mubr.f32.mxu0 0.0
    %2172 = vmatmul.mubr.f32.gmra.mrb[0].mxu0 %v1939
    %v2173 = vpop.f32.mrb[0].mxu0
    %v2174 = vadd.f32 0.0, %v2173
    %v2175 = vpop.f32.mrb[0].mxu0
    %2176 = vmatprep.mubr.f32.mxu0 0.0
    %2177 = vmatmul.mubr.f32.gmra.mrb[0].mxu0 %v1942
    %v2178 = vpop.f32.mrb[0].mxu0
    %v2179 = vadd.f32 0.0, %v2178
    %v2180 = vpop.f32.mrb[0].mxu0
    %2181 = vmatprep.mubr.f32.mxu0 0.0
    %2182 = vmatmul.mubr.f32.gmra.mrb[0].mxu0 %v1945
    %v2183 = vpop.f32.mrb[0].mxu0
    %v2184 = vadd.f32 0.0, %v2183
    %v2185 = vpop.f32.mrb[0].mxu0
    %2186 = vdwg.mxu0
    %2187 = vmatprep.subr.mxu0 0.0
    %2188 = vmatpush1.msra.mxu0 %v1934
    %2189 = vmatprep.subr.mxu0 0.0
    %2190 = vmatpush1.msra.mxu0 %v1935
    %2191 = vmatprep.subr.mxu0 0.0
    %2192 = vmatpush1.msra.mxu0 %v1936
    %2193 = vmatprep.subr.mxu0 0.0
    %2194 = vmatpush1.msra.mxu0 %v1937
    %2195 = vmatprep.subr.mxu0 0.0
    %2196 = vmatpush1.msra.mxu0 0.0
    %2197 = vmatprep.subr.mxu0 0.0
    %2198 = vmatpush1.msra.mxu0 0.0
    %2199 = vmatprep.subr.mxu0 0.0
    %2200 = vmatpush1.msra.mxu0 0.0
    %2201 = vmatprep.subr.mxu0 0.0
    %2202 = vmatpush1.msra.mxu0 0.0
    %2203 = vmatprep.subr.mxu0 0.0
    %2204 = vmatpush1.msra.mxu0 0.0
    %2205 = vmatprep.subr.mxu0 0.0
    %2206 = vmatpush1.msra.mxu0 0.0
    %2207 = vmatprep.subr.mxu0 0.0
    %2208 = vmatpush1.msra.mxu0 0.0
    %2209 = vmatprep.subr.mxu0 0.0
    %2210 = vmatpush1.msra.mxu0 0.0
    %2211 = vmatprep.subr.mxu0 0.0
    %2212 = vmatpush1.msra.mxu0 0.0
    %2213 = vmatprep.subr.mxu0 0.0
    %2214 = vmatpush1.msra.mxu0 0.0
    %2215 = vmatprep.subr.mxu0 0.0
    %2216 = vmatpush1.msra.mxu0 0.0
    %2217 = vmatprep.subr.mxu0 0.0
    %2218 = vmatpush1.msra.mxu0 0.0
    %2219 = vmatprep.subr.mxu0 0.0
    %2220 = vmatpush1.msra.mxu0 0.0
    %2221 = vmatprep.subr.mxu0 0.0
    %2222 = vmatpush1.msra.mxu0 0.0
    %2223 = vmatprep.subr.mxu0 0.0
    %2224 = vmatpush1.msra.mxu0 0.0
    %2225 = vmatprep.subr.mxu0 0.0
    %2226 = vmatpush1.msra.mxu0 0.0
    %2227 = vmatprep.subr.mxu0 0.0
    %2228 = vmatpush1.msra.mxu0 0.0
    %2229 = vmatprep.subr.mxu0 0.0
    %2230 = vmatpush1.msra.mxu0 0.0
    %2231 = vmatprep.subr.mxu0 0.0
    %2232 = vmatpush1.msra.mxu0 0.0
    %2233 = vmatprep.subr.mxu0 0.0
    %2234 = vmatpush1.msra.mxu0 0.0
    %2235 = vmatprep.subr.mxu0 0.0
    %2236 = vmatpush1.msra.mxu0 0.0
    %2237 = vmatprep.subr.mxu0 0.0
    %2238 = vmatpush1.msra.mxu0 0.0
    %2239 = vmatprep.subr.mxu0 0.0
    %2240 = vmatpush1.msra.mxu0 0.0
    %2241 = vmatprep.subr.mxu0 0.0
    %2242 = vmatpush1.msra.mxu0 0.0
    %2243 = vmatprep.subr.mxu0 0.0
    %2244 = vmatpush1.msra.mxu0 0.0
    %2245 = vmatprep.subr.mxu0 0.0
    %2246 = vmatpush1.msra.mxu0 0.0
    %2247 = vmatprep.subr.mxu0 0.0
    %2248 = vmatpush1.msra.mxu0 0.0
    %2249 = vmatprep.subr.mxu0 0.0
    %2250 = vmatpush1.msra.mxu0 0.0
    %2251 = vmatprep.mubr.f32.mxu0 0.0
    %2252 = vmatmul.mubr.f32.gmra.mrb[0].mxu0 %v1939
    %v2253 = vpop.f32.mrb[0].mxu0
    %v2254 = vadd.f32 0.0, %v2253
    %v2255 = vpop.f32.mrb[0].mxu0
    %2256 = vmatprep.mubr.f32.mxu0 0.0
    %2257 = vmatmul.mubr.f32.gmra.mrb[0].mxu0 %v1942
    %v2258 = vpop.f32.mrb[0].mxu0
    %v2259 = vadd.f32 0.0, %v2258
    %v2260 = vpop.f32.mrb[0].mxu0
    %2261 = vmatprep.mubr.f32.mxu0 0.0
    %2262 = vmatmul.mubr.f32.gmra.mrb[0].mxu0 %v1945
    %v2263 = vpop.f32.mrb[0].mxu0
    %v2264 = vadd.f32 0.0, %v2263
    %v2265 = vpop.f32.mrb[0].mxu0
    %2266 = vdwg.mxu0
    %v2267 = vld [vmem:[%s10] sm:$0xff]
    %v2268 = vld [vmem:[%s10 + $0x8] sm:$0xff]
    %v2269 = vld [vmem:[%s10 + $0x10] sm:$0xff]
    %v2270 = vld [vmem:[%s10 + $0x18] sm:$0xff]
    %v2272 = vsel %vm405, %v1689, 0
    %v2275 = vsel %vm405, %v1694, 0
    %v2278 = vsel %vm405, %v2014, 0
    %v2281 = vsel %vm405, %v2019, 0
    %v2284 = vsel %vm405, %v2024, 0
    %2286 = vmatprep.subr.mxu0 0.0
    %2287 = vmatpush1.xpose.msra.mxu0 %v2278
    %2288 = vmatprep.subr.mxu0 0.0
    %2289 = vmatpush1.xpose.msra.mxu0 %v2281
    %2290 = vmatprep.subr.mxu0 0.0
    %2291 = vmatpush1.xpose.msra.mxu0 %v2284
    %2292 = vmatprep.subr.mxu0 0.0
    %2293 = vmatpush1.xpose.msra.mxu0 0.0
    %2294 = vmatprep.subr.mxu0 0.0
    %2295 = vmatpush1.xpose.msra.mxu0 0.0
    %2296 = vmatprep.subr.mxu0 0.0
    %2297 = vmatpush1.xpose.msra.mxu0 0.0
    %2298 = vmatprep.subr.mxu0 0.0
    %2299 = vmatpush1.xpose.msra.mxu0 0.0
    %2300 = vmatprep.subr.mxu0 0.0
    %2301 = vmatpush1.xpose.msra.mxu0 0.0
    %2302 = vmatprep.subr.mxu0 0.0
    %2303 = vmatpush1.xpose.msra.mxu0 0.0
    %2304 = vmatprep.subr.mxu0 0.0
    %2305 = vmatpush1.xpose.msra.mxu0 0.0
    %2306 = vmatprep.subr.mxu0 0.0
    %2307 = vmatpush1.xpose.msra.mxu0 0.0
    %2308 = vmatprep.subr.mxu0 0.0
    %2309 = vmatpush1.xpose.msra.mxu0 0.0
    %2310 = vmatprep.subr.mxu0 0.0
    %2311 = vmatpush1.xpose.msra.mxu0 0.0
    %2312 = vmatprep.subr.mxu0 0.0
    %2313 = vmatpush1.xpose.msra.mxu0 0.0
    %2314 = vmatprep.subr.mxu0 0.0
    %2315 = vmatpush1.xpose.msra.mxu0 0.0
    %2316 = vmatprep.subr.mxu0 0.0
    %2317 = vmatpush1.xpose.msra.mxu0 0.0
    %2318 = vmatprep.subr.mxu0 0.0
    %2319 = vmatpush1.xpose.msra.mxu0 0.0
    %2320 = vmatprep.subr.mxu0 0.0
    %2321 = vmatpush1.xpose.msra.mxu0 0.0
    %2322 = vmatprep.subr.mxu0 0.0
    %2323 = vmatpush1.xpose.msra.mxu0 0.0
    %2324 = vmatprep.subr.mxu0 0.0
    %2325 = vmatpush1.xpose.msra.mxu0 0.0
    %2326 = vmatprep.subr.mxu0 0.0
    %2327 = vmatpush1.xpose.msra.mxu0 0.0
    %2328 = vmatprep.subr.mxu0 0.0
    %2329 = vmatpush1.xpose.msra.mxu0 0.0
    %2330 = vmatprep.subr.mxu0 0.0
    %2331 = vmatpush1.xpose.msra.mxu0 0.0
    %2332 = vmatprep.subr.mxu0 0.0
    %2333 = vmatpush1.xpose.msra.mxu0 0.0
    %2334 = vmatprep.subr.mxu0 0.0
    %2335 = vmatpush1.xpose.msra.mxu0 0.0
    %2336 = vmatprep.subr.mxu0 0.0
    %2337 = vmatpush1.xpose.msra.mxu0 0.0
    %2338 = vmatprep.subr.mxu0 0.0
    %2339 = vmatpush1.xpose.msra.mxu0 0.0
    %2340 = vmatprep.subr.mxu0 0.0
    %2341 = vmatpush1.xpose.msra.mxu0 0.0
    %2342 = vmatprep.subr.mxu0 0.0
    %2343 = vmatpush1.xpose.msra.mxu0 0.0
    %2344 = vmatprep.subr.mxu0 0.0
    %2345 = vmatpush1.xpose.msra.mxu0 0.0
    %2346 = vmatprep.subr.mxu0 0.0
    %2347 = vmatpush1.xpose.msra.mxu0 0.0
    %2348 = vmatprep.subr.mxu0 0.0
    %2349 = vmatpush1.xpose.msra.mxu0 0.0
    %2350 = vmatprep.mubr.f32.mxu0 0.0
    %2351 = vmatmul.mubr.f32.gmra.mrb[0].mxu0 %v2272
    %v2352 = vpop.f32.mrb[0].mxu0
    %v2353 = vadd.f32 0.0, %v2352
    %v2354 = vpop.f32.mrb[0].mxu0
    %2355 = vmatprep.mubr.f32.mxu0 0.0
    %2356 = vmatmul.mubr.f32.gmra.mrb[0].mxu0 %v2275
    %v2357 = vpop.f32.mrb[0].mxu0
    %v2358 = vadd.f32 0.0, %v2357
    %v2359 = vpop.f32.mrb[0].mxu0
    %2360 = vdwg.mxu0
    %v2362 = vsel %vm405, %v1764, 0
    %v2365 = vsel %vm405, %v1769, 0
    %v2368 = vsel %vm405, %v2094, 0
    %v2371 = vsel %vm405, %v2099, 0
    %v2374 = vsel %vm405, %v2104, 0
    %2376 = vmatprep.subr.mxu0 0.0
    %2377 = vmatpush1.xpose.msra.mxu0 %v2368
    %2378 = vmatprep.subr.mxu0 0.0
    %2379 = vmatpush1.xpose.msra.mxu0 %v2371
    %2380 = vmatprep.subr.mxu0 0.0
    %2381 = vmatpush1.xpose.msra.mxu0 %v2374
    %2382 = vmatprep.subr.mxu0 0.0
    %2383 = vmatpush1.xpose.msra.mxu0 0.0
    %2384 = vmatprep.subr.mxu0 0.0
    %2385 = vmatpush1.xpose.msra.mxu0 0.0
    %2386 = vmatprep.subr.mxu0 0.0
    %2387 = vmatpush1.xpose.msra.mxu0 0.0
    %2388 = vmatprep.subr.mxu0 0.0
    %2389 = vmatpush1.xpose.msra.mxu0 0.0
    %2390 = vmatprep.subr.mxu0 0.0
    %2391 = vmatpush1.xpose.msra.mxu0 0.0
    %2392 = vmatprep.subr.mxu0 0.0
    %2393 = vmatpush1.xpose.msra.mxu0 0.0
    %2394 = vmatprep.subr.mxu0 0.0
    %2395 = vmatpush1.xpose.msra.mxu0 0.0
    %2396 = vmatprep.subr.mxu0 0.0
    %2397 = vmatpush1.xpose.msra.mxu0 0.0
    %2398 = vmatprep.subr.mxu0 0.0
    %2399 = vmatpush1.xpose.msra.mxu0 0.0
    %2400 = vmatprep.subr.mxu0 0.0
    %2401 = vmatpush1.xpose.msra.mxu0 0.0
    %2402 = vmatprep.subr.mxu0 0.0
    %2403 = vmatpush1.xpose.msra.mxu0 0.0
    %2404 = vmatprep.subr.mxu0 0.0
    %2405 = vmatpush1.xpose.msra.mxu0 0.0
    %2406 = vmatprep.subr.mxu0 0.0
    %2407 = vmatpush1.xpose.msra.mxu0 0.0
    %2408 = vmatprep.subr.mxu0 0.0
    %2409 = vmatpush1.xpose.msra.mxu0 0.0
    %2410 = vmatprep.subr.mxu0 0.0
    %2411 = vmatpush1.xpose.msra.mxu0 0.0
    %2412 = vmatprep.subr.mxu0 0.0
    %2413 = vmatpush1.xpose.msra.mxu0 0.0
    %2414 = vmatprep.subr.mxu0 0.0
    %2415 = vmatpush1.xpose.msra.mxu0 0.0
    %2416 = vmatprep.subr.mxu0 0.0
    %2417 = vmatpush1.xpose.msra.mxu0 0.0
    %2418 = vmatprep.subr.mxu0 0.0
    %2419 = vmatpush1.xpose.msra.mxu0 0.0
    %2420 = vmatprep.subr.mxu0 0.0
    %2421 = vmatpush1.xpose.msra.mxu0 0.0
    %2422 = vmatprep.subr.mxu0 0.0
    %2423 = vmatpush1.xpose.msra.mxu0 0.0
    %2424 = vmatprep.subr.mxu0 0.0
    %2425 = vmatpush1.xpose.msra.mxu0 0.0
    %2426 = vmatprep.subr.mxu0 0.0
    %2427 = vmatpush1.xpose.msra.mxu0 0.0
    %2428 = vmatprep.subr.mxu0 0.0
    %2429 = vmatpush1.xpose.msra.mxu0 0.0
    %2430 = vmatprep.subr.mxu0 0.0
    %2431 = vmatpush1.xpose.msra.mxu0 0.0
    %2432 = vmatprep.subr.mxu0 0.0
    %2433 = vmatpush1.xpose.msra.mxu0 0.0
    %2434 = vmatprep.subr.mxu0 0.0
    %2435 = vmatpush1.xpose.msra.mxu0 0.0
    %2436 = vmatprep.subr.mxu0 0.0
    %2437 = vmatpush1.xpose.msra.mxu0 0.0
    %2438 = vmatprep.subr.mxu0 0.0
    %2439 = vmatpush1.xpose.msra.mxu0 0.0
    %2440 = vmatprep.mubr.f32.mxu0 0.0
    %2441 = vmatmul.mubr.f32.gmra.mrb[0].mxu0 %v2362
    %v2442 = vpop.f32.mrb[0].mxu0
    %v2443 = vadd.f32 0.0, %v2442
    %v2444 = vpop.f32.mrb[0].mxu0
    %2445 = vmatprep.mubr.f32.mxu0 0.0
    %2446 = vmatmul.mubr.f32.gmra.mrb[0].mxu0 %v2365
    %v2447 = vpop.f32.mrb[0].mxu0
    %v2448 = vadd.f32 0.0, %v2447
    %v2449 = vpop.f32.mrb[0].mxu0
    %2450 = vdwg.mxu0
    %v2452 = vsel %vm405, %v1839, 0
    %v2455 = vsel %vm405, %v1844, 0
    %v2458 = vsel %vm405, %v2174, 0
    %v2461 = vsel %vm405, %v2179, 0
    %v2464 = vsel %vm405, %v2184, 0
    %2466 = vmatprep.subr.mxu0 0.0
    %2467 = vmatpush1.xpose.msra.mxu0 %v2458
    %2468 = vmatprep.subr.mxu0 0.0
    %2469 = vmatpush1.xpose.msra.mxu0 %v2461
    %2470 = vmatprep.subr.mxu0 0.0
    %2471 = vmatpush1.xpose.msra.mxu0 %v2464
    %2472 = vmatprep.subr.mxu0 0.0
    %2473 = vmatpush1.xpose.msra.mxu0 0.0
    %2474 = vmatprep.subr.mxu0 0.0
    %2475 = vmatpush1.xpose.msra.mxu0 0.0
    %2476 = vmatprep.subr.mxu0 0.0
    %2477 = vmatpush1.xpose.msra.mxu0 0.0
    %2478 = vmatprep.subr.mxu0 0.0
    %2479 = vmatpush1.xpose.msra.mxu0 0.0
    %2480 = vmatprep.subr.mxu0 0.0
    %2481 = vmatpush1.xpose.msra.mxu0 0.0
    %2482 = vmatprep.subr.mxu0 0.0
    %2483 = vmatpush1.xpose.msra.mxu0 0.0
    %2484 = vmatprep.subr.mxu0 0.0
    %2485 = vmatpush1.xpose.msra.mxu0 0.0
    %2486 = vmatprep.subr.mxu0 0.0
    %2487 = vmatpush1.xpose.msra.mxu0 0.0
    %2488 = vmatprep.subr.mxu0 0.0
    %2489 = vmatpush1.xpose.msra.mxu0 0.0
    %2490 = vmatprep.subr.mxu0 0.0
    %2491 = vmatpush1.xpose.msra.mxu0 0.0
    %2492 = vmatprep.subr.mxu0 0.0
    %2493 = vmatpush1.xpose.msra.mxu0 0.0
    %2494 = vmatprep.subr.mxu0 0.0
    %2495 = vmatpush1.xpose.msra.mxu0 0.0
    %2496 = vmatprep.subr.mxu0 0.0
    %2497 = vmatpush1.xpose.msra.mxu0 0.0
    %2498 = vmatprep.subr.mxu0 0.0
    %2499 = vmatpush1.xpose.msra.mxu0 0.0
    %2500 = vmatprep.subr.mxu0 0.0
    %2501 = vmatpush1.xpose.msra.mxu0 0.0
    %2502 = vmatprep.subr.mxu0 0.0
    %2503 = vmatpush1.xpose.msra.mxu0 0.0
    %2504 = vmatprep.subr.mxu0 0.0
    %2505 = vmatpush1.xpose.msra.mxu0 0.0
    %2506 = vmatprep.subr.mxu0 0.0
    %2507 = vmatpush1.xpose.msra.mxu0 0.0
    %2508 = vmatprep.subr.mxu0 0.0
    %2509 = vmatpush1.xpose.msra.mxu0 0.0
    %2510 = vmatprep.subr.mxu0 0.0
    %2511 = vmatpush1.xpose.msra.mxu0 0.0
    %2512 = vmatprep.subr.mxu0 0.0
    %2513 = vmatpush1.xpose.msra.mxu0 0.0
    %2514 = vmatprep.subr.mxu0 0.0
    %2515 = vmatpush1.xpose.msra.mxu0 0.0
    %2516 = vmatprep.subr.mxu0 0.0
    %2517 = vmatpush1.xpose.msra.mxu0 0.0
    %2518 = vmatprep.subr.mxu0 0.0
    %2519 = vmatpush1.xpose.msra.mxu0 0.0
    %2520 = vmatprep.subr.mxu0 0.0
    %2521 = vmatpush1.xpose.msra.mxu0 0.0
    %2522 = vmatprep.subr.mxu0 0.0
    %2523 = vmatpush1.xpose.msra.mxu0 0.0
    %2524 = vmatprep.subr.mxu0 0.0
    %2525 = vmatpush1.xpose.msra.mxu0 0.0
    %2526 = vmatprep.subr.mxu0 0.0
    %2527 = vmatpush1.xpose.msra.mxu0 0.0
    %2528 = vmatprep.subr.mxu0 0.0
    %2529 = vmatpush1.xpose.msra.mxu0 0.0
    %2530 = vmatprep.mubr.f32.mxu0 0.0
    %2531 = vmatmul.mubr.f32.gmra.mrb[0].mxu0 %v2452
    %v2532 = vpop.f32.mrb[0].mxu0
    %v2533 = vadd.f32 0.0, %v2532
    %v2534 = vpop.f32.mrb[0].mxu0
    %2535 = vmatprep.mubr.f32.mxu0 0.0
    %2536 = vmatmul.mubr.f32.gmra.mrb[0].mxu0 %v2455
    %v2537 = vpop.f32.mrb[0].mxu0
    %v2538 = vadd.f32 0.0, %v2537
    %v2539 = vpop.f32.mrb[0].mxu0
    %2540 = vdwg.mxu0
    %v2542 = vsel %vm405, %v1914, 0
    %v2545 = vsel %vm405, %v1919, 0
    %v2548 = vsel %vm405, %v2254, 0
    %v2551 = vsel %vm405, %v2259, 0
    %v2554 = vsel %vm405, %v2264, 0
    %2556 = vmatprep.subr.mxu0 0.0
    %2557 = vmatpush1.xpose.msra.mxu0 %v2548
    %2558 = vmatprep.subr.mxu0 0.0
    %2559 = vmatpush1.xpose.msra.mxu0 %v2551
    %2560 = vmatprep.subr.mxu0 0.0
    %2561 = vmatpush1.xpose.msra.mxu0 %v2554
    %2562 = vmatprep.subr.mxu0 0.0
    %2563 = vmatpush1.xpose.msra.mxu0 0.0
    %2564 = vmatprep.subr.mxu0 0.0
    %2565 = vmatpush1.xpose.msra.mxu0 0.0
    %2566 = vmatprep.subr.mxu0 0.0
    %2567 = vmatpush1.xpose.msra.mxu0 0.0
    %2568 = vmatprep.subr.mxu0 0.0
    %2569 = vmatpush1.xpose.msra.mxu0 0.0
    %2570 = vmatprep.subr.mxu0 0.0
    %2571 = vmatpush1.xpose.msra.mxu0 0.0
    %2572 = vmatprep.subr.mxu0 0.0
    %2573 = vmatpush1.xpose.msra.mxu0 0.0
    %2574 = vmatprep.subr.mxu0 0.0
    %2575 = vmatpush1.xpose.msra.mxu0 0.0
    %2576 = vmatprep.subr.mxu0 0.0
    %2577 = vmatpush1.xpose.msra.mxu0 0.0
    %2578 = vmatprep.subr.mxu0 0.0
    %2579 = vmatpush1.xpose.msra.mxu0 0.0
    %2580 = vmatprep.subr.mxu0 0.0
    %2581 = vmatpush1.xpose.msra.mxu0 0.0
    %2582 = vmatprep.subr.mxu0 0.0
    %2583 = vmatpush1.xpose.msra.mxu0 0.0
    %2584 = vmatprep.subr.mxu0 0.0
    %2585 = vmatpush1.xpose.msra.mxu0 0.0
    %2586 = vmatprep.subr.mxu0 0.0
    %2587 = vmatpush1.xpose.msra.mxu0 0.0
    %2588 = vmatprep.subr.mxu0 0.0
    %2589 = vmatpush1.xpose.msra.mxu0 0.0
    %2590 = vmatprep.subr.mxu0 0.0
    %2591 = vmatpush1.xpose.msra.mxu0 0.0
    %2592 = vmatprep.subr.mxu0 0.0
    %2593 = vmatpush1.xpose.msra.mxu0 0.0
    %2594 = vmatprep.subr.mxu0 0.0
    %2595 = vmatpush1.xpose.msra.mxu0 0.0
    %2596 = vmatprep.subr.mxu0 0.0
    %2597 = vmatpush1.xpose.msra.mxu0 0.0
    %2598 = vmatprep.subr.mxu0 0.0
    %2599 = vmatpush1.xpose.msra.mxu0 0.0
    %2600 = vmatprep.subr.mxu0 0.0
    %2601 = vmatpush1.xpose.msra.mxu0 0.0
    %2602 = vmatprep.subr.mxu0 0.0
    %2603 = vmatpush1.xpose.msra.mxu0 0.0
    %2604 = vmatprep.subr.mxu0 0.0
    %2605 = vmatpush1.xpose.msra.mxu0 0.0
    %2606 = vmatprep.subr.mxu0 0.0
    %2607 = vmatpush1.xpose.msra.mxu0 0.0
    %2608 = vmatprep.subr.mxu0 0.0
    %2609 = vmatpush1.xpose.msra.mxu0 0.0
    %2610 = vmatprep.subr.mxu0 0.0
    %2611 = vmatpush1.xpose.msra.mxu0 0.0
    %2612 = vmatprep.subr.mxu0 0.0
    %2613 = vmatpush1.xpose.msra.mxu0 0.0
    %2614 = vmatprep.subr.mxu0 0.0
    %2615 = vmatpush1.xpose.msra.mxu0 0.0
    %2616 = vmatprep.subr.mxu0 0.0
    %2617 = vmatpush1.xpose.msra.mxu0 0.0
    %2618 = vmatprep.subr.mxu0 0.0
    %2619 = vmatpush1.xpose.msra.mxu0 0.0
    %2620 = vmatprep.mubr.f32.mxu0 0.0
    %2621 = vmatmul.mubr.f32.gmra.mrb[0].mxu0 %v2542
    %v2622 = vpop.f32.mrb[0].mxu0
    %v2623 = vadd.f32 0.0, %v2622
    %v2624 = vpop.f32.mrb[0].mxu0
    %2625 = vmatprep.mubr.f32.mxu0 0.0
    %2626 = vmatmul.mubr.f32.gmra.mrb[0].mxu0 %v2545
    %v2627 = vpop.f32.mrb[0].mxu0
    %v2628 = vadd.f32 0.0, %v2627
    %v2629 = vpop.f32.mrb[0].mxu0
    %2630 = vdwg.mxu0
    %v2631 = vmul.f32 %v2353, 0.35355338
    %v2632 = vmul.f32 %v2358, 0.35355338
    %v2633 = vmul.f32 %v2443, 0.35355338
    %v2634 = vmul.f32 %v2448, 0.35355338
    %v2635 = vmul.f32 %v2533, 0.35355338
    %v2636 = vmul.f32 %v2538, 0.35355338
    %v2637 = vmul.f32 %v2623, 0.35355338
    %v2638 = vmul.f32 %v2628, 0.35355338
    %vm2639 = vcmp.gt.f32.partialorder %v70, 0.5
    %vm2640 = vcmp.gt.f32.partialorder %v71, 0.5
    %v2641 = vsel %vm2639, 1, 0
    %v2642 = vsel %vm2640, 1, 0
    %vm2643 = vcmp.eq.s32.totalorder %v2641, 1
    %vm2644 = vcmp.eq.s32.totalorder %v2642, 1
    %v2645 = vsel %vm2643, %v2631, -1000000.0
    %v2646 = vsel %vm2644, %v2632, -1000000.0
    %v2647 = vsel %vm2643, %v2633, -1000000.0
    %v2648 = vsel %vm2644, %v2634, -1000000.0
    %v2649 = vsel %vm2643, %v2635, -1000000.0
    %v2650 = vsel %vm2644, %v2636, -1000000.0
    %v2651 = vsel %vm2643, %v2637, -1000000.0
    %v2652 = vsel %vm2644, %v2638, -1000000.0
    %vm2653 = vcmask 162816
    %v2654 = vsel %vm2653, %v2645, -inf
    %2655 = vmax.xlane.f32.xlu0 %v2654
    %v2656 = vpop.xlane.xlu0 %2655
    %v2657 = vsel %vm2653, %v2646, -inf
    %2658 = vmax.xlane.f32.xlu0 %v2657
    %v2659 = vpop.xlane.xlu0 %2658
    %v2660 = vsel %vm2653, %v2647, -inf
    %2661 = vmax.xlane.f32.xlu0 %v2660
    %v2662 = vpop.xlane.xlu0 %2661
    %v2663 = vsel %vm2653, %v2648, -inf
    %2664 = vmax.xlane.f32.xlu0 %v2663
    %v2665 = vpop.xlane.xlu0 %2664
    %v2666 = vsel %vm2653, %v2649, -inf
    %2667 = vmax.xlane.f32.xlu0 %v2666
    %v2668 = vpop.xlane.xlu0 %2667
    %v2669 = vsel %vm2653, %v2650, -inf
    %2670 = vmax.xlane.f32.xlu0 %v2669
    %v2671 = vpop.xlane.xlu0 %2670
    %v2672 = vsel %vm2653, %v2651, -inf
    %2673 = vmax.xlane.f32.xlu0 %v2672
    %v2674 = vpop.xlane.xlu0 %2673
    %v2675 = vsel %vm2653, %v2652, -inf
    %2676 = vmax.xlane.f32.xlu0 %v2675
    %v2677 = vpop.xlane.xlu0 %2676
    %v2678 = vsub.f32 %v2645, %v2656
    %v2679 = vsub.f32 %v2646, %v2659
    %v2680 = vsub.f32 %v2647, %v2662
    %v2681 = vsub.f32 %v2648, %v2665
    %v2682 = vsub.f32 %v2649, %v2668
    %v2683 = vsub.f32 %v2650, %v2671
    %v2684 = vsub.f32 %v2651, %v2674
    %v2685 = vsub.f32 %v2652, %v2677
    %v2686 = vmul.f32 %v2678, 1.442695
    %v2687 = vpow.pop %v2686
    %v2688 = vmul.f32 %v2679, 1.442695
    %v2689 = vpow.pop %v2688
    %v2690 = vmul.f32 %v2680, 1.442695
    %v2691 = vpow.pop %v2690
    %v2692 = vmul.f32 %v2681, 1.442695
    %v2693 = vpow.pop %v2692
    %v2694 = vmul.f32 %v2682, 1.442695
    %v2695 = vpow.pop %v2694
    %v2696 = vmul.f32 %v2683, 1.442695
    %v2697 = vpow.pop %v2696
    %v2698 = vmul.f32 %v2684, 1.442695
    %v2699 = vpow.pop %v2698
    %v2700 = vmul.f32 %v2685, 1.442695
    %v2701 = vpow.pop %v2700
    %v2702 = vsel %vm2653, %v2687, 0.0
    %2703 = vadd.xlane.f32.xlu0 %v2702
    %v2704 = vpop.xlane.xlu0 %2703
    %v2705 = vsel %vm2653, %v2689, 0.0
    %2706 = vadd.xlane.f32.xlu0 %v2705
    %v2707 = vpop.xlane.xlu0 %2706
    %v2708 = vsel %vm2653, %v2691, 0.0
    %2709 = vadd.xlane.f32.xlu0 %v2708
    %v2710 = vpop.xlane.xlu0 %2709
    %v2711 = vsel %vm2653, %v2693, 0.0
    %2712 = vadd.xlane.f32.xlu0 %v2711
    %v2713 = vpop.xlane.xlu0 %2712
    %v2714 = vsel %vm2653, %v2695, 0.0
    %2715 = vadd.xlane.f32.xlu0 %v2714
    %v2716 = vpop.xlane.xlu0 %2715
    %v2717 = vsel %vm2653, %v2697, 0.0
    %2718 = vadd.xlane.f32.xlu0 %v2717
    %v2719 = vpop.xlane.xlu0 %2718
    %v2720 = vsel %vm2653, %v2699, 0.0
    %2721 = vadd.xlane.f32.xlu0 %v2720
    %v2722 = vpop.xlane.xlu0 %2721
    %v2723 = vsel %vm2653, %v2701, 0.0
    %2724 = vadd.xlane.f32.xlu0 %v2723
    %v2725 = vpop.xlane.xlu0 %2724
    %v2726 = vrcp.pop %v2704
    %v2727 = vrcp.pop %v2707
    %v2728 = vrcp.pop %v2710
    %v2729 = vrcp.pop %v2713
    %v2730 = vrcp.pop %v2716
    %v2731 = vrcp.pop %v2719
    %v2732 = vrcp.pop %v2722
    %v2733 = vrcp.pop %v2725
    %v2734 = vmul.f32 %v2687, %v2726
    %v2735 = vmul.f32 %v2689, %v2727
    %v2736 = vmul.f32 %v2691, %v2728
    %v2737 = vmul.f32 %v2693, %v2729
    %v2738 = vmul.f32 %v2695, %v2730
    %v2739 = vmul.f32 %v2697, %v2731
    %v2740 = vmul.f32 %v2699, %v2732
    %v2741 = vmul.f32 %v2701, %v2733
    %2742 = vrot.lane.b32.xlu0 %v2014, 120
    %v2743 = vpop.permute.xlu0 %2742
    %2744 = vrot.lane.b32.xlu0 %v2019, 120
    %v2745 = vpop.permute.xlu0 %2744
    %2746 = vrot.lane.b32.xlu0 %v2024, 120
    %v2747 = vpop.permute.xlu0 %2746
    %v2751 = vsel %vm2653, %v2734, 0
    %v2754 = vsel %vm2653, %v2735, 0
    %vm2756 = vcmask 1043456
    %v2757 = vsel %vm2756, %v2747, 0
    %2759 = vmatprep.subr.mxu0 0.0
    %2760 = vmatpush1.msra.mxu0 %v2743
    %2761 = vmatprep.subr.mxu0 0.0
    %2762 = vmatpush1.msra.mxu0 %v2745
    %2763 = vmatprep.subr.mxu0 0.0
    %2764 = vmatpush1.msra.mxu0 %v2757
    %2765 = vmatprep.subr.mxu0 0.0
    %2766 = vmatpush1.msra.mxu0 0.0
    %2767 = vmatprep.subr.mxu0 0.0
    %2768 = vmatpush1.msra.mxu0 0.0
    %2769 = vmatprep.subr.mxu0 0.0
    %2770 = vmatpush1.msra.mxu0 0.0
    %2771 = vmatprep.subr.mxu0 0.0
    %2772 = vmatpush1.msra.mxu0 0.0
    %2773 = vmatprep.subr.mxu0 0.0
    %2774 = vmatpush1.msra.mxu0 0.0
    %2775 = vmatprep.subr.mxu0 0.0
    %2776 = vmatpush1.msra.mxu0 0.0
    %2777 = vmatprep.subr.mxu0 0.0
    %2778 = vmatpush1.msra.mxu0 0.0
    %2779 = vmatprep.subr.mxu0 0.0
    %2780 = vmatpush1.msra.mxu0 0.0
    %2781 = vmatprep.subr.mxu0 0.0
    %2782 = vmatpush1.msra.mxu0 0.0
    %2783 = vmatprep.subr.mxu0 0.0
    %2784 = vmatpush1.msra.mxu0 0.0
    %2785 = vmatprep.subr.mxu0 0.0
    %2786 = vmatpush1.msra.mxu0 0.0
    %2787 = vmatprep.subr.mxu0 0.0
    %2788 = vmatpush1.msra.mxu0 0.0
    %2789 = vmatprep.subr.mxu0 0.0
    %2790 = vmatpush1.msra.mxu0 0.0
    %2791 = vmatprep.subr.mxu0 0.0
    %2792 = vmatpush1.msra.mxu0 0.0
    %2793 = vmatprep.subr.mxu0 0.0
    %2794 = vmatpush1.msra.mxu0 0.0
    %2795 = vmatprep.subr.mxu0 0.0
    %2796 = vmatpush1.msra.mxu0 0.0
    %2797 = vmatprep.subr.mxu0 0.0
    %2798 = vmatpush1.msra.mxu0 0.0
    %2799 = vmatprep.subr.mxu0 0.0
    %2800 = vmatpush1.msra.mxu0 0.0
    %2801 = vmatprep.subr.mxu0 0.0
    %2802 = vmatpush1.msra.mxu0 0.0
    %2803 = vmatprep.subr.mxu0 0.0
    %2804 = vmatpush1.msra.mxu0 0.0
    %2805 = vmatprep.subr.mxu0 0.0
    %2806 = vmatpush1.msra.mxu0 0.0
    %2807 = vmatprep.subr.mxu0 0.0
    %2808 = vmatpush1.msra.mxu0 0.0
    %2809 = vmatprep.subr.mxu0 0.0
    %2810 = vmatpush1.msra.mxu0 0.0
    %2811 = vmatprep.subr.mxu0 0.0
    %2812 = vmatpush1.msra.mxu0 0.0
    %2813 = vmatprep.subr.mxu0 0.0
    %2814 = vmatpush1.msra.mxu0 0.0
    %2815 = vmatprep.subr.mxu0 0.0
    %2816 = vmatpush1.msra.mxu0 0.0
    %2817 = vmatprep.subr.mxu0 0.0
    %2818 = vmatpush1.msra.mxu0 0.0
    %2819 = vmatprep.subr.mxu0 0.0
    %2820 = vmatpush1.msra.mxu0 0.0
    %2821 = vmatprep.subr.mxu0 0.0
    %2822 = vmatpush1.msra.mxu0 0.0
    %2823 = vmatprep.mubr.f32.mxu0 0.0
    %2824 = vmatmul.mubr.f32.gmra.mrb[0].mxu0 %v2751
    %v2825 = vpop.f32.mrb[0].mxu0
    %v2826 = vadd.f32 0.0, %v2825
    %v2827 = vpop.f32.mrb[0].mxu0
    %2828 = vmatprep.mubr.f32.mxu0 0.0
    %2829 = vmatmul.mubr.f32.gmra.mrb[0].mxu0 %v2754
    %v2830 = vpop.f32.mrb[0].mxu0
    %v2831 = vadd.f32 0.0, %v2830
    %v2832 = vpop.f32.mrb[0].mxu0
    %2833 = vdwg.mxu0
    %2834 = vrot.lane.b32.xlu0 %v2094, 120
    %v2835 = vpop.permute.xlu0 %2834
    %2836 = vrot.lane.b32.xlu0 %v2099, 120
    %v2837 = vpop.permute.xlu0 %2836
    %2838 = vrot.lane.b32.xlu0 %v2104, 120
    %v2839 = vpop.permute.xlu0 %2838
    %v2843 = vsel %vm2653, %v2736, 0
    %v2846 = vsel %vm2653, %v2737, 0
    %v2848 = vsel %vm2756, %v2839, 0
    %2850 = vmatprep.subr.mxu0 0.0
    %2851 = vmatpush1.msra.mxu0 %v2835
    %2852 = vmatprep.subr.mxu0 0.0
    %2853 = vmatpush1.msra.mxu0 %v2837
    %2854 = vmatprep.subr.mxu0 0.0
    %2855 = vmatpush1.msra.mxu0 %v2848
    %2856 = vmatprep.subr.mxu0 0.0
    %2857 = vmatpush1.msra.mxu0 0.0
    %2858 = vmatprep.subr.mxu0 0.0
    %2859 = vmatpush1.msra.mxu0 0.0
    %2860 = vmatprep.subr.mxu0 0.0
    %2861 = vmatpush1.msra.mxu0 0.0
    %2862 = vmatprep.subr.mxu0 0.0
    %2863 = vmatpush1.msra.mxu0 0.0
    %2864 = vmatprep.subr.mxu0 0.0
    %2865 = vmatpush1.msra.mxu0 0.0
    %2866 = vmatprep.subr.mxu0 0.0
    %2867 = vmatpush1.msra.mxu0 0.0
    %2868 = vmatprep.subr.mxu0 0.0
    %2869 = vmatpush1.msra.mxu0 0.0
    %2870 = vmatprep.subr.mxu0 0.0
    %2871 = vmatpush1.msra.mxu0 0.0
    %2872 = vmatprep.subr.mxu0 0.0
    %2873 = vmatpush1.msra.mxu0 0.0
    %2874 = vmatprep.subr.mxu0 0.0
    %2875 = vmatpush1.msra.mxu0 0.0
    %2876 = vmatprep.subr.mxu0 0.0
    %2877 = vmatpush1.msra.mxu0 0.0
    %2878 = vmatprep.subr.mxu0 0.0
    %2879 = vmatpush1.msra.mxu0 0.0
    %2880 = vmatprep.subr.mxu0 0.0
    %2881 = vmatpush1.msra.mxu0 0.0
    %2882 = vmatprep.subr.mxu0 0.0
    %2883 = vmatpush1.msra.mxu0 0.0
    %2884 = vmatprep.subr.mxu0 0.0
    %2885 = vmatpush1.msra.mxu0 0.0
    %2886 = vmatprep.subr.mxu0 0.0
    %2887 = vmatpush1.msra.mxu0 0.0
    %2888 = vmatprep.subr.mxu0 0.0
    %2889 = vmatpush1.msra.mxu0 0.0
    %2890 = vmatprep.subr.mxu0 0.0
    %2891 = vmatpush1.msra.mxu0 0.0
    %2892 = vmatprep.subr.mxu0 0.0
    %2893 = vmatpush1.msra.mxu0 0.0
    %2894 = vmatprep.subr.mxu0 0.0
    %2895 = vmatpush1.msra.mxu0 0.0
    %2896 = vmatprep.subr.mxu0 0.0
    %2897 = vmatpush1.msra.mxu0 0.0
    %2898 = vmatprep.subr.mxu0 0.0
    %2899 = vmatpush1.msra.mxu0 0.0
    %2900 = vmatprep.subr.mxu0 0.0
    %2901 = vmatpush1.msra.mxu0 0.0
    %2902 = vmatprep.subr.mxu0 0.0
    %2903 = vmatpush1.msra.mxu0 0.0
    %2904 = vmatprep.subr.mxu0 0.0
    %2905 = vmatpush1.msra.mxu0 0.0
    %2906 = vmatprep.subr.mxu0 0.0
    %2907 = vmatpush1.msra.mxu0 0.0
    %2908 = vmatprep.subr.mxu0 0.0
    %2909 = vmatpush1.msra.mxu0 0.0
    %2910 = vmatprep.subr.mxu0 0.0
    %2911 = vmatpush1.msra.mxu0 0.0
    %2912 = vmatprep.subr.mxu0 0.0
    %2913 = vmatpush1.msra.mxu0 0.0
    %2914 = vmatprep.mubr.f32.mxu0 0.0
    %2915 = vmatmul.mubr.f32.gmra.mrb[0].mxu0 %v2843
    %v2916 = vpop.f32.mrb[0].mxu0
    %v2917 = vadd.f32 0.0, %v2916
    %v2918 = vpop.f32.mrb[0].mxu0
    %2919 = vmatprep.mubr.f32.mxu0 0.0
    %2920 = vmatmul.mubr.f32.gmra.mrb[0].mxu0 %v2846
    %v2921 = vpop.f32.mrb[0].mxu0
    %v2922 = vadd.f32 0.0, %v2921
    %v2923 = vpop.f32.mrb[0].mxu0
    %2924 = vdwg.mxu0
    %2925 = vrot.lane.b32.xlu0 %v2174, 120
    %v2926 = vpop.permute.xlu0 %2925
    %2927 = vrot.lane.b32.xlu0 %v2179, 120
    %v2928 = vpop.permute.xlu0 %2927
    %2929 = vrot.lane.b32.xlu0 %v2184, 120
    %v2930 = vpop.permute.xlu0 %2929
    %v2934 = vsel %vm2653, %v2738, 0
    %v2937 = vsel %vm2653, %v2739, 0
    %v2939 = vsel %vm2756, %v2930, 0
    %2941 = vmatprep.subr.mxu0 0.0
    %2942 = vmatpush1.msra.mxu0 %v2926
    %2943 = vmatprep.subr.mxu0 0.0
    %2944 = vmatpush1.msra.mxu0 %v2928
    %2945 = vmatprep.subr.mxu0 0.0
    %2946 = vmatpush1.msra.mxu0 %v2939
    %2947 = vmatprep.subr.mxu0 0.0
    %2948 = vmatpush1.msra.mxu0 0.0
    %2949 = vmatprep.subr.mxu0 0.0
    %2950 = vmatpush1.msra.mxu0 0.0
    %2951 = vmatprep.subr.mxu0 0.0
    %2952 = vmatpush1.msra.mxu0 0.0
    %2953 = vmatprep.subr.mxu0 0.0
    %2954 = vmatpush1.msra.mxu0 0.0
    %2955 = vmatprep.subr.mxu0 0.0
    %2956 = vmatpush1.msra.mxu0 0.0
    %2957 = vmatprep.subr.mxu0 0.0
    %2958 = vmatpush1.msra.mxu0 0.0
    %2959 = vmatprep.subr.mxu0 0.0
    %2960 = vmatpush1.msra.mxu0 0.0
    %2961 = vmatprep.subr.mxu0 0.0
    %2962 = vmatpush1.msra.mxu0 0.0
    %2963 = vmatprep.subr.mxu0 0.0
    %2964 = vmatpush1.msra.mxu0 0.0
    %2965 = vmatprep.subr.mxu0 0.0
    %2966 = vmatpush1.msra.mxu0 0.0
    %2967 = vmatprep.subr.mxu0 0.0
    %2968 = vmatpush1.msra.mxu0 0.0
    %2969 = vmatprep.subr.mxu0 0.0
    %2970 = vmatpush1.msra.mxu0 0.0
    %2971 = vmatprep.subr.mxu0 0.0
    %2972 = vmatpush1.msra.mxu0 0.0
    %2973 = vmatprep.subr.mxu0 0.0
    %2974 = vmatpush1.msra.mxu0 0.0
    %2975 = vmatprep.subr.mxu0 0.0
    %2976 = vmatpush1.msra.mxu0 0.0
    %2977 = vmatprep.subr.mxu0 0.0
    %2978 = vmatpush1.msra.mxu0 0.0
    %2979 = vmatprep.subr.mxu0 0.0
    %2980 = vmatpush1.msra.mxu0 0.0
    %2981 = vmatprep.subr.mxu0 0.0
    %2982 = vmatpush1.msra.mxu0 0.0
    %2983 = vmatprep.subr.mxu0 0.0
    %2984 = vmatpush1.msra.mxu0 0.0
    %2985 = vmatprep.subr.mxu0 0.0
    %2986 = vmatpush1.msra.mxu0 0.0
    %2987 = vmatprep.subr.mxu0 0.0
    %2988 = vmatpush1.msra.mxu0 0.0
    %2989 = vmatprep.subr.mxu0 0.0
    %2990 = vmatpush1.msra.mxu0 0.0
    %2991 = vmatprep.subr.mxu0 0.0
    %2992 = vmatpush1.msra.mxu0 0.0
    %2993 = vmatprep.subr.mxu0 0.0
    %2994 = vmatpush1.msra.mxu0 0.0
    %2995 = vmatprep.subr.mxu0 0.0
    %2996 = vmatpush1.msra.mxu0 0.0
    %2997 = vmatprep.subr.mxu0 0.0
    %2998 = vmatpush1.msra.mxu0 0.0
    %2999 = vmatprep.subr.mxu0 0.0
    %3000 = vmatpush1.msra.mxu0 0.0
    %3001 = vmatprep.subr.mxu0 0.0
    %3002 = vmatpush1.msra.mxu0 0.0
    %3003 = vmatprep.subr.mxu0 0.0
    %3004 = vmatpush1.msra.mxu0 0.0
    %3005 = vmatprep.mubr.f32.mxu0 0.0
    %3006 = vmatmul.mubr.f32.gmra.mrb[0].mxu0 %v2934
    %v3007 = vpop.f32.mrb[0].mxu0
    %v3008 = vadd.f32 0.0, %v3007
    %v3009 = vpop.f32.mrb[0].mxu0
    %3010 = vmatprep.mubr.f32.mxu0 0.0
    %3011 = vmatmul.mubr.f32.gmra.mrb[0].mxu0 %v2937
    %v3012 = vpop.f32.mrb[0].mxu0
    %v3013 = vadd.f32 0.0, %v3012
    %v3014 = vpop.f32.mrb[0].mxu0
    %3015 = vdwg.mxu0
    %3016 = vrot.lane.b32.xlu0 %v2254, 120
    %v3017 = vpop.permute.xlu0 %3016
    %3018 = vrot.lane.b32.xlu0 %v2259, 120
    %v3019 = vpop.permute.xlu0 %3018
    %3020 = vrot.lane.b32.xlu0 %v2264, 120
    %v3021 = vpop.permute.xlu0 %3020
    %v3025 = vsel %vm2653, %v2740, 0
    %v3028 = vsel %vm2653, %v2741, 0
    %v3030 = vsel %vm2756, %v3021, 0
    %3032 = vmatprep.subr.mxu0 0.0
    %3033 = vmatpush1.msra.mxu0 %v3017
    %3034 = vmatprep.subr.mxu0 0.0
    %3035 = vmatpush1.msra.mxu0 %v3019
    %3036 = vmatprep.subr.mxu0 0.0
    %3037 = vmatpush1.msra.mxu0 %v3030
    %3038 = vmatprep.subr.mxu0 0.0
    %3039 = vmatpush1.msra.mxu0 0.0
    %3040 = vmatprep.subr.mxu0 0.0
    %3041 = vmatpush1.msra.mxu0 0.0
    %3042 = vmatprep.subr.mxu0 0.0
    %3043 = vmatpush1.msra.mxu0 0.0
    %3044 = vmatprep.subr.mxu0 0.0
    %3045 = vmatpush1.msra.mxu0 0.0
    %3046 = vmatprep.subr.mxu0 0.0
    %3047 = vmatpush1.msra.mxu0 0.0
    %3048 = vmatprep.subr.mxu0 0.0
    %3049 = vmatpush1.msra.mxu0 0.0
    %3050 = vmatprep.subr.mxu0 0.0
    %3051 = vmatpush1.msra.mxu0 0.0
    %3052 = vmatprep.subr.mxu0 0.0
    %3053 = vmatpush1.msra.mxu0 0.0
    %3054 = vmatprep.subr.mxu0 0.0
    %3055 = vmatpush1.msra.mxu0 0.0
    %3056 = vmatprep.subr.mxu0 0.0
    %3057 = vmatpush1.msra.mxu0 0.0
    %3058 = vmatprep.subr.mxu0 0.0
    %3059 = vmatpush1.msra.mxu0 0.0
    %3060 = vmatprep.subr.mxu0 0.0
    %3061 = vmatpush1.msra.mxu0 0.0
    %3062 = vmatprep.subr.mxu0 0.0
    %3063 = vmatpush1.msra.mxu0 0.0
    %3064 = vmatprep.subr.mxu0 0.0
    %3065 = vmatpush1.msra.mxu0 0.0
    %3066 = vmatprep.subr.mxu0 0.0
    %3067 = vmatpush1.msra.mxu0 0.0
    %3068 = vmatprep.subr.mxu0 0.0
    %3069 = vmatpush1.msra.mxu0 0.0
    %3070 = vmatprep.subr.mxu0 0.0
    %3071 = vmatpush1.msra.mxu0 0.0
    %3072 = vmatprep.subr.mxu0 0.0
    %3073 = vmatpush1.msra.mxu0 0.0
    %3074 = vmatprep.subr.mxu0 0.0
    %3075 = vmatpush1.msra.mxu0 0.0
    %3076 = vmatprep.subr.mxu0 0.0
    %3077 = vmatpush1.msra.mxu0 0.0
    %3078 = vmatprep.subr.mxu0 0.0
    %3079 = vmatpush1.msra.mxu0 0.0
    %3080 = vmatprep.subr.mxu0 0.0
    %3081 = vmatpush1.msra.mxu0 0.0
    %3082 = vmatprep.subr.mxu0 0.0
    %3083 = vmatpush1.msra.mxu0 0.0
    %3084 = vmatprep.subr.mxu0 0.0
    %3085 = vmatpush1.msra.mxu0 0.0
    %3086 = vmatprep.subr.mxu0 0.0
    %3087 = vmatpush1.msra.mxu0 0.0
    %3088 = vmatprep.subr.mxu0 0.0
    %3089 = vmatpush1.msra.mxu0 0.0
    %3090 = vmatprep.subr.mxu0 0.0
    %3091 = vmatpush1.msra.mxu0 0.0
    %3092 = vmatprep.subr.mxu0 0.0
    %3093 = vmatpush1.msra.mxu0 0.0
    %3094 = vmatprep.subr.mxu0 0.0
    %3095 = vmatpush1.msra.mxu0 0.0
    %3096 = vmatprep.mubr.f32.mxu0 0.0
    %3097 = vmatmul.mubr.f32.gmra.mrb[0].mxu0 %v3025
    %v3098 = vpop.f32.mrb[0].mxu0
    %v3099 = vadd.f32 0.0, %v3098
    %v3100 = vpop.f32.mrb[0].mxu0
    %3101 = vmatprep.mubr.f32.mxu0 0.0
    %3102 = vmatmul.mubr.f32.gmra.mrb[0].mxu0 %v3028
    %v3103 = vpop.f32.mrb[0].mxu0
    %v3104 = vadd.f32 0.0, %v3103
    %v3105 = vpop.f32.mrb[0].mxu0
    %3106 = vdwg.mxu0
    %v3108 = vsel %vm405, %v2826, 0
    %v3111 = vsel %vm405, %v2831, 0
    %3113 = vmatprep.subr.mxu0 0.0
    %3114 = vmatpush1.msra.mxu0 %v2267
    %3115 = vmatprep.subr.mxu0 0.0
    %3116 = vmatpush1.msra.mxu0 0.0
    %3117 = vmatprep.subr.mxu0 0.0
    %3118 = vmatpush1.msra.mxu0 0.0
    %3119 = vmatprep.subr.mxu0 0.0
    %3120 = vmatpush1.msra.mxu0 0.0
    %3121 = vmatprep.subr.mxu0 0.0
    %3122 = vmatpush1.msra.mxu0 0.0
    %3123 = vmatprep.subr.mxu0 0.0
    %3124 = vmatpush1.msra.mxu0 0.0
    %3125 = vmatprep.subr.mxu0 0.0
    %3126 = vmatpush1.msra.mxu0 0.0
    %3127 = vmatprep.subr.mxu0 0.0
    %3128 = vmatpush1.msra.mxu0 0.0
    %3129 = vmatprep.subr.mxu0 0.0
    %3130 = vmatpush1.msra.mxu0 0.0
    %3131 = vmatprep.subr.mxu0 0.0
    %3132 = vmatpush1.msra.mxu0 0.0
    %3133 = vmatprep.subr.mxu0 0.0
    %3134 = vmatpush1.msra.mxu0 0.0
    %3135 = vmatprep.subr.mxu0 0.0
    %3136 = vmatpush1.msra.mxu0 0.0
    %3137 = vmatprep.subr.mxu0 0.0
    %3138 = vmatpush1.msra.mxu0 0.0
    %3139 = vmatprep.subr.mxu0 0.0
    %3140 = vmatpush1.msra.mxu0 0.0
    %3141 = vmatprep.subr.mxu0 0.0
    %3142 = vmatpush1.msra.mxu0 0.0
    %3143 = vmatprep.subr.mxu0 0.0
    %3144 = vmatpush1.msra.mxu0 0.0
    %3145 = vmatprep.subr.mxu0 0.0
    %3146 = vmatpush1.msra.mxu0 0.0
    %3147 = vmatprep.subr.mxu0 0.0
    %3148 = vmatpush1.msra.mxu0 0.0
    %3149 = vmatprep.subr.mxu0 0.0
    %3150 = vmatpush1.msra.mxu0 0.0
    %3151 = vmatprep.subr.mxu0 0.0
    %3152 = vmatpush1.msra.mxu0 0.0
    %3153 = vmatprep.subr.mxu0 0.0
    %3154 = vmatpush1.msra.mxu0 0.0
    %3155 = vmatprep.subr.mxu0 0.0
    %3156 = vmatpush1.msra.mxu0 0.0
    %3157 = vmatprep.subr.mxu0 0.0
    %3158 = vmatpush1.msra.mxu0 0.0
    %3159 = vmatprep.subr.mxu0 0.0
    %3160 = vmatpush1.msra.mxu0 0.0
    %3161 = vmatprep.subr.mxu0 0.0
    %3162 = vmatpush1.msra.mxu0 0.0
    %3163 = vmatprep.subr.mxu0 0.0
    %3164 = vmatpush1.msra.mxu0 0.0
    %3165 = vmatprep.subr.mxu0 0.0
    %3166 = vmatpush1.msra.mxu0 0.0
    %3167 = vmatprep.subr.mxu0 0.0
    %3168 = vmatpush1.msra.mxu0 0.0
    %3169 = vmatprep.subr.mxu0 0.0
    %3170 = vmatpush1.msra.mxu0 0.0
    %3171 = vmatprep.subr.mxu0 0.0
    %3172 = vmatpush1.msra.mxu0 0.0
    %3173 = vmatprep.subr.mxu0 0.0
    %3174 = vmatpush1.msra.mxu0 0.0
    %3175 = vmatprep.subr.mxu0 0.0
    %3176 = vmatpush1.msra.mxu0 0.0
    %3177 = vmatprep.mubr.f32.mxu0 0.0
    %3178 = vmatmul.mubr.f32.gmra.mrb[0].mxu0 %v3108
    %v3179 = vpop.f32.mrb[0].mxu0
    %v3180 = vadd.f32 0.0, %v3179
    %v3181 = vpop.f32.mrb[0].mxu0
    %3182 = vmatprep.mubr.f32.mxu0 0.0
    %3183 = vmatmul.mubr.f32.gmra.mrb[0].mxu0 %v3111
    %v3184 = vpop.f32.mrb[0].mxu0
    %v3185 = vadd.f32 0.0, %v3184
    %v3186 = vpop.f32.mrb[0].mxu0
    %3187 = vdwg.mxu0
    %v3189 = vsel %vm405, %v2917, 0
    %v3192 = vsel %vm405, %v2922, 0
    %3194 = vmatprep.subr.mxu0 0.0
    %3195 = vmatpush1.msra.mxu0 %v2268
    %3196 = vmatprep.subr.mxu0 0.0
    %3197 = vmatpush1.msra.mxu0 0.0
    %3198 = vmatprep.subr.mxu0 0.0
    %3199 = vmatpush1.msra.mxu0 0.0
    %3200 = vmatprep.subr.mxu0 0.0
    %3201 = vmatpush1.msra.mxu0 0.0
    %3202 = vmatprep.subr.mxu0 0.0
    %3203 = vmatpush1.msra.mxu0 0.0
    %3204 = vmatprep.subr.mxu0 0.0
    %3205 = vmatpush1.msra.mxu0 0.0
    %3206 = vmatprep.subr.mxu0 0.0
    %3207 = vmatpush1.msra.mxu0 0.0
    %3208 = vmatprep.subr.mxu0 0.0
    %3209 = vmatpush1.msra.mxu0 0.0
    %3210 = vmatprep.subr.mxu0 0.0
    %3211 = vmatpush1.msra.mxu0 0.0
    %3212 = vmatprep.subr.mxu0 0.0
    %3213 = vmatpush1.msra.mxu0 0.0
    %3214 = vmatprep.subr.mxu0 0.0
    %3215 = vmatpush1.msra.mxu0 0.0
    %3216 = vmatprep.subr.mxu0 0.0
    %3217 = vmatpush1.msra.mxu0 0.0
    %3218 = vmatprep.subr.mxu0 0.0
    %3219 = vmatpush1.msra.mxu0 0.0
    %3220 = vmatprep.subr.mxu0 0.0
    %3221 = vmatpush1.msra.mxu0 0.0
    %3222 = vmatprep.subr.mxu0 0.0
    %3223 = vmatpush1.msra.mxu0 0.0
    %3224 = vmatprep.subr.mxu0 0.0
    %3225 = vmatpush1.msra.mxu0 0.0
    %3226 = vmatprep.subr.mxu0 0.0
    %3227 = vmatpush1.msra.mxu0 0.0
    %3228 = vmatprep.subr.mxu0 0.0
    %3229 = vmatpush1.msra.mxu0 0.0
    %3230 = vmatprep.subr.mxu0 0.0
    %3231 = vmatpush1.msra.mxu0 0.0
    %3232 = vmatprep.subr.mxu0 0.0
    %3233 = vmatpush1.msra.mxu0 0.0
    %3234 = vmatprep.subr.mxu0 0.0
    %3235 = vmatpush1.msra.mxu0 0.0
    %3236 = vmatprep.subr.mxu0 0.0
    %3237 = vmatpush1.msra.mxu0 0.0
    %3238 = vmatprep.subr.mxu0 0.0
    %3239 = vmatpush1.msra.mxu0 0.0
    %3240 = vmatprep.subr.mxu0 0.0
    %3241 = vmatpush1.msra.mxu0 0.0
    %3242 = vmatprep.subr.mxu0 0.0
    %3243 = vmatpush1.msra.mxu0 0.0
    %3244 = vmatprep.subr.mxu0 0.0
    %3245 = vmatpush1.msra.mxu0 0.0
    %3246 = vmatprep.subr.mxu0 0.0
    %3247 = vmatpush1.msra.mxu0 0.0
    %3248 = vmatprep.subr.mxu0 0.0
    %3249 = vmatpush1.msra.mxu0 0.0
    %3250 = vmatprep.subr.mxu0 0.0
    %3251 = vmatpush1.msra.mxu0 0.0
    %3252 = vmatprep.subr.mxu0 0.0
    %3253 = vmatpush1.msra.mxu0 0.0
    %3254 = vmatprep.subr.mxu0 0.0
    %3255 = vmatpush1.msra.mxu0 0.0
    %3256 = vmatprep.subr.mxu0 0.0
    %3257 = vmatpush1.msra.mxu0 0.0
    %3258 = vmatprep.mubr.f32.mxu0 0.0
    %3259 = vmatmul.mubr.f32.gmra.mrb[0].mxu0 %v3189
    %v3260 = vpop.f32.mrb[0].mxu0
    %v3261 = vadd.f32 0.0, %v3260
    %v3262 = vpop.f32.mrb[0].mxu0
    %3263 = vmatprep.mubr.f32.mxu0 0.0
    %3264 = vmatmul.mubr.f32.gmra.mrb[0].mxu0 %v3192
    %v3265 = vpop.f32.mrb[0].mxu0
    %v3266 = vadd.f32 0.0, %v3265
    %v3267 = vpop.f32.mrb[0].mxu0
    %3268 = vdwg.mxu0
    %v3270 = vsel %vm405, %v3008, 0
    %v3273 = vsel %vm405, %v3013, 0
    %3275 = vmatprep.subr.mxu0 0.0
    %3276 = vmatpush1.msra.mxu0 %v2269
    %3277 = vmatprep.subr.mxu0 0.0
    %3278 = vmatpush1.msra.mxu0 0.0
    %3279 = vmatprep.subr.mxu0 0.0
    %3280 = vmatpush1.msra.mxu0 0.0
    %3281 = vmatprep.subr.mxu0 0.0
    %3282 = vmatpush1.msra.mxu0 0.0
    %3283 = vmatprep.subr.mxu0 0.0
    %3284 = vmatpush1.msra.mxu0 0.0
    %3285 = vmatprep.subr.mxu0 0.0
    %3286 = vmatpush1.msra.mxu0 0.0
    %3287 = vmatprep.subr.mxu0 0.0
    %3288 = vmatpush1.msra.mxu0 0.0
    %3289 = vmatprep.subr.mxu0 0.0
    %3290 = vmatpush1.msra.mxu0 0.0
    %3291 = vmatprep.subr.mxu0 0.0
    %3292 = vmatpush1.msra.mxu0 0.0
    %3293 = vmatprep.subr.mxu0 0.0
    %3294 = vmatpush1.msra.mxu0 0.0
    %3295 = vmatprep.subr.mxu0 0.0
    %3296 = vmatpush1.msra.mxu0 0.0
    %3297 = vmatprep.subr.mxu0 0.0
    %3298 = vmatpush1.msra.mxu0 0.0
    %3299 = vmatprep.subr.mxu0 0.0
    %3300 = vmatpush1.msra.mxu0 0.0
    %3301 = vmatprep.subr.mxu0 0.0
    %3302 = vmatpush1.msra.mxu0 0.0
    %3303 = vmatprep.subr.mxu0 0.0
    %3304 = vmatpush1.msra.mxu0 0.0
    %3305 = vmatprep.subr.mxu0 0.0
    %3306 = vmatpush1.msra.mxu0 0.0
    %3307 = vmatprep.subr.mxu0 0.0
    %3308 = vmatpush1.msra.mxu0 0.0
    %3309 = vmatprep.subr.mxu0 0.0
    %3310 = vmatpush1.msra.mxu0 0.0
    %3311 = vmatprep.subr.mxu0 0.0
    %3312 = vmatpush1.msra.mxu0 0.0
    %3313 = vmatprep.subr.mxu0 0.0
    %3314 = vmatpush1.msra.mxu0 0.0
    %3315 = vmatprep.subr.mxu0 0.0
    %3316 = vmatpush1.msra.mxu0 0.0
    %3317 = vmatprep.subr.mxu0 0.0
    %3318 = vmatpush1.msra.mxu0 0.0
    %3319 = vmatprep.subr.mxu0 0.0
    %3320 = vmatpush1.msra.mxu0 0.0
    %3321 = vmatprep.subr.mxu0 0.0
    %3322 = vmatpush1.msra.mxu0 0.0
    %3323 = vmatprep.subr.mxu0 0.0
    %3324 = vmatpush1.msra.mxu0 0.0
    %3325 = vmatprep.subr.mxu0 0.0
    %3326 = vmatpush1.msra.mxu0 0.0
    %3327 = vmatprep.subr.mxu0 0.0
    %3328 = vmatpush1.msra.mxu0 0.0
    %3329 = vmatprep.subr.mxu0 0.0
    %3330 = vmatpush1.msra.mxu0 0.0
    %3331 = vmatprep.subr.mxu0 0.0
    %3332 = vmatpush1.msra.mxu0 0.0
    %3333 = vmatprep.subr.mxu0 0.0
    %3334 = vmatpush1.msra.mxu0 0.0
    %3335 = vmatprep.subr.mxu0 0.0
    %3336 = vmatpush1.msra.mxu0 0.0
    %3337 = vmatprep.subr.mxu0 0.0
    %3338 = vmatpush1.msra.mxu0 0.0
    %3339 = vmatprep.mubr.f32.mxu0 0.0
    %3340 = vmatmul.mubr.f32.gmra.mrb[0].mxu0 %v3270
    %v3341 = vpop.f32.mrb[0].mxu0
    %v3342 = vadd.f32 0.0, %v3341
    %v3343 = vpop.f32.mrb[0].mxu0
    %3344 = vmatprep.mubr.f32.mxu0 0.0
    %3345 = vmatmul.mubr.f32.gmra.mrb[0].mxu0 %v3273
    %v3346 = vpop.f32.mrb[0].mxu0
    %v3347 = vadd.f32 0.0, %v3346
    %v3348 = vpop.f32.mrb[0].mxu0
    %3349 = vdwg.mxu0
    %v3351 = vsel %vm405, %v3099, 0
    %v3354 = vsel %vm405, %v3104, 0
    %3356 = vmatprep.subr.mxu0 0.0
    %3357 = vmatpush1.msra.mxu0 %v2270
    %3358 = vmatprep.subr.mxu0 0.0
    %3359 = vmatpush1.msra.mxu0 0.0
    %3360 = vmatprep.subr.mxu0 0.0
    %3361 = vmatpush1.msra.mxu0 0.0
    %3362 = vmatprep.subr.mxu0 0.0
    %3363 = vmatpush1.msra.mxu0 0.0
    %3364 = vmatprep.subr.mxu0 0.0
    %3365 = vmatpush1.msra.mxu0 0.0
    %3366 = vmatprep.subr.mxu0 0.0
    %3367 = vmatpush1.msra.mxu0 0.0
    %3368 = vmatprep.subr.mxu0 0.0
    %3369 = vmatpush1.msra.mxu0 0.0
    %3370 = vmatprep.subr.mxu0 0.0
    %3371 = vmatpush1.msra.mxu0 0.0
    %3372 = vmatprep.subr.mxu0 0.0
    %3373 = vmatpush1.msra.mxu0 0.0
    %3374 = vmatprep.subr.mxu0 0.0
    %3375 = vmatpush1.msra.mxu0 0.0
    %3376 = vmatprep.subr.mxu0 0.0
    %3377 = vmatpush1.msra.mxu0 0.0
    %3378 = vmatprep.subr.mxu0 0.0
    %3379 = vmatpush1.msra.mxu0 0.0
    %3380 = vmatprep.subr.mxu0 0.0
    %3381 = vmatpush1.msra.mxu0 0.0
    %3382 = vmatprep.subr.mxu0 0.0
    %3383 = vmatpush1.msra.mxu0 0.0
    %3384 = vmatprep.subr.mxu0 0.0
    %3385 = vmatpush1.msra.mxu0 0.0
    %3386 = vmatprep.subr.mxu0 0.0
    %3387 = vmatpush1.msra.mxu0 0.0
    %3388 = vmatprep.subr.mxu0 0.0
    %3389 = vmatpush1.msra.mxu0 0.0
    %3390 = vmatprep.subr.mxu0 0.0
    %3391 = vmatpush1.msra.mxu0 0.0
    %3392 = vmatprep.subr.mxu0 0.0
    %3393 = vmatpush1.msra.mxu0 0.0
    %3394 = vmatprep.subr.mxu0 0.0
    %3395 = vmatpush1.msra.mxu0 0.0
    %3396 = vmatprep.subr.mxu0 0.0
    %3397 = vmatpush1.msra.mxu0 0.0
    %3398 = vmatprep.subr.mxu0 0.0
    %3399 = vmatpush1.msra.mxu0 0.0
    %3400 = vmatprep.subr.mxu0 0.0
    %3401 = vmatpush1.msra.mxu0 0.0
    %3402 = vmatprep.subr.mxu0 0.0
    %3403 = vmatpush1.msra.mxu0 0.0
    %3404 = vmatprep.subr.mxu0 0.0
    %3405 = vmatpush1.msra.mxu0 0.0
    %3406 = vmatprep.subr.mxu0 0.0
    %3407 = vmatpush1.msra.mxu0 0.0
    %3408 = vmatprep.subr.mxu0 0.0
    %3409 = vmatpush1.msra.mxu0 0.0
    %3410 = vmatprep.subr.mxu0 0.0
    %3411 = vmatpush1.msra.mxu0 0.0
    %3412 = vmatprep.subr.mxu0 0.0
    %3413 = vmatpush1.msra.mxu0 0.0
    %3414 = vmatprep.subr.mxu0 0.0
    %3415 = vmatpush1.msra.mxu0 0.0
    %3416 = vmatprep.subr.mxu0 0.0
    %3417 = vmatpush1.msra.mxu0 0.0
    %3418 = vmatprep.subr.mxu0 0.0
    %3419 = vmatpush1.msra.mxu0 0.0
    %3420 = vmatprep.mubr.f32.mxu0 0.0
    %3421 = vmatmul.mubr.f32.gmra.mrb[0].mxu0 %v3351
    %v3422 = vpop.f32.mrb[0].mxu0
    %v3423 = vadd.f32 0.0, %v3422
    %v3424 = vpop.f32.mrb[0].mxu0
    %3425 = vmatprep.mubr.f32.mxu0 0.0
    %3426 = vmatmul.mubr.f32.gmra.mrb[0].mxu0 %v3354
    %v3427 = vpop.f32.mrb[0].mxu0
    %v3428 = vadd.f32 0.0, %v3427
    %v3429 = vpop.f32.mrb[0].mxu0
    %3430 = vdwg.mxu0
    %v3431 = vsel %vm88, %v3180, 0.0
    %v3432 = vsel %vm88, %v3261, 0.0
    %v3433 = vadd.f32 %v3431, %v3432
    %v3434 = vsel %vm88, %v3342, 0.0
    %v3435 = vadd.f32 %v3433, %v3434
    %v3436 = vsel %vm88, %v3423, 0.0
    %v3437 = vadd.f32 %v3435, %v3436
    %v3438 = vsel %vm88, %v3185, 0.0
    %v3439 = vsel %vm88, %v3266, 0.0
    %v3440 = vadd.f32 %v3438, %v3439
    %v3441 = vsel %vm88, %v3347, 0.0
    %v3442 = vadd.f32 %v3440, %v3441
    %v3443 = vsel %vm88, %v3428, 0.0
    %v3444 = vadd.f32 %v3442, %v3443
    %v3445 = vadd.f32 %v3437, %v1598
    %v3446 = vadd.f32 %v3444, %v1599
    %v3447 = vld [vmem:[%s11] sm:$0x1]
    %v3448 = vld [vmem:[%s12] sm:$0x1]
    %v3449 = vsel %vm88, %v3445, 0.0
    %3450 = vadd.xlane.f32.xlu0 %v3449
    %v3451 = vpop.xlane.xlu0 %3450
    %v3452 = vsel %vm88, %v3446, 0.0
    %3453 = vadd.xlane.f32.xlu0 %v3452
    %v3454 = vpop.xlane.xlu0 %3453
    %v3455 = vmul.f32 %v3451, %v1563
    %v3456 = vmul.f32 %v3454, %v1563
    %v3457 = vsub.f32 %v3445, %v3455
    %v3458 = vsub.f32 %v3446, %v3456
    %v3459 = vmul.f32 %v3457, %v3457
    %v3460 = vmul.f32 %v3458, %v3458
    %v3461 = vsel %vm88, %v3459, 0.0
    %3462 = vadd.xlane.f32.xlu0 %v3461
    %v3463 = vpop.xlane.xlu0 %3462
    %v3464 = vsel %vm88, %v3460, 0.0
    %3465 = vadd.xlane.f32.xlu0 %v3464
    %v3466 = vpop.xlane.xlu0 %3465
    %v3467 = vmul.f32 %v3463, %v1563
    %v3468 = vmul.f32 %v3466, %v1563
    %v3469 = vadd.f32 %v3467, 1e-05
    %v3470 = vadd.f32 %v3468, 1e-05
    %v3471 = vrsqrt.pop %v3469
    %v3472 = vrsqrt.pop %v3470
    %v3473 = vmul.f32 %v3457, %v3471
    %v3474 = vmul.f32 %v3458, %v3472
    %v3476 = vlaneseq
    %v3477 = vshrl.u32 %v3476, 7
    %v3478 = vsub.s32 0, %v3477
    %v3479 = vrot.slane %v3447, %v3478
    %v3481 = vmul.f32 %v3473, %v3479
    %v3482 = vmul.f32 %v3474, %v3479
    %v3484 = vlaneseq
    %v3485 = vshrl.u32 %v3484, 7
    %v3486 = vsub.s32 0, %v3485
    %v3487 = vrot.slane %v3448, %v3486
    %v3489 = vadd.f32 %v3481, %v3487
    %v3490 = vadd.f32 %v3482, %v3487
    %v3491 = vld [vmem:[%s13] sm:$0xff]
    %v3492 = vld [vmem:[%s13 + $0x8] sm:$0xff]
    %v3493 = vld [vmem:[%s13 + $0x10] sm:$0xff]
    %v3494 = vld [vmem:[%s13 + $0x18] sm:$0xff]
    %v3495 = vld [vmem:[%s14] sm:$0x1]
    %v3497 = vlaneseq
    %v3498 = vshrl.u32 %v3497, 7
    %v3499 = vsub.s32 0, %v3498
    %v3500 = vrot.slane %v3495, %v3499
    %v3503 = vsel %vm88, %v3489, 0
    %v3506 = vsel %vm88, %v3490, 0
    %3508 = vmatprep.subr.mxu0 0.0
    %3509 = vmatpush1.msra.mxu0 %v3491
    %3510 = vmatprep.subr.mxu0 0.0
    %3511 = vmatpush1.msra.mxu0 %v3492
    %3512 = vmatprep.subr.mxu0 0.0
    %3513 = vmatpush1.msra.mxu0 %v3493
    %3514 = vmatprep.subr.mxu0 0.0
    %3515 = vmatpush1.msra.mxu0 %v3494
    %3516 = vmatprep.subr.mxu0 0.0
    %3517 = vmatpush1.msra.mxu0 0.0
    %3518 = vmatprep.subr.mxu0 0.0
    %3519 = vmatpush1.msra.mxu0 0.0
    %3520 = vmatprep.subr.mxu0 0.0
    %3521 = vmatpush1.msra.mxu0 0.0
    %3522 = vmatprep.subr.mxu0 0.0
    %3523 = vmatpush1.msra.mxu0 0.0
    %3524 = vmatprep.subr.mxu0 0.0
    %3525 = vmatpush1.msra.mxu0 0.0
    %3526 = vmatprep.subr.mxu0 0.0
    %3527 = vmatpush1.msra.mxu0 0.0
    %3528 = vmatprep.subr.mxu0 0.0
    %3529 = vmatpush1.msra.mxu0 0.0
    %3530 = vmatprep.subr.mxu0 0.0
    %3531 = vmatpush1.msra.mxu0 0.0
    %3532 = vmatprep.subr.mxu0 0.0
    %3533 = vmatpush1.msra.mxu0 0.0
    %3534 = vmatprep.subr.mxu0 0.0
    %3535 = vmatpush1.msra.mxu0 0.0
    %3536 = vmatprep.subr.mxu0 0.0
    %3537 = vmatpush1.msra.mxu0 0.0
    %3538 = vmatprep.subr.mxu0 0.0
    %3539 = vmatpush1.msra.mxu0 0.0
    %3540 = vmatprep.subr.mxu0 0.0
    %3541 = vmatpush1.msra.mxu0 0.0
    %3542 = vmatprep.subr.mxu0 0.0
    %3543 = vmatpush1.msra.mxu0 0.0
    %3544 = vmatprep.subr.mxu0 0.0
    %3545 = vmatpush1.msra.mxu0 0.0
    %3546 = vmatprep.subr.mxu0 0.0
    %3547 = vmatpush1.msra.mxu0 0.0
    %3548 = vmatprep.subr.mxu0 0.0
    %3549 = vmatpush1.msra.mxu0 0.0
    %3550 = vmatprep.subr.mxu0 0.0
    %3551 = vmatpush1.msra.mxu0 0.0
    %3552 = vmatprep.subr.mxu0 0.0
    %3553 = vmatpush1.msra.mxu0 0.0
    %3554 = vmatprep.subr.mxu0 0.0
    %3555 = vmatpush1.msra.mxu0 0.0
    %3556 = vmatprep.subr.mxu0 0.0
    %3557 = vmatpush1.msra.mxu0 0.0
    %3558 = vmatprep.subr.mxu0 0.0
    %3559 = vmatpush1.msra.mxu0 0.0
    %3560 = vmatprep.subr.mxu0 0.0
    %3561 = vmatpush1.msra.mxu0 0.0
    %3562 = vmatprep.subr.mxu0 0.0
    %3563 = vmatpush1.msra.mxu0 0.0
    %3564 = vmatprep.subr.mxu0 0.0
    %3565 = vmatpush1.msra.mxu0 0.0
    %3566 = vmatprep.subr.mxu0 0.0
    %3567 = vmatpush1.msra.mxu0 0.0
    %3568 = vmatprep.subr.mxu0 0.0
    %3569 = vmatpush1.msra.mxu0 0.0
    %3570 = vmatprep.subr.mxu0 0.0
    %3571 = vmatpush1.msra.mxu0 0.0
    %3572 = vmatprep.mubr.f32.mxu0 0.0
    %3573 = vmatmul.mubr.f32.gmra.mrb[0].mxu0 %v3503
    %v3574 = vpop.f32.mrb[0].mxu0
    %v3575 = vadd.f32 %v3500, %v3574
    %v3576 = vpop.f32.mrb[0].mxu0
    %3577 = vmatprep.mubr.f32.mxu0 0.0
    %3578 = vmatmul.mubr.f32.gmra.mrb[0].mxu0 %v3506
    %v3579 = vpop.f32.mrb[0].mxu0
    %v3580 = vadd.f32 %v3500, %v3579
    %v3581 = vpop.f32.mrb[0].mxu0
    %3582 = vdwg.mxu0
    %vm3583 = vcmp.ge.f32.partialorder %v3575, 0.0
    %vm3584 = vcmp.ge.f32.partialorder %v3580, 0.0
    %v3585 = vmul.f32 %v3575, 0.01
    %v3586 = vmul.f32 %v3580, 0.01
    %v3587 = vsel %vm3583, %v3575, %v3585
    %v3588 = vsel %vm3584, %v3580, %v3586
    %v3589 = vld [vmem:[%s15] sm:$0xff]
    %v3590 = vld [vmem:[%s15 + $0x8] sm:$0xff]
    %v3591 = vld [vmem:[%s15 + $0x10] sm:$0xff]
    %v3592 = vld [vmem:[%s15 + $0x18] sm:$0xff]
    %v3593 = vld [vmem:[%s15 + $0x20] sm:$0xff]
    %v3594 = vld [vmem:[%s15 + $0x28] sm:$0xff]
    %v3595 = vld [vmem:[%s15 + $0x30] sm:$0xff]
    %v3596 = vld [vmem:[%s15 + $0x38] sm:$0xff]
    %v3597 = vld [vmem:[%s16] sm:$0x1]
    %v3599 = vlaneseq
    %v3600 = vshrl.u32 %v3599, 7
    %v3601 = vsub.s32 0, %v3600
    %v3602 = vrot.slane %v3597, %v3601
    %vm3604 = vcmask 523264
    %v3606 = vsel %vm3604, %v3587, 0
    %v3609 = vsel %vm3604, %v3588, 0
    %3611 = vmatprep.subr.mxu0 0.0
    %3612 = vmatpush1.msra.mxu0 %v3589
    %3613 = vmatprep.subr.mxu0 0.0
    %3614 = vmatpush1.msra.mxu0 %v3590
    %3615 = vmatprep.subr.mxu0 0.0
    %3616 = vmatpush1.msra.mxu0 %v3591
    %3617 = vmatprep.subr.mxu0 0.0
    %3618 = vmatpush1.msra.mxu0 %v3592
    %3619 = vmatprep.subr.mxu0 0.0
    %3620 = vmatpush1.msra.mxu0 %v3593
    %3621 = vmatprep.subr.mxu0 0.0
    %3622 = vmatpush1.msra.mxu0 %v3594
    %3623 = vmatprep.subr.mxu0 0.0
    %3624 = vmatpush1.msra.mxu0 %v3595
    %3625 = vmatprep.subr.mxu0 0.0
    %3626 = vmatpush1.msra.mxu0 %v3596
    %3627 = vmatprep.subr.mxu0 0.0
    %3628 = vmatpush1.msra.mxu0 0.0
    %3629 = vmatprep.subr.mxu0 0.0
    %3630 = vmatpush1.msra.mxu0 0.0
    %3631 = vmatprep.subr.mxu0 0.0
    %3632 = vmatpush1.msra.mxu0 0.0
    %3633 = vmatprep.subr.mxu0 0.0
    %3634 = vmatpush1.msra.mxu0 0.0
    %3635 = vmatprep.subr.mxu0 0.0
    %3636 = vmatpush1.msra.mxu0 0.0
    %3637 = vmatprep.subr.mxu0 0.0
    %3638 = vmatpush1.msra.mxu0 0.0
    %3639 = vmatprep.subr.mxu0 0.0
    %3640 = vmatpush1.msra.mxu0 0.0
    %3641 = vmatprep.subr.mxu0 0.0
    %3642 = vmatpush1.msra.mxu0 0.0
    %3643 = vmatprep.subr.mxu0 0.0
    %3644 = vmatpush1.msra.mxu0 0.0
    %3645 = vmatprep.subr.mxu0 0.0
    %3646 = vmatpush1.msra.mxu0 0.0
    %3647 = vmatprep.subr.mxu0 0.0
    %3648 = vmatpush1.msra.mxu0 0.0
    %3649 = vmatprep.subr.mxu0 0.0
    %3650 = vmatpush1.msra.mxu0 0.0
    %3651 = vmatprep.subr.mxu0 0.0
    %3652 = vmatpush1.msra.mxu0 0.0
    %3653 = vmatprep.subr.mxu0 0.0
    %3654 = vmatpush1.msra.mxu0 0.0
    %3655 = vmatprep.subr.mxu0 0.0
    %3656 = vmatpush1.msra.mxu0 0.0
    %3657 = vmatprep.subr.mxu0 0.0
    %3658 = vmatpush1.msra.mxu0 0.0
    %3659 = vmatprep.subr.mxu0 0.0
    %3660 = vmatpush1.msra.mxu0 0.0
    %3661 = vmatprep.subr.mxu0 0.0
    %3662 = vmatpush1.msra.mxu0 0.0
    %3663 = vmatprep.subr.mxu0 0.0
    %3664 = vmatpush1.msra.mxu0 0.0
    %3665 = vmatprep.subr.mxu0 0.0
    %3666 = vmatpush1.msra.mxu0 0.0
    %3667 = vmatprep.subr.mxu0 0.0
    %3668 = vmatpush1.msra.mxu0 0.0
    %3669 = vmatprep.subr.mxu0 0.0
    %3670 = vmatpush1.msra.mxu0 0.0
    %3671 = vmatprep.subr.mxu0 0.0
    %3672 = vmatpush1.msra.mxu0 0.0
    %3673 = vmatprep.subr.mxu0 0.0
    %3674 = vmatpush1.msra.mxu0 0.0
    %3675 = vmatprep.mubr.f32.mxu0 0.0
    %3676 = vmatmul.mubr.f32.gmra.mrb[0].mxu0 %v3606
    %v3677 = vpop.f32.mrb[0].mxu0
    %v3678 = vadd.f32 %v3602, %v3677
    %v3679 = vpop.f32.mrb[0].mxu0
    %3680 = vmatprep.mubr.f32.mxu0 0.0
    %3681 = vmatmul.mubr.f32.gmra.mrb[0].mxu0 %v3609
    %v3682 = vpop.f32.mrb[0].mxu0
    %v3683 = vadd.f32 %v3602, %v3682
    %v3684 = vpop.f32.mrb[0].mxu0
    %3685 = vdwg.mxu0
    %v3686 = vadd.f32 %v3678, %v3489
    %v3687 = vadd.f32 %v3683, %v3490
    %v3688 = vld [vmem:[%s17] sm:$0x1]
    %v3689 = vld [vmem:[%s18] sm:$0x1]
    %v3690 = vsel %vm88, %v3686, 0.0
    %3691 = vadd.xlane.f32.xlu0 %v3690
    %v3692 = vpop.xlane.xlu0 %3691
    %v3693 = vsel %vm88, %v3687, 0.0
    %3694 = vadd.xlane.f32.xlu0 %v3693
    %v3695 = vpop.xlane.xlu0 %3694
    %v3696 = vmul.f32 %v3692, %v1563
    %v3697 = vmul.f32 %v3695, %v1563
    %v3698 = vsub.f32 %v3686, %v3696
    %v3699 = vsub.f32 %v3687, %v3697
    %v3700 = vmul.f32 %v3698, %v3698
    %v3701 = vmul.f32 %v3699, %v3699
    %v3702 = vsel %vm88, %v3700, 0.0
    %3703 = vadd.xlane.f32.xlu0 %v3702
    %v3704 = vpop.xlane.xlu0 %3703
    %v3705 = vsel %vm88, %v3701, 0.0
    %3706 = vadd.xlane.f32.xlu0 %v3705
    %v3707 = vpop.xlane.xlu0 %3706
    %v3708 = vmul.f32 %v3704, %v1563
    %v3709 = vmul.f32 %v3707, %v1563
    %v3710 = vadd.f32 %v3708, 1e-05
    %v3711 = vadd.f32 %v3709, 1e-05
    %v3712 = vrsqrt.pop %v3710
    %v3713 = vrsqrt.pop %v3711
    %v3714 = vmul.f32 %v3698, %v3712
    %v3715 = vmul.f32 %v3699, %v3713
    %v3717 = vlaneseq
    %v3718 = vshrl.u32 %v3717, 7
    %v3719 = vsub.s32 0, %v3718
    %v3720 = vrot.slane %v3688, %v3719
    %v3722 = vmul.f32 %v3714, %v3720
    %v3723 = vmul.f32 %v3715, %v3720
    %v3725 = vlaneseq
    %v3726 = vshrl.u32 %v3725, 7
    %v3727 = vsub.s32 0, %v3726
    %v3728 = vrot.slane %v3689, %v3727
    %v3730 = vadd.f32 %v3722, %v3728
    %v3731 = vadd.f32 %v3723, %v3728
    %3732 = vst.msk [vmem:[#allocation2] sm:$0xff] %vm88, %v3730
    %3733 = vst.msk [vmem:[#allocation2 + $0x8] sm:$0xff] %vm88, %v3731
    // Predicated region
    $region78: #{tpu_custom_call.1} parent=1 // pred_check
      _
    $region79: #{tpu_custom_call.1} parent=1 // pred_check_branch
      %3735 = sbr.rel (0) target = $region81
    $region80: #{tpu_custom_call.1} parent=1 // pred_region
      %s3737 = ssub.s32 256, 256
      %3738 = vsyncadd [#allocation3], %s3737
      %s3739 = sshll.u32 [#allocation2], 4
      %s3740 = int_to_ptr.vmem [resolvable:$true] %s3739
      %3745 = dma.vmem_to_hbm [thread:$0]  %s3740, 256, %s19, [#allocation3], 128, 128, 8
    $region81: #{tpu_custom_call.1} parent=1 // pred_fallthru
      _
    // Predicated region
    $region82: #{tpu_custom_call.1} parent=1 // pred_check
      _
    $region83: #{tpu_custom_call.1} parent=1 // pred_check_branch
      %3747 = sbr.rel (0) target = $region85
    $region84: #{tpu_custom_call.1} parent=1 // pred_region
      %3748 = dma.done [#allocation3], 256
    $region85: #{tpu_custom_call.1} parent=1 // pred_fallthru
      _
    %3749 = vsyncpa [#allocation3], 1

</llo_original>
